<compile_context>
chip_gen: v5e
topology: v5e:2x2
jax: 0.10.0
libtpu: 0.0.40
codegen_flags: <defaults>
</compile_context>

<pallas_src>
import functools
import math

import jax
import jax.numpy as jnp
from jax.experimental import pallas as pl
from jax.experimental.pallas import tpu as pltpu

_LANE = 128
_BF16 = jnp.bfloat16
_F32 = jnp.float32


# --------------------------------- kernels ---------------------------------

def _masked_dual_proj_kernel(feat_ref, mask_ref, w1_ref, ws_ref, z1_ref, zs_ref):
    """x = feat * mask (bf16; exact, mask is {0,1});  z1 = x@W1;  zs = x@Ws."""
    x = feat_ref[...] * mask_ref[...]
    z1_ref[...] = jnp.dot(x, w1_ref[...],
                          preferred_element_type=jnp.float32).astype(z1_ref.dtype)
    zs_ref[...] = jnp.dot(x, ws_ref[...],
                          preferred_element_type=jnp.float32).astype(zs_ref.dtype)


def _agg_proj_kernel(a_ref, z_ref, b_ref, wh_ref, o_ref, acc_ref, *,
                     tile_k, resident):
    """zh = relu(A_hat @ z + b) @ Wh, accumulated over the k (column) axis.

    The hidden activation h never round-trips through HBM: the h @ Wh
    projection is fused into the finalize step of the aggregation."""
    k = pl.program_id(1)

    @pl.when(k == 0)
    def _init():
        acc_ref[...] = jnp.zeros_like(acc_ref)

    if resident:  # z is fully VMEM-resident; slice the k-chunk in-kernel.
        off = pl.multiple_of(k * tile_k, tile_k)
        zb = z_ref[pl.ds(off, tile_k), :]
    else:         # streamed (tile_k, d) block per grid step.
        zb = z_ref[...]
    acc_ref[...] += jnp.dot(a_ref[...], zb, preferred_element_type=jnp.float32)

    @pl.when(k == pl.num_programs(1) - 1)
    def _finalize():
        h = jnp.maximum(acc_ref[...] + b_ref[...], 0.0).astype(jnp.bfloat16)
        o_ref[...] = jnp.dot(h, wh_ref[...],
                             preferred_element_type=jnp.float32).astype(o_ref.dtype)


def _skip_agg_kernel(ag_ref, zh_ref, af_ref, zs_ref, b_ref, o_ref, acc_ref, *,
                     tile_k, resident):
    """out = sigmoid(Ag_hat @ zh + Af_hat @ zs + b), accumulated over k."""
    k = pl.program_id(1)

    @pl.when(k == 0)
    def _init():
        acc_ref[...] = jnp.zeros_like(acc_ref)

    if resident:
        off = pl.multiple_of(k * tile_k, tile_k)
        zh = zh_ref[pl.ds(off, tile_k), :]
        zs = zs_ref[pl.ds(off, tile_k), :]
    else:
        zh = zh_ref[...]
        zs = zs_ref[...]
    # Single accumulator read-modify-write for both partial products (v5e has
    # only one vector-store slot per bundle; this halves acc VMEM traffic).
    acc_ref[...] += (jnp.dot(ag_ref[...], zh, preferred_element_type=jnp.float32)
                     + jnp.dot(af_ref[...], zs, preferred_element_type=jnp.float32))

    @pl.when(k == pl.num_programs(1) - 1)
    def _finalize():
        o_ref[...] = jax.nn.sigmoid(acc_ref[...] + b_ref[...]).astype(o_ref.dtype)


# ------------------------------ helpers ------------------------------------

def _round_up(x, m):
    return ((x + m - 1) // m) * m


def _pad2(x, rows, cols):
    r, c = x.shape
    return jnp.pad(x, ((0, rows - r), (0, cols - c)))


def _buf_bytes(shape, dtype, nbuf=2):
    """Bytes for `nbuf` pipeline buffers of a block (default double-buffered)."""
    return nbuf * math.prod(shape) * jnp.dtype(dtype).itemsize


def _vmem_budget():
    """3/4 of the physical per-core VMEM (v5e/v6e: 128 MiB, v7x: 64 MiB)."""
    try:
        cap = int(pltpu.get_tpu_info().vmem_capacity_bytes)
    except Exception:
        cap = 64 << 20          # conservative fallback: v7x per-TC capacity
    return max((cap * 3) // 4, 16 << 20)


def _vmem_limit(bytes_needed, budget):
    return int(min(max(bytes_needed + (2 << 20), 16 << 20), budget))


def _pick_tiles(n):
    """(n_p, tile_m, tile_k) for the adjacency aggregations.

    Rows padded to a multiple of 256 so the "parallel" row axis has >= 2
    blocks (v7x: 2 TCs); tile_m >= 128 (256 when possible) keeps the MXU
    passes full on v6e/v7x; tile_k (lane dim of the streamed A_hat block) is
    the largest of 2048/1024/512/256 dividing n_p for near-roofline HBM
    streaming."""
    n_p = _round_up(max(n, 1), 256)
    tile_m = 256 if n_p >= 512 else 128
    tile_k = 256
    for tk in (2048, 1024, 512, 256):
        if n_p % tk == 0:
            tile_k = tk
            break
    return n_p, tile_m, tile_k


# --------------------------- pallas_call builders ---------------------------

def _dual_projection(feat, mask, w1, ws, tile_m, budget):
    """(z1, zs) = ((feat*mask) @ W1, (feat*mask) @ Ws); one row-tiled call."""
    n_p, fin_c = feat.shape
    h_p = w1.shape[1]
    fin_p = ws.shape[1]
    grid = (n_p // tile_m,)

    vmem = _vmem_limit(
        2 * _buf_bytes((tile_m, fin_c), _BF16)          # feat + mask
        + _buf_bytes((fin_c, h_p), _BF16)               # W1 (constant block)
        + _buf_bytes((fin_c, fin_p), _BF16)             # Ws (constant block)
        + _buf_bytes((tile_m, h_p), _BF16)              # z1 out
        + _buf_bytes((tile_m, fin_p), _BF16),           # zs out
        budget)

    return pl.pallas_call(
        _masked_dual_proj_kernel,
        out_shape=(jax.ShapeDtypeStruct((n_p, h_p), _BF16),
                   jax.ShapeDtypeStruct((n_p, fin_p), _BF16)),
        grid=grid,
        in_specs=[pl.BlockSpec((tile_m, fin_c), lambda i: (i, 0)),
                  pl.BlockSpec((tile_m, fin_c), lambda i: (i, 0)),
                  pl.BlockSpec((fin_c, h_p), lambda i: (0, 0)),
                  pl.BlockSpec((fin_c, fin_p), lambda i: (0, 0))],
        out_specs=(pl.BlockSpec((tile_m, h_p), lambda i: (i, 0)),
                   pl.BlockSpec((tile_m, fin_p), lambda i: (i, 0))),
        compiler_params=pltpu.CompilerParams(
            dimension_semantics=("parallel",),
            vmem_limit_bytes=vmem),
    )(feat, mask, w1, ws)


def _gcn_agg_project(a_hat, z, b, wh, tile_m, tile_k, budget):
    """zh = relu(A_hat @ z + b) @ Wh, tiled (row block, k block)."""
    n_p = a_hat.shape[0]
    d_in = z.shape[1]
    d_out = wh.shape[1]
    grid = (n_p // tile_m, n_p // tile_k)

    base = (_buf_bytes((tile_m, tile_k), a_hat.dtype)       # A_hat (streamed)
            + _buf_bytes((1, d_in), b.dtype)                # bias
            + _buf_bytes(wh.shape, wh.dtype)                # Wh (constant)
            + _buf_bytes((tile_m, d_out), _BF16)            # zh out
            + _buf_bytes((tile_m, d_in), _F32, nbuf=1))     # acc scratch
    z_res = _buf_bytes((n_p, d_in), z.dtype)                # resident z (2 bufs)
    resident = base + z_res + (2 << 20) <= budget

    if resident:
        # Constant index map -> z is DMA'd into VMEM once and reused for every
        # (row, k) grid step instead of being re-streamed per row block.
        z_spec = pl.BlockSpec((n_p, d_in), lambda i, k: (0, 0))
        vmem = _vmem_limit(base + z_res, budget)
    else:
        z_spec = pl.BlockSpec((tile_k, d_in), lambda i, k: (k, 0))
        vmem = _vmem_limit(base + _buf_bytes((tile_k, d_in), z.dtype), budget)

    kernel = functools.partial(_agg_proj_kernel, tile_k=tile_k, resident=resident)
    return pl.pallas_call(
        kernel,
        out_shape=jax.ShapeDtypeStruct((n_p, d_out), _BF16),
        grid=grid,
        in_specs=[pl.BlockSpec((tile_m, tile_k), lambda i, k: (i, k)),
                  z_spec,
                  pl.BlockSpec((1, d_in), lambda i, k: (0, 0)),
                  pl.BlockSpec(wh.shape, lambda i, k: (0, 0))],
        out_specs=pl.BlockSpec((tile_m, d_out), lambda i, k: (i, 0)),
        scratch_shapes=[pltpu.VMEM((tile_m, d_in), _F32)],
        compiler_params=pltpu.CompilerParams(
            dimension_semantics=("parallel", "arbitrary"),
            vmem_limit_bytes=vmem),
    )(a_hat, z, b, wh)


def _gcn_skip_aggregate(ag_hat, zh, af_hat, zs, b, tile_m, tile_k, budget):
    """out = sigmoid(Ag_hat @ zh + Af_hat @ zs + b), tiled (row, k)."""
    n_p = ag_hat.shape[0]
    d = zh.shape[1]
    grid = (n_p // tile_m, n_p // tile_k)

    base = (2 * _buf_bytes((tile_m, tile_k), ag_hat.dtype)   # Ag_hat + Af_hat
            + _buf_bytes((1, d), b.dtype)                    # bias
            + _buf_bytes((tile_m, d), _F32)                  # out (f32)
            + _buf_bytes((tile_m, d), _F32, nbuf=1))         # acc scratch
    z_res = 2 * _buf_bytes((n_p, d), zh.dtype)               # resident zh + zs
    resident = base + z_res + (2 << 20) <= budget

    if resident:
        zh_spec = pl.BlockSpec((n_p, d), lambda i, k: (0, 0))
        zs_spec = pl.BlockSpec((n_p, d), lambda i, k: (0, 0))
        vmem = _vmem_limit(base + z_res, budget)
    else:
        zh_spec = pl.BlockSpec((tile_k, d), lambda i, k: (k, 0))
        zs_spec = pl.BlockSpec((tile_k, d), lambda i, k: (k, 0))
        vmem = _vmem_limit(base + 2 * _buf_bytes((tile_k, d), zh.dtype), budget)

    kernel = functools.partial(_skip_agg_kernel, tile_k=tile_k, resident=resident)
    return pl.pallas_call(
        kernel,
        out_shape=jax.ShapeDtypeStruct((n_p, d), _F32),
        grid=grid,
        in_specs=[pl.BlockSpec((tile_m, tile_k), lambda i, k: (i, k)),
                  zh_spec,
                  pl.BlockSpec((tile_m, tile_k), lambda i, k: (i, k)),
                  zs_spec,
                  pl.BlockSpec((1, d), lambda i, k: (0, 0))],
        out_specs=pl.BlockSpec((tile_m, d), lambda i, k: (i, 0)),
        scratch_shapes=[pltpu.VMEM((tile_m, d), _F32)],
        compiler_params=pltpu.CompilerParams(
            dimension_semantics=("parallel", "arbitrary"),
            vmem_limit_bytes=vmem),
    )(ag_hat, zh, af_hat, zs, b)


# ------------------------------- forward ------------------------------------

def make_ginn_forward(mask, ag, ng, af, nf, w1, b1, wh, bh, ws, bs):
    """Build the jitted forward.  All graph / parameter preprocessing (norm
    folding, padding, bf16 casts) happens HERE, exactly once; the returned
    function only consumes `features`."""
    n, fin = mask.shape
    h_feats = w1.shape[1]

    fin_c = _round_up(fin, 16)           # contraction width (no 128 padding)
    fin_p = _round_up(fin, _LANE)        # lane-dense output width
    h_p = _round_up(h_feats, _LANE)      # lane-dense hidden width
    n_p, tile_m, tile_k = _pick_tiles(n)
    budget = _vmem_budget()

    # ---- static, per-model preprocessing (hoisted out of the jitted fwd) ----
    ng_f = jnp.asarray(ng, _F32)
    nf_f = jnp.asarray(nf, _F32)
    ag_hat = _pad2(ng_f * jnp.asarray(ag, _F32) * ng_f.T, n_p, n_p).astype(_BF16)
    af_hat = _pad2(nf_f * jnp.asarray(af, _F32) * nf_f.T, n_p, n_p).astype(_BF16)

    mask_p = _pad2(jnp.asarray(mask, _F32), n_p, fin_c).astype(_BF16)
    w1_p = _pad2(jnp.asarray(w1, _F32), fin_c, h_p).astype(_BF16)
    ws_p = _pad2(jnp.asarray(ws, _F32), fin_c, fin_p).astype(_BF16)
    wh_p = _pad2(jnp.asarray(wh, _F32), h_p, fin_p).astype(_BF16)
    b1_p = _pad2(jnp.asarray(b1, _F32).reshape(1, -1), 1, h_p)
    b2_p = _pad2(jnp.asarray(bh + bs, _F32).reshape(1, -1), 1, fin_p)

    def forward(features):
        feat_p = _pad2(jnp.asarray(features, _F32).astype(_BF16), n_p, fin_c)

        # x = features * mask;  z1 = x @ W1;  zs = x @ Ws   (one fused call)
        z1, zs = _dual_projection(feat_p, mask_p, w1_p, ws_p, tile_m, budget)

        # zh = relu(Ag_hat @ z1 + b1) @ Wh   (h never touches HBM)
        zh = _gcn_agg_project(ag_hat, z1, b1_p, wh_p, tile_m, tile_k, budget)

        # out = sigmoid(Ag_hat @ zh + Af_hat @ zs + bh + bs)
        out = _gcn_skip_aggregate(ag_hat, zh, af_hat, zs, b2_p,
                                  tile_m, tile_k, budget)
        return out[:n, :fin]

    return jax.jit(forward)


# ------------- deterministic parameter / graph construction -----------------

def _uniform(key, shape, stdv):
    return jax.random.uniform(key, shape, dtype=_F32, minval=-stdv, maxval=stdv)


def make_params(key, in_feats, h_feats):
    k = jax.random.split(key, 6)
    stdv1 = 1.0 / math.sqrt(h_feats)                 # GCL
    w1 = _uniform(k[0], (in_feats, h_feats), stdv1)
    b1 = _uniform(k[1], (1, h_feats), stdv1)
    stdv2 = 1.0 / math.sqrt(in_feats)                # GCL_skip
    wh = _uniform(k[2], (h_feats, in_feats), stdv2)
    bh = _uniform(k[3], (1, in_feats), stdv2)
    ws = _uniform(k[4], (in_feats, in_feats), stdv2)
    bs = _uniform(k[5], (1, in_feats), stdv2)
    return w1, b1, wh, bh, ws, bs


def make_graph(key, n):
    """Random symmetric adjacency with self-loops + per-node norm vector."""
    a = (jax.random.uniform(key, (n, n)) < 0.3).astype(_F32)
    a = jnp.maximum(a, a.T)
    a = jnp.maximum(a, jnp.eye(n, dtype=_F32))              # self loops
    deg = jnp.sum(a, axis=1, keepdims=True)
    norm = 1.0 / jnp.sqrt(jnp.maximum(deg, 1.0))             # g.ndata['norm']
    return a, norm


# -------------------- pure-JAX reference (for sanity) -----------------------

def reference(features, mask, ag, ng, af, nf, w1, b1, wh, bh, ws, bs):
    x = features * mask
    h = (ag @ ((x @ w1) * ng)) * ng + b1
    h = jnp.maximum(h, 0.0)
    hh = (ag @ ((h @ wh) * ng)) * ng + bh
    ss = (af @ ((x @ ws) * nf)) * nf + bs
    return jax.nn.sigmoid(hh + ss)


if __name__ == "__main__":
    # N=300 -> padded to 512, tile_m=256, tile_k=512: two "parallel" row
    # blocks (v7x 2-TC) and a k-accumulation axis, while staying small.
    N, IN_FEATS, H_FEATS = 300, 8, 32

    root = jax.random.PRNGKey(0)
    kf, km, kg, kf2, kp = jax.random.split(root, 5)

    features = jax.random.normal(kf, (N, IN_FEATS), dtype=jnp.float32)
    mask = (jax.random.uniform(km, (N, IN_FEATS)) < 0.7).astype(jnp.float32)

    ag, ng = make_graph(kg, N)      # graph g
    af, nf = make_graph(kf2, N)     # graph f
    w1, b1, wh, bh, ws, bs = make_params(kp, IN_FEATS, H_FEATS)

    fwd = make_ginn_forward(mask, ag, ng, af, nf, w1, b1, wh, bh, ws, bs)
    out = jax.block_until_ready(fwd(features))

    ref = reference(features, mask, ag, ng, af, nf, w1, b1, wh, bh, ws, bs)
    assert out.shape == (N, IN_FEATS)
    # bf16 features / weights / adjacencies / activations (f32 MXU
    # accumulation) => ~1e-3-level error vs the pure-f32 reference; the
    # sigmoid output is compared with a correspondingly loosened tolerance.
    err = float(jnp.max(jnp.abs(out - ref)))
    assert err < 1e-2, f"mismatch vs reference, max abs diff = {err}"

    print("KERNEL_OK")
</pallas_src>

<mosaic_0001>
module attributes {stable_mosaic.version = 11 : i64} {
  func.func @_masked_dual_proj_kernel(%arg0: i32, %arg1: memref<256x16xbf16, #tpu.memory_space<vmem>>, %arg2: memref<256x16xbf16, #tpu.memory_space<vmem>>, %arg3: memref<16x128xbf16, #tpu.memory_space<vmem>>, %arg4: memref<16x128xbf16, #tpu.memory_space<vmem>>, %arg5: memref<256x128xbf16, #tpu.memory_space<vmem>>, %arg6: memref<256x128xbf16, #tpu.memory_space<vmem>>) attributes {dimension_semantics = [#tpu.dimension_semantics<parallel>], iteration_bounds = array<i64: 2>, scalar_prefetch = 0 : i64, scratch_operands = 0 : i64, tpu.core_type = #tpu.core_type<tc>, window_params = [{transform_indices = @transform_0, window_bounds = array<i64: 256, 16>}, {transform_indices = @transform_1, window_bounds = array<i64: 256, 16>}, {pipeline_mode = #tpu.pipeline_mode<synchronous>, transform_indices = @transform_2, window_bounds = array<i64: 16, 128>}, {pipeline_mode = #tpu.pipeline_mode<synchronous>, transform_indices = @transform_3, window_bounds = array<i64: 16, 128>}, {transform_indices = @transform_4, window_bounds = array<i64: 256, 128>}, {transform_indices = @transform_5, window_bounds = array<i64: 256, 128>}]} {
    %c0 = arith.constant 0 : index
    %c0_0 = arith.constant 0 : index
    %0 = vector.load %arg1[%c0, %c0_0] : memref<256x16xbf16, #tpu.memory_space<vmem>>, vector<256x16xbf16>
    %c0_1 = arith.constant 0 : index
    %c0_2 = arith.constant 0 : index
    %1 = vector.load %arg2[%c0_1, %c0_2] : memref<256x16xbf16, #tpu.memory_space<vmem>>, vector<256x16xbf16>
    %2 = arith.mulf %0, %1 : vector<256x16xbf16>
    %c0_3 = arith.constant 0 : index
    %c0_4 = arith.constant 0 : index
    %3 = vector.load %arg3[%c0_3, %c0_4] : memref<16x128xbf16, #tpu.memory_space<vmem>>, vector<16x128xbf16>
    %cst = arith.constant dense<0.000000e+00> : vector<256x128xf32>
    %4 = tpu.matmul %2, %3, %cst {dimension_numbers = #tpu.dot_dimension_numbers<[1], [0], [0], [1], [0, 0, 1, 1], [], []>} : vector<256x16xbf16>, vector<16x128xbf16>, vector<256x128xf32> -> vector<256x128xf32>
    %5 = arith.truncf %4 : vector<256x128xf32> to vector<256x128xbf16>
    %c0_5 = arith.constant 0 : index
    %c0_6 = arith.constant 0 : index
    %6 = vector.load %arg5[%c0_5, %c0_6] : memref<256x128xbf16, #tpu.memory_space<vmem>>, vector<256x128xbf16>
    tpu.vector_store %arg5[%c0_5, %c0_6], %5 {strides = array<i32>} : memref<256x128xbf16, #tpu.memory_space<vmem>>, vector<256x128xbf16>,
    %c0_7 = arith.constant 0 : index
    %c0_8 = arith.constant 0 : index
    %7 = vector.load %arg4[%c0_7, %c0_8] : memref<16x128xbf16, #tpu.memory_space<vmem>>, vector<16x128xbf16>
    %cst_9 = arith.constant dense<0.000000e+00> : vector<256x128xf32>
    %8 = tpu.matmul %2, %7, %cst_9 {dimension_numbers = #tpu.dot_dimension_numbers<[1], [0], [0], [1], [0, 0, 1, 1], [], []>} : vector<256x16xbf16>, vector<16x128xbf16>, vector<256x128xf32> -> vector<256x128xf32>
    %9 = arith.truncf %8 : vector<256x128xf32> to vector<256x128xbf16>
    %c0_10 = arith.constant 0 : index
    %c0_11 = arith.constant 0 : index
    %10 = vector.load %arg6[%c0_10, %c0_11] : memref<256x128xbf16, #tpu.memory_space<vmem>>, vector<256x128xbf16>
    tpu.vector_store %arg6[%c0_10, %c0_11], %9 {strides = array<i32>} : memref<256x128xbf16, #tpu.memory_space<vmem>>, vector<256x128xbf16>,
    return
  }
  func.func @transform_0(%arg0: i32) -> (i32, i32) {
    %c0_i32 = arith.constant 0 : i32
    %c0_i32_0 = arith.constant 0 : i32
    return %arg0, %c0_i32 : i32, i32
  }
  func.func @transform_1(%arg0: i32) -> (i32, i32) {
    %c0_i32 = arith.constant 0 : i32
    %c0_i32_0 = arith.constant 0 : i32
    return %arg0, %c0_i32 : i32, i32
  }
  func.func @transform_2(%arg0: i32) -> (i32, i32) {
    %c0_i32 = arith.constant 0 : i32
    %c0_i32_0 = arith.constant 0 : i32
    %c0_i32_1 = arith.constant 0 : i32
    return %c0_i32, %c0_i32_0 : i32, i32
  }
  func.func @transform_3(%arg0: i32) -> (i32, i32) {
    %c0_i32 = arith.constant 0 : i32
    %c0_i32_0 = arith.constant 0 : i32
    %c0_i32_1 = arith.constant 0 : i32
    return %c0_i32, %c0_i32_0 : i32, i32
  }
  func.func @transform_4(%arg0: i32) -> (i32, i32) {
    %c0_i32 = arith.constant 0 : i32
    %c0_i32_0 = arith.constant 0 : i32
    return %arg0, %c0_i32 : i32, i32
  }
  func.func @transform_5(%arg0: i32) -> (i32, i32) {
    %c0_i32 = arith.constant 0 : i32
    %c0_i32_0 = arith.constant 0 : i32
    return %arg0, %c0_i32 : i32, i32
  }
}

module attributes {stable_mosaic.version = 11 : i64} {
  func.func @_skip_agg_kernel(%arg0: i32, %arg1: i32, %arg2: memref<256x512xbf16, #tpu.memory_space<vmem>>, %arg3: memref<512x128xbf16, #tpu.memory_space<vmem>>, %arg4: memref<256x512xbf16, #tpu.memory_space<vmem>>, %arg5: memref<512x128xbf16, #tpu.memory_space<vmem>>, %arg6: memref<1x128xf32, #tpu.memory_space<vmem>>, %arg7: memref<256x128xf32, #tpu.memory_space<vmem>>, %arg8: memref<256x128xf32, #tpu.memory_space<vmem>>) attributes {dimension_semantics = [#tpu.dimension_semantics<parallel>, #tpu.dimension_semantics<arbitrary>], iteration_bounds = array<i64: 2, 1>, scalar_prefetch = 0 : i64, scratch_operands = 1 : i64, tpu.core_type = #tpu.core_type<tc>, window_params = [{transform_indices = @transform_0, window_bounds = array<i64: 256, 512>}, {pipeline_mode = #tpu.pipeline_mode<synchronous>, transform_indices = @transform_1, window_bounds = array<i64: 512, 128>}, {transform_indices = @transform_2, window_bounds = array<i64: 256, 512>}, {pipeline_mode = #tpu.pipeline_mode<synchronous>, transform_indices = @transform_3, window_bounds = array<i64: 512, 128>}, {pipeline_mode = #tpu.pipeline_mode<synchronous>, transform_indices = @transform_4, window_bounds = array<i64: 1, 128>}, {transform_indices = @transform_5, window_bounds = array<i64: 256, 128>}]} {
    %c0_i32 = arith.constant 0 : i32
    %0 = arith.cmpi eq, %arg1, %c0_i32 : i32
    %1 = arith.extui %0 : i1 to i32
    %c0_i32_0 = arith.constant 0 : i32
    %2 = arith.cmpi ne, %1, %c0_i32_0 : i32
    scf.if %2 {
      %cst_13 = arith.constant 0.000000e+00 : f32
      %20 = vector.broadcast %cst_13 : f32 to vector<256x128xf32>
      %c0_14 = arith.constant 0 : index
      %c0_15 = arith.constant 0 : index
      %21 = vector.load %arg8[%c0_14, %c0_15] : memref<256x128xf32, #tpu.memory_space<vmem>>, vector<256x128xf32>
      tpu.vector_store %arg8[%c0_14, %c0_15], %20 {strides = array<i32>} : memref<256x128xf32, #tpu.memory_space<vmem>>, vector<256x128xf32>,
    } else {
    }
    %c512_i32 = arith.constant 512 : i32
    %3 = arith.muli %arg1, %c512_i32 : i32
    %4 = tpu.assume_multiple %3, 512 : i32
    %5 = arith.index_cast %4 : i32 to index
    %c0 = arith.constant 0 : index
    %6 = vector.load %arg3[%5, %c0] : memref<512x128xbf16, #tpu.memory_space<vmem>>, vector<512x128xbf16>
    %7 = arith.index_cast %4 : i32 to index
    %c0_1 = arith.constant 0 : index
    %8 = vector.load %arg5[%7, %c0_1] : memref<512x128xbf16, #tpu.memory_space<vmem>>, vector<512x128xbf16>
    %c0_2 = arith.constant 0 : index
    %c0_3 = arith.constant 0 : index
    %9 = vector.load %arg8[%c0_2, %c0_3] : memref<256x128xf32, #tpu.memory_space<vmem>>, vector<256x128xf32>
    %c0_4 = arith.constant 0 : index
    %c0_5 = arith.constant 0 : index
    %10 = vector.load %arg2[%c0_4, %c0_5] : memref<256x512xbf16, #tpu.memory_space<vmem>>, vector<256x512xbf16>
    %cst = arith.constant dense<0.000000e+00> : vector<256x128xf32>
    %11 = tpu.matmul %10, %6, %cst {dimension_numbers = #tpu.dot_dimension_numbers<[1], [0], [0], [1], [0, 0, 1, 1], [], []>} : vector<256x512xbf16>, vector<512x128xbf16>, vector<256x128xf32> -> vector<256x128xf32>
    %c0_6 = arith.constant 0 : index
    %c0_7 = arith.constant 0 : index
    %12 = vector.load %arg4[%c0_6, %c0_7] : memref<256x512xbf16, #tpu.memory_space<vmem>>, vector<256x512xbf16>
    %cst_8 = arith.constant dense<0.000000e+00> : vector<256x128xf32>
    %13 = tpu.matmul %12, %8, %cst_8 {dimension_numbers = #tpu.dot_dimension_numbers<[1], [0], [0], [1], [0, 0, 1, 1], [], []>} : vector<256x512xbf16>, vector<512x128xbf16>, vector<256x128xf32> -> vector<256x128xf32>
    %14 = arith.addf %11, %13 : vector<256x128xf32>
    %15 = arith.addf %9, %14 : vector<256x128xf32>
    %c0_9 = arith.constant 0 : index
    %c0_10 = arith.constant 0 : index
    %16 = vector.load %arg8[%c0_9, %c0_10] : memref<256x128xf32, #tpu.memory_space<vmem>>, vector<256x128xf32>
    tpu.vector_store %arg8[%c0_9, %c0_10], %15 {strides = array<i32>} : memref<256x128xf32, #tpu.memory_space<vmem>>, vector<256x128xf32>,
    %c0_i32_11 = arith.constant 0 : i32
    %17 = arith.cmpi eq, %arg1, %c0_i32_11 : i32
    %18 = arith.extui %17 : i1 to i32
    %c0_i32_12 = arith.constant 0 : i32
    %19 = arith.cmpi ne, %18, %c0_i32_12 : i32
    scf.if %19 {
      %c0_13 = arith.constant 0 : index
      %c0_14 = arith.constant 0 : index
      %20 = vector.load %arg8[%c0_13, %c0_14] : memref<256x128xf32, #tpu.memory_space<vmem>>, vector<256x128xf32>
      %c0_15 = arith.constant 0 : index
      %c0_16 = arith.constant 0 : index
      %21 = vector.load %arg6[%c0_15, %c0_16] : memref<1x128xf32, #tpu.memory_space<vmem>>, vector<1x128xf32>
      %22 = vector.broadcast %21 : vector<1x128xf32> to vector<256x128xf32>
      %23 = arith.addf %20, %22 : vector<256x128xf32>
      %24 = arith.negf %23 : vector<256x128xf32>
      %25 = math.exp %24 : vector<256x128xf32>
      %cst_17 = arith.constant 1.000000e+00 : f32
      %26 = vector.broadcast %cst_17 : f32 to vector<256x128xf32>
      %27 = arith.addf %26, %25 : vector<256x128xf32>
      %28 = arith.divf %26, %27 : vector<256x128xf32>
      %c0_18 = arith.constant 0 : index
      %c0_19 = arith.constant 0 : index
      %29 = vector.load %arg7[%c0_18, %c0_19] : memref<256x128xf32, #tpu.memory_space<vmem>>, vector<256x128xf32>
      tpu.vector_store %arg7[%c0_18, %c0_19], %28 {strides = array<i32>} : memref<256x128xf32, #tpu.memory_space<vmem>>, vector<256x128xf32>,
    } else {
    }
    return
  }
  func.func @transform_0(%arg0: i32, %arg1: i32) -> (i32, i32) {
    %c0_i32 = arith.constant 0 : i32
    return %arg0, %arg1 : i32, i32
  }
  func.func @transform_1(%arg0: i32, %arg1: i32) -> (i32, i32) {
    %c0_i32 = arith.constant 0 : i32
    %c0_i32_0 = arith.constant 0 : i32
    %c0_i32_1 = arith.constant 0 : i32
    return %c0_i32, %c0_i32_0 : i32, i32
  }
  func.func @transform_2(%arg0: i32, %arg1: i32) -> (i32, i32) {
    %c0_i32 = arith.constant 0 : i32
    return %arg0, %arg1 : i32, i32
  }
  func.func @transform_3(%arg0: i32, %arg1: i32) -> (i32, i32) {
    %c0_i32 = arith.constant 0 : i32
    %c0_i32_0 = arith.constant 0 : i32
    %c0_i32_1 = arith.constant 0 : i32
    return %c0_i32, %c0_i32_0 : i32, i32
  }
  func.func @transform_4(%arg0: i32, %arg1: i32) -> (i32, i32) {
    %c0_i32 = arith.constant 0 : i32
    %c0_i32_0 = arith.constant 0 : i32
    %c0_i32_1 = arith.constant 0 : i32
    return %c0_i32, %c0_i32_0 : i32, i32
  }
  func.func @transform_5(%arg0: i32, %arg1: i32) -> (i32, i32) {
    %c0_i32 = arith.constant 0 : i32
    %c0_i32_0 = arith.constant 0 : i32
    return %arg0, %c0_i32 : i32, i32
  }
}

module attributes {stable_mosaic.version = 11 : i64} {
  func.func @_agg_proj_kernel(%arg0: i32, %arg1: i32, %arg2: memref<256x512xbf16, #tpu.memory_space<vmem>>, %arg3: memref<512x128xbf16, #tpu.memory_space<vmem>>, %arg4: memref<1x128xf32, #tpu.memory_space<vmem>>, %arg5: memref<128x128xbf16, #tpu.memory_space<vmem>>, %arg6: memref<256x128xbf16, #tpu.memory_space<vmem>>, %arg7: memref<256x128xf32, #tpu.memory_space<vmem>>) attributes {dimension_semantics = [#tpu.dimension_semantics<parallel>, #tpu.dimension_semantics<arbitrary>], iteration_bounds = array<i64: 2, 1>, scalar_prefetch = 0 : i64, scratch_operands = 1 : i64, tpu.core_type = #tpu.core_type<tc>, window_params = [{transform_indices = @transform_0, window_bounds = array<i64: 256, 512>}, {pipeline_mode = #tpu.pipeline_mode<synchronous>, transform_indices = @transform_1, window_bounds = array<i64: 512, 128>}, {pipeline_mode = #tpu.pipeline_mode<synchronous>, transform_indices = @transform_2, window_bounds = array<i64: 1, 128>}, {pipeline_mode = #tpu.pipeline_mode<synchronous>, transform_indices = @transform_3, window_bounds = array<i64: 128, 128>}, {transform_indices = @transform_4, window_bounds = array<i64: 256, 128>}]} {
    %c0_i32 = arith.constant 0 : i32
    %0 = arith.cmpi eq, %arg1, %c0_i32 : i32
    %1 = arith.extui %0 : i1 to i32
    %c0_i32_0 = arith.constant 0 : i32
    %2 = arith.cmpi ne, %1, %c0_i32_0 : i32
    scf.if %2 {
      %cst_9 = arith.constant 0.000000e+00 : f32
      %15 = vector.broadcast %cst_9 : f32 to vector<256x128xf32>
      %c0_10 = arith.constant 0 : index
      %c0_11 = arith.constant 0 : index
      %16 = vector.load %arg7[%c0_10, %c0_11] : memref<256x128xf32, #tpu.memory_space<vmem>>, vector<256x128xf32>
      tpu.vector_store %arg7[%c0_10, %c0_11], %15 {strides = array<i32>} : memref<256x128xf32, #tpu.memory_space<vmem>>, vector<256x128xf32>,
    } else {
    }
    %c512_i32 = arith.constant 512 : i32
    %3 = arith.muli %arg1, %c512_i32 : i32
    %4 = tpu.assume_multiple %3, 512 : i32
    %5 = arith.index_cast %4 : i32 to index
    %c0 = arith.constant 0 : index
    %6 = vector.load %arg3[%5, %c0] : memref<512x128xbf16, #tpu.memory_space<vmem>>, vector<512x128xbf16>
    %c0_1 = arith.constant 0 : index
    %c0_2 = arith.constant 0 : index
    %7 = vector.load %arg7[%c0_1, %c0_2] : memref<256x128xf32, #tpu.memory_space<vmem>>, vector<256x128xf32>
    %c0_3 = arith.constant 0 : index
    %c0_4 = arith.constant 0 : index
    %8 = vector.load %arg2[%c0_3, %c0_4] : memref<256x512xbf16, #tpu.memory_space<vmem>>, vector<256x512xbf16>
    %cst = arith.constant dense<0.000000e+00> : vector<256x128xf32>
    %9 = tpu.matmul %8, %6, %cst {dimension_numbers = #tpu.dot_dimension_numbers<[1], [0], [0], [1], [0, 0, 1, 1], [], []>} : vector<256x512xbf16>, vector<512x128xbf16>, vector<256x128xf32> -> vector<256x128xf32>
    %10 = arith.addf %7, %9 : vector<256x128xf32>
    %c0_5 = arith.constant 0 : index
    %c0_6 = arith.constant 0 : index
    %11 = vector.load %arg7[%c0_5, %c0_6] : memref<256x128xf32, #tpu.memory_space<vmem>>, vector<256x128xf32>
    tpu.vector_store %arg7[%c0_5, %c0_6], %10 {strides = array<i32>} : memref<256x128xf32, #tpu.memory_space<vmem>>, vector<256x128xf32>,
    %c0_i32_7 = arith.constant 0 : i32
    %12 = arith.cmpi eq, %arg1, %c0_i32_7 : i32
    %13 = arith.extui %12 : i1 to i32
    %c0_i32_8 = arith.constant 0 : i32
    %14 = arith.cmpi ne, %13, %c0_i32_8 : i32
    scf.if %14 {
      %c0_9 = arith.constant 0 : index
      %c0_10 = arith.constant 0 : index
      %15 = vector.load %arg7[%c0_9, %c0_10] : memref<256x128xf32, #tpu.memory_space<vmem>>, vector<256x128xf32>
      %c0_11 = arith.constant 0 : index
      %c0_12 = arith.constant 0 : index
      %16 = vector.load %arg4[%c0_11, %c0_12] : memref<1x128xf32, #tpu.memory_space<vmem>>, vector<1x128xf32>
      %17 = vector.broadcast %16 : vector<1x128xf32> to vector<256x128xf32>
      %18 = arith.addf %15, %17 : vector<256x128xf32>
      %cst_13 = arith.constant 0.000000e+00 : f32
      %19 = vector.broadcast %cst_13 : f32 to vector<256x128xf32>
      %20 = arith.maximumf %18, %19 : vector<256x128xf32>
      %21 = arith.truncf %20 : vector<256x128xf32> to vector<256x128xbf16>
      %c0_14 = arith.constant 0 : index
      %c0_15 = arith.constant 0 : index
      %22 = vector.load %arg5[%c0_14, %c0_15] : memref<128x128xbf16, #tpu.memory_space<vmem>>, vector<128x128xbf16>
      %cst_16 = arith.constant dense<0.000000e+00> : vector<256x128xf32>
      %23 = tpu.matmul %21, %22, %cst_16 {dimension_numbers = #tpu.dot_dimension_numbers<[1], [0], [0], [1], [0, 0, 1, 1], [], []>} : vector<256x128xbf16>, vector<128x128xbf16>, vector<256x128xf32> -> vector<256x128xf32>
      %24 = arith.truncf %23 : vector<256x128xf32> to vector<256x128xbf16>
      %c0_17 = arith.constant 0 : index
      %c0_18 = arith.constant 0 : index
      %25 = vector.load %arg6[%c0_17, %c0_18] : memref<256x128xbf16, #tpu.memory_space<vmem>>, vector<256x128xbf16>
      tpu.vector_store %arg6[%c0_17, %c0_18], %24 {strides = array<i32>} : memref<256x128xbf16, #tpu.memory_space<vmem>>, vector<256x128xbf16>,
    } else {
    }
    return
  }
  func.func @transform_0(%arg0: i32, %arg1: i32) -> (i32, i32) {
    %c0_i32 = arith.constant 0 : i32
    return %arg0, %arg1 : i32, i32
  }
  func.func @transform_1(%arg0: i32, %arg1: i32) -> (i32, i32) {
    %c0_i32 = arith.constant 0 : i32
    %c0_i32_0 = arith.constant 0 : i32
    %c0_i32_1 = arith.constant 0 : i32
    return %c0_i32, %c0_i32_0 : i32, i32
  }
  func.func @transform_2(%arg0: i32, %arg1: i32) -> (i32, i32) {
    %c0_i32 = arith.constant 0 : i32
    %c0_i32_0 = arith.constant 0 : i32
    %c0_i32_1 = arith.constant 0 : i32
    return %c0_i32, %c0_i32_0 : i32, i32
  }
  func.func @transform_3(%arg0: i32, %arg1: i32) -> (i32, i32) {
    %c0_i32 = arith.constant 0 : i32
    %c0_i32_0 = arith.constant 0 : i32
    %c0_i32_1 = arith.constant 0 : i32
    return %c0_i32, %c0_i32_0 : i32, i32
  }
  func.func @transform_4(%arg0: i32, %arg1: i32) -> (i32, i32) {
    %c0_i32 = arith.constant 0 : i32
    %c0_i32_0 = arith.constant 0 : i32
    return %arg0, %c0_i32 : i32, i32
  }
}

</mosaic_0001>

<llo_original>
// kernel: forward.3
$region0: #{forward.3}
  #allocation0 [shape = 'u32[]', space=smem, size = 0x4, offset = 0x4, fixed_abs, tag = 'smem constant byte address 0x4 - core index']
  #allocation1 [shape = 'u32[72,128]{1,0:T(1,128)}', space=vmem, size = 0x9000, scoped, tag = 'internal scratch']
  %s0 = inlined_call_operand.vmem [shape: bf16[512,16], index: 0, kind: input, shape index: {}]
  %s1 = inlined_call_operand.vmem [shape: bf16[512,16], index: 1, kind: input, shape index: {}]
  %s2 = inlined_call_operand.vmem [shape: bf16[16,128], index: 2, kind: input, shape index: {}]
  %s3 = inlined_call_operand.vmem [shape: bf16[16,128], index: 3, kind: input, shape index: {}]
  %s4 = inlined_call_operand.vmem [shape: bf16[512,128], index: 4, kind: output, shape index: {0}]
  %s5 = inlined_call_operand.vmem [shape: bf16[512,128], index: 5, kind: output, shape index: {1}]
  %6 = xla_tuple %s4, %s5
  %s7 = sld [smem:[#allocation0]]
  $region57: #{forward.3} parent=0
    _
  %s9 = ssub.s32 1, %s7
  %s10 = scalar_select 0, %s9, %s7
  loop: start=0, step=1, limit=4
  $region2: #{forward.3} parent=0 // loop_pre_header
    _
  $region3: #{forward.3} parent=0 // loop_header
    %s12 = sphi 0, %s16
    %p13 = scmp.ge.s32.totalorder %s12, 4
    %s22 = sphi 0, %s24
    %s25 = sphi 0, %s22
    %s26 = sphi 0, %s25
    %s42 = sphi 0, %s26
    %s48 = sphi 0, %s50
    %s51 = sphi 0, %s48
    %s52 = sphi 0, %s51
    %s68 = sphi 0, %s52
    %s72 = sphi 0, %s72
    %s74 = sphi 0, %s72
    %s75 = sphi 0, %s74
    %s89 = sphi 0, %s75
    %s93 = sphi 0, %s93
    %s95 = sphi 0, %s93
    %s96 = sphi 0, %s95
    %s110 = sphi 0, %s96
    %s116 = sphi 0, %s118
    %s119 = sphi 0, %s116
    %s120 = sphi 0, %s119
    %s136 = sphi 0, %s120
    %s142 = sphi 0, %s144
    %s145 = sphi 0, %s142
    %s146 = sphi 0, %s145
    %s162 = sphi 0, %s146
  $region4: #{forward.3} parent=0 // loop_header_branch
    %15 = sbr.rel (%p13) target = $region8
  $region5: #{forward.3} parent=0 // loop_body
    %s17 = ssub.s32 %s12, 1
    %s18 = ssub.s32 %s12, 2
    %s19 = sadd.s32 %s12, 1
    %s20 = ssub.s32 %s12, %s19
    %p21 = scmp.eq.s32.totalorder %s20, 0
    %s23 = sadd.s32 %s22, 1
    %s24 = scalar_select %p21, %s22, %s23
    %p27 = pneg %p21
    %p28 = scmp.eq.s32.totalorder %s12, 1
    %p29 = por %p27, %p28
    %p30 = scmp.ne.s32.totalorder %s22, %s25
    %p31 = scmp.eq.s32.totalorder %s12, 0
    %p32 = por %p30, %p31
    %p33 = scmp.ne.s32.totalorder %s22, %s25
    %p34 = scmp.eq.s32.totalorder %s17, 1
    %p35 = por %p33, %p34
    %p36 = scmp.ne.s32.totalorder %s25, %s26
    %p37 = scmp.eq.s32.totalorder %s17, 0
    %p38 = por %p36, %p37
    %p39 = scmp.ne.s32.totalorder %s25, %s26
    %p40 = scmp.eq.s32.totalorder %s18, 1
    %p41 = por %p39, %p40
    %p43 = scmp.ne.s32.totalorder %s26, %s42
    %p44 = scmp.eq.s32.totalorder %s18, 0
    %p45 = por %p43, %p44
    %s46 = ssub.s32 %s12, %s19
    %p47 = scmp.eq.s32.totalorder %s46, 0
    %s49 = sadd.s32 %s48, 1
    %s50 = scalar_select %p47, %s48, %s49
    %p53 = pneg %p47
    %p54 = scmp.eq.s32.totalorder %s12, 1
    %p55 = por %p53, %p54
    %p56 = scmp.ne.s32.totalorder %s48, %s51
    %p57 = scmp.eq.s32.totalorder %s12, 0
    %p58 = por %p56, %p57
    %p59 = scmp.ne.s32.totalorder %s48, %s51
    %p60 = scmp.eq.s32.totalorder %s17, 1
    %p61 = por %p59, %p60
    %p62 = scmp.ne.s32.totalorder %s51, %s52
    %p63 = scmp.eq.s32.totalorder %s17, 0
    %p64 = por %p62, %p63
    %p65 = scmp.ne.s32.totalorder %s51, %s52
    %p66 = scmp.eq.s32.totalorder %s18, 1
    %p67 = por %p65, %p66
    %p69 = scmp.ne.s32.totalorder %s52, %s68
    %p70 = scmp.eq.s32.totalorder %s18, 0
    %p71 = por %p69, %p70
    %s73 = sadd.s32 %s72, 1
    %p76 = scmp.eq.s32.totalorder %s12, 1
    %p77 = scmp.ne.s32.totalorder %s72, %s74
    %p78 = scmp.eq.s32.totalorder %s12, 0
    %p79 = por %p77, %p78
    %p80 = scmp.ne.s32.totalorder %s72, %s74
    %p81 = scmp.eq.s32.totalorder %s17, 1
    %p82 = por %p80, %p81
    %p83 = scmp.ne.s32.totalorder %s74, %s75
    %p84 = scmp.eq.s32.totalorder %s17, 0
    %p85 = por %p83, %p84
    %p86 = scmp.ne.s32.totalorder %s74, %s75
    %p87 = scmp.eq.s32.totalorder %s18, 1
    %p88 = por %p86, %p87
    %p90 = scmp.ne.s32.totalorder %s75, %s89
    %p91 = scmp.eq.s32.totalorder %s18, 0
    %p92 = por %p90, %p91
    %s94 = sadd.s32 %s93, 1
    %p97 = scmp.eq.s32.totalorder %s12, 1
    %p98 = scmp.ne.s32.totalorder %s93, %s95
    %p99 = scmp.eq.s32.totalorder %s12, 0
    %p100 = por %p98, %p99
    %p101 = scmp.ne.s32.totalorder %s93, %s95
    %p102 = scmp.eq.s32.totalorder %s17, 1
    %p103 = por %p101, %p102
    %p104 = scmp.ne.s32.totalorder %s95, %s96
    %p105 = scmp.eq.s32.totalorder %s17, 0
    %p106 = por %p104, %p105
    %p107 = scmp.ne.s32.totalorder %s95, %s96
    %p108 = scmp.eq.s32.totalorder %s18, 1
    %p109 = por %p107, %p108
    %p111 = scmp.ne.s32.totalorder %s96, %s110
    %p112 = scmp.eq.s32.totalorder %s18, 0
    %p113 = por %p111, %p112
    %s114 = ssub.s32 %s12, %s19
    %p115 = scmp.eq.s32.totalorder %s114, 0
    %s117 = sadd.s32 %s116, 1
    %s118 = scalar_select %p115, %s116, %s117
    %p121 = pneg %p115
    %p122 = scmp.eq.s32.totalorder %s12, 1
    %p123 = por %p121, %p122
    %p124 = scmp.ne.s32.totalorder %s116, %s119
    %p125 = scmp.eq.s32.totalorder %s12, 0
    %p126 = por %p124, %p125
    %p127 = scmp.ne.s32.totalorder %s116, %s119
    %p128 = scmp.eq.s32.totalorder %s17, 1
    %p129 = por %p127, %p128
    %p130 = scmp.ne.s32.totalorder %s119, %s120
    %p131 = scmp.eq.s32.totalorder %s17, 0
    %p132 = por %p130, %p131
    %p133 = scmp.ne.s32.totalorder %s119, %s120
    %p134 = scmp.eq.s32.totalorder %s18, 1
    %p135 = por %p133, %p134
    %p137 = scmp.ne.s32.totalorder %s120, %s136
    %p138 = scmp.eq.s32.totalorder %s18, 0
    %p139 = por %p137, %p138
    %s140 = ssub.s32 %s12, %s19
    %p141 = scmp.eq.s32.totalorder %s140, 0
    %s143 = sadd.s32 %s142, 1
    %s144 = scalar_select %p141, %s142, %s143
    %p147 = pneg %p141
    %p148 = scmp.eq.s32.totalorder %s12, 1
    %p149 = por %p147, %p148
    %p150 = scmp.ne.s32.totalorder %s142, %s145
    %p151 = scmp.eq.s32.totalorder %s12, 0
    %p152 = por %p150, %p151
    %p153 = scmp.ne.s32.totalorder %s142, %s145
    %p154 = scmp.eq.s32.totalorder %s17, 1
    %p155 = por %p153, %p154
    %p156 = scmp.ne.s32.totalorder %s145, %s146
    %p157 = scmp.eq.s32.totalorder %s17, 0
    %p158 = por %p156, %p157
    %p159 = scmp.ne.s32.totalorder %s145, %s146
    %p160 = scmp.eq.s32.totalorder %s18, 1
    %p161 = por %p159, %p160
    %p163 = scmp.ne.s32.totalorder %s146, %s162
    %p164 = scmp.eq.s32.totalorder %s18, 0
    %p165 = por %p163, %p164
    %p166 = scmp.le.s32.totalorder 1, %s12
    %p167 = scmp.lt.s32.totalorder %s12, 3
    %p168 = pnand %p166, %p167
    %p169 = pneg %p168
    // Predicated region
    $region9: #{forward.3} parent=5 // pred_check
      _
    $region10: #{forward.3} parent=5 // pred_check_branch
      %171 = sbr.rel (%p168) target = $region12
    $region11: #{forward.3} parent=5 // pred_region
      %s172 = ssub.s32 %s12, 1
      // Predicated region
      $region13: #{forward.3} parent=11 // pred_check
        %p173 = pneg %p85
      $region14: #{forward.3} parent=11 // pred_check_branch
        %175 = sbr.rel (%p173) target = $region16
      $region15: #{forward.3} parent=11 // pred_region
        _
      $region16: #{forward.3} parent=11 // pred_fallthru
        _
      // Predicated region
      $region17: #{forward.3} parent=11 // pred_check
        %p176 = pneg %p106
      $region18: #{forward.3} parent=11 // pred_check_branch
        %178 = sbr.rel (%p176) target = $region20
      $region19: #{forward.3} parent=11 // pred_region
        _
      $region20: #{forward.3} parent=11 // pred_fallthru
        _
    $region12: #{forward.3} parent=5 // pred_fallthru
      _
    %p179 = scmp.lt.s32.totalorder %s12, 2
    // Predicated region
    $region21: #{forward.3} parent=5 // pred_check
      %p180 = pneg %p179
    $region22: #{forward.3} parent=5 // pred_check_branch
      %182 = sbr.rel (%p180) target = $region24
    $region23: #{forward.3} parent=5 // pred_region
      // Predicated region
      $region25: #{forward.3} parent=23 // pred_check
        %p183 = pneg %p32
      $region26: #{forward.3} parent=23 // pred_check_branch
        %185 = sbr.rel (%p183) target = $region28
      $region27: #{forward.3} parent=23 // pred_region
        %s186 = smul.u32 32, %s12
        %p187 = scmp.lt.s32.totalorder %s186, 63
        %s188 = scalar_select %p187, %s186, 63
        %s189 = smul.addr %s188, 4
        %s190 = scalar_lea.vmem %s0, %s189
        %s191 = smul.u32 32, %s12
      $region28: #{forward.3} parent=23 // pred_fallthru
        _
      // Predicated region
      $region29: #{forward.3} parent=23 // pred_check
        %p192 = pneg %p58
      $region30: #{forward.3} parent=23 // pred_check_branch
        %194 = sbr.rel (%p192) target = $region32
      $region31: #{forward.3} parent=23 // pred_region
        %s195 = smul.u32 32, %s12
        %p196 = scmp.lt.s32.totalorder %s195, 63
        %s197 = scalar_select %p196, %s195, 63
        %s198 = smul.addr %s197, 4
        %s199 = scalar_lea.vmem %s1, %s198
        %s200 = smul.u32 32, %s12
      $region32: #{forward.3} parent=23 // pred_fallthru
        _
    $region24: #{forward.3} parent=5 // pred_fallthru
      _
    %p201 = scmp.le.s32.totalorder 1, %s12
    %p202 = scmp.lt.s32.totalorder %s12, 3
    %p203 = pnand %p201, %p202
    %p204 = pneg %p203
    // Predicated region
    $region33: #{forward.3} parent=5 // pred_check
      _
    $region34: #{forward.3} parent=5 // pred_check_branch
      %206 = sbr.rel (%p203) target = $region36
    $region35: #{forward.3} parent=5 // pred_region
      %s207 = ssub.s32 %s12, 1
      %s208 = smul.u32 32, %s17
      %p209 = scmp.lt.s32.totalorder %s208, 63
      %s210 = scalar_select %p209, %s208, 63
      %s211 = smul.addr %s210, 4
      %s212 = scalar_lea.vmem %s0, %s211
      %p213 = pneg %p38
      %p214 = pneg %p35
      %s215 = smul.u32 32, %s17
      %p216 = scmp.lt.s32.totalorder %s215, 63
      %s217 = scalar_select %p216, %s215, 63
      %s218 = smul.addr %s217, 4
      %s219 = scalar_lea.vmem %s1, %s218
      %p220 = pneg %p64
      %p221 = pneg %p61
      %p222 = pneg %p85
      %p223 = pneg %p82
      %p224 = pneg %p106
      %p225 = pneg %p103
      %p226 = pneg %p132
      %p227 = pneg %p129
      %s228 = smul.u32 32, %s17
      %p229 = scmp.lt.s32.totalorder %s228, 63
      %s230 = scalar_select %p229, %s228, 63
      %s231 = smul.addr %s230, 4
      %s232 = scalar_lea.vmem %s4, %s231
      %p233 = pneg %p158
      %p234 = pneg %p155
      %s235 = smul.u32 32, %s17
      %p236 = scmp.lt.s32.totalorder %s235, 63
      %s237 = scalar_select %p236, %s235, 63
      %s238 = smul.addr %s237, 4
      %s239 = scalar_lea.vmem %s5, %s238
      %s240 = smul.u32 32, %s17
      %p241 = scmp.lt.s32.totalorder %s240, 63
      %s242 = scalar_select %p241, %s240, 63
      %s243 = smul.addr %s242, 4
      %s244 = scalar_lea.vmem %s0, %s243
      %s245 = smul.u32 32, %s17
      %s246 = smul.u32 32, %s17
      %p247 = scmp.lt.s32.totalorder %s246, 63
      %s248 = scalar_select %p247, %s246, 63
      %s249 = smul.addr %s248, 4
      %s250 = scalar_lea.vmem %s1, %s249
      %s251 = smul.u32 32, %s17
      %s252 = smul.u32 32, %s17
      %p253 = scmp.lt.s32.totalorder %s252, 63
      %s254 = scalar_select %p253, %s252, 63
      %s255 = smul.addr %s254, 4
      %s256 = scalar_lea.vmem %s4, %s255
      %s257 = smul.u32 32, %s17
      %s258 = smul.u32 32, %s17
      %p259 = scmp.lt.s32.totalorder %s258, 63
      %s260 = scalar_select %p259, %s258, 63
      %s261 = smul.addr %s260, 4
      %s262 = scalar_lea.vmem %s5, %s261
      %s263 = smul.u32 32, %s17
      %v265 = vld [vmem:[%s244] sm:$0xf]
      %v266 = vld [vmem:[%s244 + $0x4] sm:$0xf]
      %v267 = vld [vmem:[%s244 + $0x8] sm:$0xf]
      %v268 = vld [vmem:[%s244 + $0xc] sm:$0xf]
      %v269 = vld [vmem:[%s244 + $0x10] sm:$0xf]
      %v270 = vld [vmem:[%s244 + $0x14] sm:$0xf]
      %v271 = vld [vmem:[%s244 + $0x18] sm:$0xf]
      %v272 = vld [vmem:[%s244 + $0x1c] sm:$0xf]
      %v273 = vld [vmem:[%s244 + $0x20] sm:$0xf]
      %v274 = vld [vmem:[%s244 + $0x24] sm:$0xf]
      %v275 = vld [vmem:[%s244 + $0x28] sm:$0xf]
      %v276 = vld [vmem:[%s244 + $0x2c] sm:$0xf]
      %v277 = vld [vmem:[%s244 + $0x30] sm:$0xf]
      %v278 = vld [vmem:[%s244 + $0x34] sm:$0xf]
      %v279 = vld [vmem:[%s244 + $0x38] sm:$0xf]
      %v280 = vld [vmem:[%s244 + $0x3c] sm:$0xf]
      %v281 = vld [vmem:[%s244 + $0x40] sm:$0xf]
      %v282 = vld [vmem:[%s244 + $0x44] sm:$0xf]
      %v283 = vld [vmem:[%s244 + $0x48] sm:$0xf]
      %v284 = vld [vmem:[%s244 + $0x4c] sm:$0xf]
      %v285 = vld [vmem:[%s244 + $0x50] sm:$0xf]
      %v286 = vld [vmem:[%s244 + $0x54] sm:$0xf]
      %v287 = vld [vmem:[%s244 + $0x58] sm:$0xf]
      %v288 = vld [vmem:[%s244 + $0x5c] sm:$0xf]
      %v289 = vld [vmem:[%s244 + $0x60] sm:$0xf]
      %v290 = vld [vmem:[%s244 + $0x64] sm:$0xf]
      %v291 = vld [vmem:[%s244 + $0x68] sm:$0xf]
      %v292 = vld [vmem:[%s244 + $0x6c] sm:$0xf]
      %v293 = vld [vmem:[%s244 + $0x70] sm:$0xf]
      %v294 = vld [vmem:[%s244 + $0x74] sm:$0xf]
      %v295 = vld [vmem:[%s244 + $0x78] sm:$0xf]
      %v296 = vld [vmem:[%s244 + $0x7c] sm:$0xf]
      %v297 = vld [vmem:[%s250] sm:$0xf]
      %v298 = vld [vmem:[%s250 + $0x4] sm:$0xf]
      %v299 = vld [vmem:[%s250 + $0x8] sm:$0xf]
      %v300 = vld [vmem:[%s250 + $0xc] sm:$0xf]
      %v301 = vld [vmem:[%s250 + $0x10] sm:$0xf]
      %v302 = vld [vmem:[%s250 + $0x14] sm:$0xf]
      %v303 = vld [vmem:[%s250 + $0x18] sm:$0xf]
      %v304 = vld [vmem:[%s250 + $0x1c] sm:$0xf]
      %v305 = vld [vmem:[%s250 + $0x20] sm:$0xf]
      %v306 = vld [vmem:[%s250 + $0x24] sm:$0xf]
      %v307 = vld [vmem:[%s250 + $0x28] sm:$0xf]
      %v308 = vld [vmem:[%s250 + $0x2c] sm:$0xf]
      %v309 = vld [vmem:[%s250 + $0x30] sm:$0xf]
      %v310 = vld [vmem:[%s250 + $0x34] sm:$0xf]
      %v311 = vld [vmem:[%s250 + $0x38] sm:$0xf]
      %v312 = vld [vmem:[%s250 + $0x3c] sm:$0xf]
      %v313 = vld [vmem:[%s250 + $0x40] sm:$0xf]
      %v314 = vld [vmem:[%s250 + $0x44] sm:$0xf]
      %v315 = vld [vmem:[%s250 + $0x48] sm:$0xf]
      %v316 = vld [vmem:[%s250 + $0x4c] sm:$0xf]
      %v317 = vld [vmem:[%s250 + $0x50] sm:$0xf]
      %v318 = vld [vmem:[%s250 + $0x54] sm:$0xf]
      %v319 = vld [vmem:[%s250 + $0x58] sm:$0xf]
      %v320 = vld [vmem:[%s250 + $0x5c] sm:$0xf]
      %v321 = vld [vmem:[%s250 + $0x60] sm:$0xf]
      %v322 = vld [vmem:[%s250 + $0x64] sm:$0xf]
      %v323 = vld [vmem:[%s250 + $0x68] sm:$0xf]
      %v324 = vld [vmem:[%s250 + $0x6c] sm:$0xf]
      %v325 = vld [vmem:[%s250 + $0x70] sm:$0xf]
      %v326 = vld [vmem:[%s250 + $0x74] sm:$0xf]
      %v327 = vld [vmem:[%s250 + $0x78] sm:$0xf]
      %v328 = vld [vmem:[%s250 + $0x7c] sm:$0xf]
      %v329 = vunpack.c.l.bf16 %v265
      %v330 = vunpack.c.l.bf16 %v266
      %v331 = vunpack.c.l.bf16 %v267
      %v332 = vunpack.c.l.bf16 %v268
      %v333 = vunpack.c.l.bf16 %v269
      %v334 = vunpack.c.l.bf16 %v270
      %v335 = vunpack.c.l.bf16 %v271
      %v336 = vunpack.c.l.bf16 %v272
      %v337 = vunpack.c.l.bf16 %v273
      %v338 = vunpack.c.l.bf16 %v274
      %v339 = vunpack.c.l.bf16 %v275
      %v340 = vunpack.c.l.bf16 %v276
      %v341 = vunpack.c.l.bf16 %v277
      %v342 = vunpack.c.l.bf16 %v278
      %v343 = vunpack.c.l.bf16 %v279
      %v344 = vunpack.c.l.bf16 %v280
      %v345 = vunpack.c.l.bf16 %v281
      %v346 = vunpack.c.l.bf16 %v282
      %v347 = vunpack.c.l.bf16 %v283
      %v348 = vunpack.c.l.bf16 %v284
      %v349 = vunpack.c.l.bf16 %v285
      %v350 = vunpack.c.l.bf16 %v286
      %v351 = vunpack.c.l.bf16 %v287
      %v352 = vunpack.c.l.bf16 %v288
      %v353 = vunpack.c.l.bf16 %v289
      %v354 = vunpack.c.l.bf16 %v290
      %v355 = vunpack.c.l.bf16 %v291
      %v356 = vunpack.c.l.bf16 %v292
      %v357 = vunpack.c.l.bf16 %v293
      %v358 = vunpack.c.l.bf16 %v294
      %v359 = vunpack.c.l.bf16 %v295
      %v360 = vunpack.c.l.bf16 %v296
      %v361 = vunpack.c.l.bf16 %v297
      %v362 = vunpack.c.l.bf16 %v298
      %v363 = vunpack.c.l.bf16 %v299
      %v364 = vunpack.c.l.bf16 %v300
      %v365 = vunpack.c.l.bf16 %v301
      %v366 = vunpack.c.l.bf16 %v302
      %v367 = vunpack.c.l.bf16 %v303
      %v368 = vunpack.c.l.bf16 %v304
      %v369 = vunpack.c.l.bf16 %v305
      %v370 = vunpack.c.l.bf16 %v306
      %v371 = vunpack.c.l.bf16 %v307
      %v372 = vunpack.c.l.bf16 %v308
      %v373 = vunpack.c.l.bf16 %v309
      %v374 = vunpack.c.l.bf16 %v310
      %v375 = vunpack.c.l.bf16 %v311
      %v376 = vunpack.c.l.bf16 %v312
      %v377 = vunpack.c.l.bf16 %v313
      %v378 = vunpack.c.l.bf16 %v314
      %v379 = vunpack.c.l.bf16 %v315
      %v380 = vunpack.c.l.bf16 %v316
      %v381 = vunpack.c.l.bf16 %v317
      %v382 = vunpack.c.l.bf16 %v318
      %v383 = vunpack.c.l.bf16 %v319
      %v384 = vunpack.c.l.bf16 %v320
      %v385 = vunpack.c.l.bf16 %v321
      %v386 = vunpack.c.l.bf16 %v322
      %v387 = vunpack.c.l.bf16 %v323
      %v388 = vunpack.c.l.bf16 %v324
      %v389 = vunpack.c.l.bf16 %v325
      %v390 = vunpack.c.l.bf16 %v326
      %v391 = vunpack.c.l.bf16 %v327
      %v392 = vunpack.c.l.bf16 %v328
      %v393 = vmul.f32 %v329, %v361
      %v394 = vmul.f32 %v330, %v362
      %v395 = vmul.f32 %v331, %v363
      %v396 = vmul.f32 %v332, %v364
      %v397 = vmul.f32 %v333, %v365
      %v398 = vmul.f32 %v334, %v366
      %v399 = vmul.f32 %v335, %v367
      %v400 = vmul.f32 %v336, %v368
      %v401 = vmul.f32 %v337, %v369
      %v402 = vmul.f32 %v338, %v370
      %v403 = vmul.f32 %v339, %v371
      %v404 = vmul.f32 %v340, %v372
      %v405 = vmul.f32 %v341, %v373
      %v406 = vmul.f32 %v342, %v374
      %v407 = vmul.f32 %v343, %v375
      %v408 = vmul.f32 %v344, %v376
      %v409 = vmul.f32 %v345, %v377
      %v410 = vmul.f32 %v346, %v378
      %v411 = vmul.f32 %v347, %v379
      %v412 = vmul.f32 %v348, %v380
      %v413 = vmul.f32 %v349, %v381
      %v414 = vmul.f32 %v350, %v382
      %v415 = vmul.f32 %v351, %v383
      %v416 = vmul.f32 %v352, %v384
      %v417 = vmul.f32 %v353, %v385
      %v418 = vmul.f32 %v354, %v386
      %v419 = vmul.f32 %v355, %v387
      %v420 = vmul.f32 %v356, %v388
      %v421 = vmul.f32 %v357, %v389
      %v422 = vmul.f32 %v358, %v390
      %v423 = vmul.f32 %v359, %v391
      %v424 = vmul.f32 %v360, %v392
      %v425 = vpack.c.bf16 %v394, %v393
      %v426 = vpack.c.bf16 %v396, %v395
      %v427 = vpack.c.bf16 %v398, %v397
      %v428 = vpack.c.bf16 %v400, %v399
      %v429 = vpack.c.bf16 %v402, %v401
      %v430 = vpack.c.bf16 %v404, %v403
      %v431 = vpack.c.bf16 %v406, %v405
      %v432 = vpack.c.bf16 %v408, %v407
      %v433 = vpack.c.bf16 %v410, %v409
      %v434 = vpack.c.bf16 %v412, %v411
      %v435 = vpack.c.bf16 %v414, %v413
      %v436 = vpack.c.bf16 %v416, %v415
      %v437 = vpack.c.bf16 %v418, %v417
      %v438 = vpack.c.bf16 %v420, %v419
      %v439 = vpack.c.bf16 %v422, %v421
      %v440 = vpack.c.bf16 %v424, %v423
      %v441 = vld [vmem:[%s2] sm:$0xf]
      %v442 = vld [vmem:[%s2 + $0x4] sm:$0xf]
      %v445 = vunpack.c.l.b16 %v441
      %v446 = vunpack.c.l.b16 %v442
      %v447 = vpack.c.b16 %v446, %v445
      %vm449 = vcmask 130048
      %v451 = vsel %vm449, %v425, 0
      %v454 = vsel %vm449, %v426, 0
      %v457 = vsel %vm449, %v427, 0
      %v460 = vsel %vm449, %v428, 0
      %v463 = vsel %vm449, %v429, 0
      %v466 = vsel %vm449, %v430, 0
      %v469 = vsel %vm449, %v431, 0
      %v472 = vsel %vm449, %v432, 0
      %v475 = vsel %vm449, %v433, 0
      %v478 = vsel %vm449, %v434, 0
      %v481 = vsel %vm449, %v435, 0
      %v484 = vsel %vm449, %v436, 0
      %v487 = vsel %vm449, %v437, 0
      %v490 = vsel %vm449, %v438, 0
      %v493 = vsel %vm449, %v439, 0
      %v496 = vsel %vm449, %v440, 0
      %498 = vmatpush.bf16.msra.mxu0 0
      %499 = vmatpush.bf16.msra.mxu0 0
      %500 = vmatpush.bf16.msra.mxu0 0
      %501 = vmatpush.bf16.msra.mxu0 0
      %502 = vmatpush.bf16.msra.mxu0 0
      %503 = vmatpush.bf16.msra.mxu0 0
      %504 = vmatpush.bf16.msra.mxu0 0
      %505 = vmatpush.bf16.msra.mxu0 %v447
      %506 = vmatmul.bf16.gmra.mxu0 %v451
      %v507 = vpop.f32.mrf.mxu0
      %v508 = vadd.f32 0.0, %v507
      %v509 = vpop.f32.mrf.mxu0
      %v510 = vadd.f32 0.0, %v509
      %511 = vmatmul.bf16.gmra.mxu0 %v454
      %v512 = vpop.f32.mrf.mxu0
      %v513 = vadd.f32 0.0, %v512
      %v514 = vpop.f32.mrf.mxu0
      %v515 = vadd.f32 0.0, %v514
      %516 = vmatmul.bf16.gmra.mxu0 %v457
      %v517 = vpop.f32.mrf.mxu0
      %v518 = vadd.f32 0.0, %v517
      %v519 = vpop.f32.mrf.mxu0
      %v520 = vadd.f32 0.0, %v519
      %521 = vmatmul.bf16.gmra.mxu0 %v460
      %v522 = vpop.f32.mrf.mxu0
      %v523 = vadd.f32 0.0, %v522
      %v524 = vpop.f32.mrf.mxu0
      %v525 = vadd.f32 0.0, %v524
      %526 = vmatmul.bf16.gmra.mxu0 %v463
      %v527 = vpop.f32.mrf.mxu0
      %v528 = vadd.f32 0.0, %v527
      %v529 = vpop.f32.mrf.mxu0
      %v530 = vadd.f32 0.0, %v529
      %531 = vmatmul.bf16.gmra.mxu0 %v466
      %v532 = vpop.f32.mrf.mxu0
      %v533 = vadd.f32 0.0, %v532
      %v534 = vpop.f32.mrf.mxu0
      %v535 = vadd.f32 0.0, %v534
      %536 = vmatmul.bf16.gmra.mxu0 %v469
      %v537 = vpop.f32.mrf.mxu0
      %v538 = vadd.f32 0.0, %v537
      %v539 = vpop.f32.mrf.mxu0
      %v540 = vadd.f32 0.0, %v539
      %541 = vmatmul.bf16.gmra.mxu0 %v472
      %v542 = vpop.f32.mrf.mxu0
      %v543 = vadd.f32 0.0, %v542
      %v544 = vpop.f32.mrf.mxu0
      %v545 = vadd.f32 0.0, %v544
      %546 = vmatmul.bf16.gmra.mxu0 %v475
      %v547 = vpop.f32.mrf.mxu0
      %v548 = vadd.f32 0.0, %v547
      %v549 = vpop.f32.mrf.mxu0
      %v550 = vadd.f32 0.0, %v549
      %551 = vmatmul.bf16.gmra.mxu0 %v478
      %v552 = vpop.f32.mrf.mxu0
      %v553 = vadd.f32 0.0, %v552
      %v554 = vpop.f32.mrf.mxu0
      %v555 = vadd.f32 0.0, %v554
      %556 = vmatmul.bf16.gmra.mxu0 %v481
      %v557 = vpop.f32.mrf.mxu0
      %v558 = vadd.f32 0.0, %v557
      %v559 = vpop.f32.mrf.mxu0
      %v560 = vadd.f32 0.0, %v559
      %561 = vmatmul.bf16.gmra.mxu0 %v484
      %v562 = vpop.f32.mrf.mxu0
      %v563 = vadd.f32 0.0, %v562
      %v564 = vpop.f32.mrf.mxu0
      %v565 = vadd.f32 0.0, %v564
      %566 = vmatmul.bf16.gmra.mxu0 %v487
      %v567 = vpop.f32.mrf.mxu0
      %v568 = vadd.f32 0.0, %v567
      %v569 = vpop.f32.mrf.mxu0
      %v570 = vadd.f32 0.0, %v569
      %571 = vmatmul.bf16.gmra.mxu0 %v490
      %v572 = vpop.f32.mrf.mxu0
      %v573 = vadd.f32 0.0, %v572
      %v574 = vpop.f32.mrf.mxu0
      %v575 = vadd.f32 0.0, %v574
      %576 = vmatmul.bf16.gmra.mxu0 %v493
      %v577 = vpop.f32.mrf.mxu0
      %v578 = vadd.f32 0.0, %v577
      %v579 = vpop.f32.mrf.mxu0
      %v580 = vadd.f32 0.0, %v579
      %581 = vmatmul.bf16.gmra.mxu0 %v496
      %v582 = vpop.f32.mrf.mxu0
      %v583 = vadd.f32 0.0, %v582
      %v584 = vpop.f32.mrf.mxu0
      %v585 = vadd.f32 0.0, %v584
      %586 = vdwg.mxu0
      %v587 = vpack.c.bf16 %v508, %v508
      %v588 = vpack.c.bf16 %v510, %v510
      %v589 = vpack.c.bf16 %v513, %v513
      %v590 = vpack.c.bf16 %v515, %v515
      %v591 = vpack.c.bf16 %v518, %v518
      %v592 = vpack.c.bf16 %v520, %v520
      %v593 = vpack.c.bf16 %v523, %v523
      %v594 = vpack.c.bf16 %v525, %v525
      %v595 = vpack.c.bf16 %v528, %v528
      %v596 = vpack.c.bf16 %v530, %v530
      %v597 = vpack.c.bf16 %v533, %v533
      %v598 = vpack.c.bf16 %v535, %v535
      %v599 = vpack.c.bf16 %v538, %v538
      %v600 = vpack.c.bf16 %v540, %v540
      %v601 = vpack.c.bf16 %v543, %v543
      %v602 = vpack.c.bf16 %v545, %v545
      %v603 = vpack.c.bf16 %v548, %v548
      %v604 = vpack.c.bf16 %v550, %v550
      %v605 = vpack.c.bf16 %v553, %v553
      %v606 = vpack.c.bf16 %v555, %v555
      %v607 = vpack.c.bf16 %v558, %v558
      %v608 = vpack.c.bf16 %v560, %v560
      %v609 = vpack.c.bf16 %v563, %v563
      %v610 = vpack.c.bf16 %v565, %v565
      %v611 = vpack.c.bf16 %v568, %v568
      %v612 = vpack.c.bf16 %v570, %v570
      %v613 = vpack.c.bf16 %v573, %v573
      %v614 = vpack.c.bf16 %v575, %v575
      %v615 = vpack.c.bf16 %v578, %v578
      %v616 = vpack.c.bf16 %v580, %v580
      %v617 = vpack.c.bf16 %v583, %v583
      %v618 = vpack.c.bf16 %v585, %v585
      %619 = vst [vmem:[%s256] sm:$0xf] %v587
      %620 = vst [vmem:[%s256 + $0x4] sm:$0xf] %v588
      %621 = vst [vmem:[%s256 + $0x8] sm:$0xf] %v589
      %622 = vst [vmem:[%s256 + $0xc] sm:$0xf] %v590
      %623 = vst [vmem:[%s256 + $0x10] sm:$0xf] %v591
      %624 = vst [vmem:[%s256 + $0x14] sm:$0xf] %v592
      %625 = vst [vmem:[%s256 + $0x18] sm:$0xf] %v593
      %626 = vst [vmem:[%s256 + $0x1c] sm:$0xf] %v594
      %627 = vst [vmem:[%s256 + $0x20] sm:$0xf] %v595
      %628 = vst [vmem:[%s256 + $0x24] sm:$0xf] %v596
      %629 = vst [vmem:[%s256 + $0x28] sm:$0xf] %v597
      %630 = vst [vmem:[%s256 + $0x2c] sm:$0xf] %v598
      %631 = vst [vmem:[%s256 + $0x30] sm:$0xf] %v599
      %632 = vst [vmem:[%s256 + $0x34] sm:$0xf] %v600
      %633 = vst [vmem:[%s256 + $0x38] sm:$0xf] %v601
      %634 = vst [vmem:[%s256 + $0x3c] sm:$0xf] %v602
      %635 = vst [vmem:[%s256 + $0x40] sm:$0xf] %v603
      %636 = vst [vmem:[%s256 + $0x44] sm:$0xf] %v604
      %637 = vst [vmem:[%s256 + $0x48] sm:$0xf] %v605
      %638 = vst [vmem:[%s256 + $0x4c] sm:$0xf] %v606
      %639 = vst [vmem:[%s256 + $0x50] sm:$0xf] %v607
      %640 = vst [vmem:[%s256 + $0x54] sm:$0xf] %v608
      %641 = vst [vmem:[%s256 + $0x58] sm:$0xf] %v609
      %642 = vst [vmem:[%s256 + $0x5c] sm:$0xf] %v610
      %643 = vst [vmem:[%s256 + $0x60] sm:$0xf] %v611
      %644 = vst [vmem:[%s256 + $0x64] sm:$0xf] %v612
      %645 = vst [vmem:[%s256 + $0x68] sm:$0xf] %v613
      %646 = vst [vmem:[%s256 + $0x6c] sm:$0xf] %v614
      %647 = vst [vmem:[%s256 + $0x70] sm:$0xf] %v615
      %648 = vst [vmem:[%s256 + $0x74] sm:$0xf] %v616
      %649 = vst [vmem:[%s256 + $0x78] sm:$0xf] %v617
      %650 = vst [vmem:[%s256 + $0x7c] sm:$0xf] %v618
      %v651 = vld [vmem:[%s3] sm:$0xf]
      %v652 = vld [vmem:[%s3 + $0x4] sm:$0xf]
      %v655 = vunpack.c.l.b16 %v651
      %v656 = vunpack.c.l.b16 %v652
      %v657 = vpack.c.b16 %v656, %v655
      %659 = vmatpush.bf16.msra.mxu0 0
      %660 = vmatpush.bf16.msra.mxu0 0
      %661 = vmatpush.bf16.msra.mxu0 0
      %662 = vmatpush.bf16.msra.mxu0 0
      %663 = vmatpush.bf16.msra.mxu0 0
      %664 = vmatpush.bf16.msra.mxu0 0
      %665 = vmatpush.bf16.msra.mxu0 0
      %666 = vmatpush.bf16.msra.mxu0 %v657
      %667 = vmatmul.bf16.gmra.mxu0 %v451
      %v668 = vpop.f32.mrf.mxu0
      %v669 = vadd.f32 0.0, %v668
      %v670 = vpop.f32.mrf.mxu0
      %v671 = vadd.f32 0.0, %v670
      %672 = vmatmul.bf16.gmra.mxu0 %v454
      %v673 = vpop.f32.mrf.mxu0
      %v674 = vadd.f32 0.0, %v673
      %v675 = vpop.f32.mrf.mxu0
      %v676 = vadd.f32 0.0, %v675
      %677 = vmatmul.bf16.gmra.mxu0 %v457
      %v678 = vpop.f32.mrf.mxu0
      %v679 = vadd.f32 0.0, %v678
      %v680 = vpop.f32.mrf.mxu0
      %v681 = vadd.f32 0.0, %v680
      %682 = vmatmul.bf16.gmra.mxu0 %v460
      %v683 = vpop.f32.mrf.mxu0
      %v684 = vadd.f32 0.0, %v683
      %v685 = vpop.f32.mrf.mxu0
      %v686 = vadd.f32 0.0, %v685
      %687 = vmatmul.bf16.gmra.mxu0 %v463
      %v688 = vpop.f32.mrf.mxu0
      %v689 = vadd.f32 0.0, %v688
      %v690 = vpop.f32.mrf.mxu0
      %v691 = vadd.f32 0.0, %v690
      %692 = vmatmul.bf16.gmra.mxu0 %v466
      %v693 = vpop.f32.mrf.mxu0
      %v694 = vadd.f32 0.0, %v693
      %v695 = vpop.f32.mrf.mxu0
      %v696 = vadd.f32 0.0, %v695
      %697 = vmatmul.bf16.gmra.mxu0 %v469
      %v698 = vpop.f32.mrf.mxu0
      %v699 = vadd.f32 0.0, %v698
      %v700 = vpop.f32.mrf.mxu0
      %v701 = vadd.f32 0.0, %v700
      %702 = vmatmul.bf16.gmra.mxu0 %v472
      %v703 = vpop.f32.mrf.mxu0
      %v704 = vadd.f32 0.0, %v703
      %v705 = vpop.f32.mrf.mxu0
      %v706 = vadd.f32 0.0, %v705
      %707 = vmatmul.bf16.gmra.mxu0 %v475
      %v708 = vpop.f32.mrf.mxu0
      %v709 = vadd.f32 0.0, %v708
      %v710 = vpop.f32.mrf.mxu0
      %v711 = vadd.f32 0.0, %v710
      %712 = vmatmul.bf16.gmra.mxu0 %v478
      %v713 = vpop.f32.mrf.mxu0
      %v714 = vadd.f32 0.0, %v713
      %v715 = vpop.f32.mrf.mxu0
      %v716 = vadd.f32 0.0, %v715
      %717 = vmatmul.bf16.gmra.mxu0 %v481
      %v718 = vpop.f32.mrf.mxu0
      %v719 = vadd.f32 0.0, %v718
      %v720 = vpop.f32.mrf.mxu0
      %v721 = vadd.f32 0.0, %v720
      %722 = vmatmul.bf16.gmra.mxu0 %v484
      %v723 = vpop.f32.mrf.mxu0
      %v724 = vadd.f32 0.0, %v723
      %v725 = vpop.f32.mrf.mxu0
      %v726 = vadd.f32 0.0, %v725
      %727 = vmatmul.bf16.gmra.mxu0 %v487
      %v728 = vpop.f32.mrf.mxu0
      %v729 = vadd.f32 0.0, %v728
      %v730 = vpop.f32.mrf.mxu0
      %v731 = vadd.f32 0.0, %v730
      %732 = vmatmul.bf16.gmra.mxu0 %v490
      %v733 = vpop.f32.mrf.mxu0
      %v734 = vadd.f32 0.0, %v733
      %v735 = vpop.f32.mrf.mxu0
      %v736 = vadd.f32 0.0, %v735
      %737 = vmatmul.bf16.gmra.mxu0 %v493
      %v738 = vpop.f32.mrf.mxu0
      %v739 = vadd.f32 0.0, %v738
      %v740 = vpop.f32.mrf.mxu0
      %v741 = vadd.f32 0.0, %v740
      %742 = vmatmul.bf16.gmra.mxu0 %v496
      %v743 = vpop.f32.mrf.mxu0
      %v744 = vadd.f32 0.0, %v743
      %v745 = vpop.f32.mrf.mxu0
      %v746 = vadd.f32 0.0, %v745
      %747 = vdwg.mxu0
      %v748 = vpack.c.bf16 %v669, %v669
      %v749 = vpack.c.bf16 %v671, %v671
      %v750 = vpack.c.bf16 %v674, %v674
      %v751 = vpack.c.bf16 %v676, %v676
      %v752 = vpack.c.bf16 %v679, %v679
      %v753 = vpack.c.bf16 %v681, %v681
      %v754 = vpack.c.bf16 %v684, %v684
      %v755 = vpack.c.bf16 %v686, %v686
      %v756 = vpack.c.bf16 %v689, %v689
      %v757 = vpack.c.bf16 %v691, %v691
      %v758 = vpack.c.bf16 %v694, %v694
      %v759 = vpack.c.bf16 %v696, %v696
      %v760 = vpack.c.bf16 %v699, %v699
      %v761 = vpack.c.bf16 %v701, %v701
      %v762 = vpack.c.bf16 %v704, %v704
      %v763 = vpack.c.bf16 %v706, %v706
      %v764 = vpack.c.bf16 %v709, %v709
      %v765 = vpack.c.bf16 %v711, %v711
      %v766 = vpack.c.bf16 %v714, %v714
      %v767 = vpack.c.bf16 %v716, %v716
      %v768 = vpack.c.bf16 %v719, %v719
      %v769 = vpack.c.bf16 %v721, %v721
      %v770 = vpack.c.bf16 %v724, %v724
      %v771 = vpack.c.bf16 %v726, %v726
      %v772 = vpack.c.bf16 %v729, %v729
      %v773 = vpack.c.bf16 %v731, %v731
      %v774 = vpack.c.bf16 %v734, %v734
      %v775 = vpack.c.bf16 %v736, %v736
      %v776 = vpack.c.bf16 %v739, %v739
      %v777 = vpack.c.bf16 %v741, %v741
      %v778 = vpack.c.bf16 %v744, %v744
      %v779 = vpack.c.bf16 %v746, %v746
      %780 = vst [vmem:[%s262] sm:$0xf] %v748
      %781 = vst [vmem:[%s262 + $0x4] sm:$0xf] %v749
      %782 = vst [vmem:[%s262 + $0x8] sm:$0xf] %v750
      %783 = vst [vmem:[%s262 + $0xc] sm:$0xf] %v751
      %784 = vst [vmem:[%s262 + $0x10] sm:$0xf] %v752
      %785 = vst [vmem:[%s262 + $0x14] sm:$0xf] %v753
      %786 = vst [vmem:[%s262 + $0x18] sm:$0xf] %v754
      %787 = vst [vmem:[%s262 + $0x1c] sm:$0xf] %v755
      %788 = vst [vmem:[%s262 + $0x20] sm:$0xf] %v756
      %789 = vst [vmem:[%s262 + $0x24] sm:$0xf] %v757
      %790 = vst [vmem:[%s262 + $0x28] sm:$0xf] %v758
      %791 = vst [vmem:[%s262 + $0x2c] sm:$0xf] %v759
      %792 = vst [vmem:[%s262 + $0x30] sm:$0xf] %v760
      %793 = vst [vmem:[%s262 + $0x34] sm:$0xf] %v761
      %794 = vst [vmem:[%s262 + $0x38] sm:$0xf] %v762
      %795 = vst [vmem:[%s262 + $0x3c] sm:$0xf] %v763
      %796 = vst [vmem:[%s262 + $0x40] sm:$0xf] %v764
      %797 = vst [vmem:[%s262 + $0x44] sm:$0xf] %v765
      %798 = vst [vmem:[%s262 + $0x48] sm:$0xf] %v766
      %799 = vst [vmem:[%s262 + $0x4c] sm:$0xf] %v767
      %800 = vst [vmem:[%s262 + $0x50] sm:$0xf] %v768
      %801 = vst [vmem:[%s262 + $0x54] sm:$0xf] %v769
      %802 = vst [vmem:[%s262 + $0x58] sm:$0xf] %v770
      %803 = vst [vmem:[%s262 + $0x5c] sm:$0xf] %v771
      %804 = vst [vmem:[%s262 + $0x60] sm:$0xf] %v772
      %805 = vst [vmem:[%s262 + $0x64] sm:$0xf] %v773
      %806 = vst [vmem:[%s262 + $0x68] sm:$0xf] %v774
      %807 = vst [vmem:[%s262 + $0x6c] sm:$0xf] %v775
      %808 = vst [vmem:[%s262 + $0x70] sm:$0xf] %v776
      %809 = vst [vmem:[%s262 + $0x74] sm:$0xf] %v777
      %810 = vst [vmem:[%s262 + $0x78] sm:$0xf] %v778
      %811 = vst [vmem:[%s262 + $0x7c] sm:$0xf] %v779
      %s812 = smul.u32 32, %s17
      %p813 = scmp.lt.s32.totalorder %s812, 63
      %s814 = scalar_select %p813, %s812, 63
      %s815 = smul.addr %s814, 4
      %s816 = scalar_lea.vmem %s4, %s815
      %s817 = smul.u32 32, %s17
      %p818 = scmp.lt.s32.totalorder %s817, 63
      %s819 = scalar_select %p818, %s817, 63
      %s820 = smul.addr %s819, 4
      %s821 = scalar_lea.vmem %s5, %s820
      // Predicated region
      $region37: #{forward.3} parent=35 // pred_check
        %p822 = pneg %p129
      $region38: #{forward.3} parent=35 // pred_check_branch
        %824 = sbr.rel (%p822) target = $region40
      $region39: #{forward.3} parent=35 // pred_region
        %s825 = smul.u32 32, %s17
      $region40: #{forward.3} parent=35 // pred_fallthru
        _
      // Predicated region
      $region41: #{forward.3} parent=35 // pred_check
        %p826 = pneg %p155
      $region42: #{forward.3} parent=35 // pred_check_branch
        %828 = sbr.rel (%p826) target = $region44
      $region43: #{forward.3} parent=35 // pred_region
        %s829 = smul.u32 32, %s17
      $region44: #{forward.3} parent=35 // pred_fallthru
        _
    $region36: #{forward.3} parent=5 // pred_fallthru
      _
    %p830 = scmp.le.s32.totalorder 2, %s12
    // Predicated region
    $region45: #{forward.3} parent=5 // pred_check
      %p831 = pneg %p830
    $region46: #{forward.3} parent=5 // pred_check_branch
      %833 = sbr.rel (%p831) target = $region48
    $region47: #{forward.3} parent=5 // pred_region
      %s834 = ssub.s32 %s12, 2
      // Predicated region
      $region49: #{forward.3} parent=47 // pred_check
        %p835 = pneg %p135
      $region50: #{forward.3} parent=47 // pred_check_branch
        %837 = sbr.rel (%p835) target = $region52
      $region51: #{forward.3} parent=47 // pred_region
        %s838 = smul.u32 32, %s18
        %p839 = scmp.lt.s32.totalorder %s838, 63
        %s840 = scalar_select %p839, %s838, 63
        %s841 = smul.addr %s840, 4
        %s842 = scalar_lea.vmem %s4, %s841
      $region52: #{forward.3} parent=47 // pred_fallthru
        _
      // Predicated region
      $region53: #{forward.3} parent=47 // pred_check
        %p843 = pneg %p161
      $region54: #{forward.3} parent=47 // pred_check_branch
        %845 = sbr.rel (%p843) target = $region56
      $region55: #{forward.3} parent=47 // pred_region
        %s846 = smul.u32 32, %s18
        %p847 = scmp.lt.s32.totalorder %s846, 63
        %s848 = scalar_select %p847, %s846, 63
        %s849 = smul.addr %s848, 4
        %s850 = scalar_lea.vmem %s5, %s849
      $region56: #{forward.3} parent=47 // pred_fallthru
        _
    $region48: #{forward.3} parent=5 // pred_fallthru
      _
  $region6: #{forward.3} parent=0 // loop_footer
    %s16 = sadd.s32 1, %s12
  $region7: #{forward.3} parent=0 // loop_footer_branch
    %11 = sbr.rel target = $region3
  $region8: #{forward.3} parent=0 // loop_exit
    _

// kernel: forward.4
$region0: #{forward.4}
  #allocation0 [shape = 'u32[]', space=smem, size = 0x4, offset = 0x4, fixed_abs, tag = 'smem constant byte address 0x4 - core index']
  #allocation1 [shape = 'u32[72,128]{1,0:T(1,128)}', space=vmem, size = 0x9000, scoped, tag = 'internal scratch']
  #allocation2 [shape = 'f32[256,128]{1,0:T(8,128)}', space=vmem, size = 0x20000, scoped, tag = 'scratch operand']
  %s0 = inlined_call_operand.hbm [shape: bf16[512,512], index: 0, kind: input, shape index: {}]
  %s1 = inlined_call_operand.vmem [shape: bf16[512,128], index: 1, kind: input, shape index: {}]
  %s2 = inlined_call_operand.vmem [shape: f32[1,128], index: 2, kind: input, shape index: {}]
  %s3 = inlined_call_operand.vmem [shape: bf16[128,128], index: 3, kind: input, shape index: {}]
  %s4 = inlined_call_operand.vmem [shape: bf16[512,128], index: 4, kind: output, shape index: {}]
  %s5 = sld [smem:[#allocation0]]
  $region61: #{forward.4} parent=0
    _
  %s7 = ssub.s32 1, %s5
  %s8 = scalar_select 0, %s7, %s5
  $region1: #{forward.4} parent=0
    #allocation3 [shape = 'u8[524288]{0}', space=vmem, size = 0x80000, scoped, tag = 'input window, operand 0']
    #allocation4 [shape = 's32[2]{0}', space=sflag, size = 0x8, scoped, tag = 'scoped memory for forward.4']
    %9 = vsyncpa [#allocation4], 0
    %s10 = scalar_lea.sflag [#allocation4], 1
    %11 = vsyncpa %s10, 0
    loop: start=0, step=1, limit=4
    $region2: #{forward.4} parent=1 // loop_pre_header
      _
    $region3: #{forward.4} parent=1 // loop_header
      %s13 = sphi 0, %s17
      %p14 = scmp.ge.s32.totalorder %s13, 4
      %s20 = sphi 0, %s32
      %s21 = sphi 0, %s28
      %s22 = sphi 0, %s20
      %s23 = sphi 0, %s21
      %s24 = sphi 0, %s22
      %s25 = sphi 0, %s23
      %s37 = sphi 0, %s39
      %s40 = sphi 0, %s37
      %s41 = sphi 0, %s40
      %s57 = sphi 0, %s41
      %s61 = sphi 0, %s61
      %s63 = sphi 0, %s61
      %s64 = sphi 0, %s63
      %s78 = sphi 0, %s64
      %s82 = sphi 0, %s82
      %s84 = sphi 0, %s82
      %s85 = sphi 0, %s84
      %s99 = sphi 0, %s85
      %s103 = sphi 0, %s103
      %s105 = sphi 0, %s103
      %s106 = sphi 0, %s105
      %s120 = sphi 0, %s106
      %s126 = sphi 0, %s128
      %s129 = sphi 0, %s126
      %s130 = sphi 0, %s129
      %s146 = sphi 0, %s130
    $region4: #{forward.4} parent=1 // loop_header_branch
      %16 = sbr.rel (%p14) target = $region8
    $region5: #{forward.4} parent=1 // loop_body
      %s18 = ssub.s32 %s13, 1
      %s19 = ssub.s32 %s13, 2
      %s26 = sadd.s32 1, %s21
      %p27 = scmp.ge.s32.totalorder %s26, 1
      %s28 = scalar_select %p27, 0, %s26
      %s29 = sadd.s32 1, %s20
      %s30 = scalar_select %p27, %s29, %s20
      %p31 = scmp.ge.s32.totalorder %s30, 2
      %s32 = scalar_select %p31, 0, %s30
      %s33 = ssub.s32 %s20, %s32
      %s34 = ssub.s32 %s21, %s28
      %s35 = sor.u32 %s33, %s34
      %p36 = scmp.eq.s32.totalorder %s35, 0
      %s38 = sadd.s32 %s37, 1
      %s39 = scalar_select %p36, %s37, %s38
      %p42 = pneg %p36
      %p43 = scmp.eq.s32.totalorder %s13, 1
      %p44 = por %p42, %p43
      %p45 = scmp.ne.s32.totalorder %s37, %s40
      %p46 = scmp.eq.s32.totalorder %s13, 0
      %p47 = por %p45, %p46
      %p48 = scmp.ne.s32.totalorder %s37, %s40
      %p49 = scmp.eq.s32.totalorder %s18, 1
      %p50 = por %p48, %p49
      %p51 = scmp.ne.s32.totalorder %s40, %s41
      %p52 = scmp.eq.s32.totalorder %s18, 0
      %p53 = por %p51, %p52
      %p54 = scmp.ne.s32.totalorder %s40, %s41
      %p55 = scmp.eq.s32.totalorder %s19, 1
      %p56 = por %p54, %p55
      %p58 = scmp.ne.s32.totalorder %s41, %s57
      %p59 = scmp.eq.s32.totalorder %s19, 0
      %p60 = por %p58, %p59
      %s62 = sadd.s32 %s61, 1
      %p65 = scmp.eq.s32.totalorder %s13, 1
      %p66 = scmp.ne.s32.totalorder %s61, %s63
      %p67 = scmp.eq.s32.totalorder %s13, 0
      %p68 = por %p66, %p67
      %p69 = scmp.ne.s32.totalorder %s61, %s63
      %p70 = scmp.eq.s32.totalorder %s18, 1
      %p71 = por %p69, %p70
      %p72 = scmp.ne.s32.totalorder %s63, %s64
      %p73 = scmp.eq.s32.totalorder %s18, 0
      %p74 = por %p72, %p73
      %p75 = scmp.ne.s32.totalorder %s63, %s64
      %p76 = scmp.eq.s32.totalorder %s19, 1
      %p77 = por %p75, %p76
      %p79 = scmp.ne.s32.totalorder %s64, %s78
      %p80 = scmp.eq.s32.totalorder %s19, 0
      %p81 = por %p79, %p80
      %s83 = sadd.s32 %s82, 1
      %p86 = scmp.eq.s32.totalorder %s13, 1
      %p87 = scmp.ne.s32.totalorder %s82, %s84
      %p88 = scmp.eq.s32.totalorder %s13, 0
      %p89 = por %p87, %p88
      %p90 = scmp.ne.s32.totalorder %s82, %s84
      %p91 = scmp.eq.s32.totalorder %s18, 1
      %p92 = por %p90, %p91
      %p93 = scmp.ne.s32.totalorder %s84, %s85
      %p94 = scmp.eq.s32.totalorder %s18, 0
      %p95 = por %p93, %p94
      %p96 = scmp.ne.s32.totalorder %s84, %s85
      %p97 = scmp.eq.s32.totalorder %s19, 1
      %p98 = por %p96, %p97
      %p100 = scmp.ne.s32.totalorder %s85, %s99
      %p101 = scmp.eq.s32.totalorder %s19, 0
      %p102 = por %p100, %p101
      %s104 = sadd.s32 %s103, 1
      %p107 = scmp.eq.s32.totalorder %s13, 1
      %p108 = scmp.ne.s32.totalorder %s103, %s105
      %p109 = scmp.eq.s32.totalorder %s13, 0
      %p110 = por %p108, %p109
      %p111 = scmp.ne.s32.totalorder %s103, %s105
      %p112 = scmp.eq.s32.totalorder %s18, 1
      %p113 = por %p111, %p112
      %p114 = scmp.ne.s32.totalorder %s105, %s106
      %p115 = scmp.eq.s32.totalorder %s18, 0
      %p116 = por %p114, %p115
      %p117 = scmp.ne.s32.totalorder %s105, %s106
      %p118 = scmp.eq.s32.totalorder %s19, 1
      %p119 = por %p117, %p118
      %p121 = scmp.ne.s32.totalorder %s106, %s120
      %p122 = scmp.eq.s32.totalorder %s19, 0
      %p123 = por %p121, %p122
      %s124 = ssub.s32 %s20, %s32
      %p125 = scmp.eq.s32.totalorder %s124, 0
      %s127 = sadd.s32 %s126, 1
      %s128 = scalar_select %p125, %s126, %s127
      %p131 = pneg %p125
      %p132 = scmp.eq.s32.totalorder %s13, 1
      %p133 = por %p131, %p132
      %p134 = scmp.ne.s32.totalorder %s126, %s129
      %p135 = scmp.eq.s32.totalorder %s13, 0
      %p136 = por %p134, %p135
      %p137 = scmp.ne.s32.totalorder %s126, %s129
      %p138 = scmp.eq.s32.totalorder %s18, 1
      %p139 = por %p137, %p138
      %p140 = scmp.ne.s32.totalorder %s129, %s130
      %p141 = scmp.eq.s32.totalorder %s18, 0
      %p142 = por %p140, %p141
      %p143 = scmp.ne.s32.totalorder %s129, %s130
      %p144 = scmp.eq.s32.totalorder %s19, 1
      %p145 = por %p143, %p144
      %p147 = scmp.ne.s32.totalorder %s130, %s146
      %p148 = scmp.eq.s32.totalorder %s19, 0
      %p149 = por %p147, %p148
      %p150 = scmp.le.s32.totalorder 1, %s13
      %p151 = scmp.lt.s32.totalorder %s13, 3
      %p152 = pnand %p150, %p151
      %p153 = pneg %p152
      // Predicated region
      $region9: #{forward.4} parent=5 // pred_check
        _
      $region10: #{forward.4} parent=5 // pred_check_branch
        %155 = sbr.rel (%p152) target = $region12
      $region11: #{forward.4} parent=5 // pred_region
        %s156 = ssub.s32 %s13, 1
        // Predicated region
        $region13: #{forward.4} parent=11 // pred_check
          %p157 = pneg %p74
        $region14: #{forward.4} parent=11 // pred_check_branch
          %159 = sbr.rel (%p157) target = $region16
        $region15: #{forward.4} parent=11 // pred_region
          _
        $region16: #{forward.4} parent=11 // pred_fallthru
          _
        // Predicated region
        $region17: #{forward.4} parent=11 // pred_check
          %p160 = pneg %p95
        $region18: #{forward.4} parent=11 // pred_check_branch
          %162 = sbr.rel (%p160) target = $region20
        $region19: #{forward.4} parent=11 // pred_region
          _
        $region20: #{forward.4} parent=11 // pred_fallthru
          _
        // Predicated region
        $region21: #{forward.4} parent=11 // pred_check
          %p163 = pneg %p116
        $region22: #{forward.4} parent=11 // pred_check_branch
          %165 = sbr.rel (%p163) target = $region24
        $region23: #{forward.4} parent=11 // pred_region
          _
        $region24: #{forward.4} parent=11 // pred_fallthru
          _
      $region12: #{forward.4} parent=5 // pred_fallthru
        _
      %p166 = scmp.lt.s32.totalorder %s13, 2
      // Predicated region
      $region25: #{forward.4} parent=5 // pred_check
        %p167 = pneg %p166
      $region26: #{forward.4} parent=5 // pred_check_branch
        %169 = sbr.rel (%p167) target = $region28
      $region27: #{forward.4} parent=5 // pred_region
        // Predicated region
        $region29: #{forward.4} parent=27 // pred_check
          %p170 = pneg %p47
        $region30: #{forward.4} parent=27 // pred_check_branch
          %172 = sbr.rel (%p170) target = $region32
        $region31: #{forward.4} parent=27 // pred_region
          %s173 = sand.u32 %s37, 1
          %s174 = scalar_lea.sflag [#allocation4], %s173
          %s175 = sand.u32 %s37, 1
          %s176 = smul.addr %s175, 512
          %s177 = scalar_lea.vmem [#allocation3], %s176
          %s178 = smul.u32 32, %s20
          %s179 = smul.u32 4, %s21
          %181 = vsyncadd %s174, 0
          %s182 = smul.addr %s178, 4
          %s183 = sadd.s32 %s179, %s182
          %s184 = smul.addr %s183, 4
          %s185 = scalar_lea.hbm %s0, %s184
          %s186 = sshll.u32 %s185, 4
          %s187 = int_to_ptr.hbm [resolvable:$true] %s186
          %s188 = sshll.u32 %s177, 4
          %s189 = int_to_ptr.vmem [resolvable:$true] %s188
          %194 = dma.hbm_to_vmem [thread:$0]  %s187, 8192, %s189, %s174, 256, 256, 16
        $region32: #{forward.4} parent=27 // pred_fallthru
          _
      $region28: #{forward.4} parent=5 // pred_fallthru
        _
      %p195 = scmp.le.s32.totalorder 1, %s13
      %p196 = scmp.lt.s32.totalorder %s13, 3
      %p197 = pnand %p195, %p196
      %p198 = pneg %p197
      // Predicated region
      $region33: #{forward.4} parent=5 // pred_check
        _
      $region34: #{forward.4} parent=5 // pred_check_branch
        %200 = sbr.rel (%p197) target = $region36
      $region35: #{forward.4} parent=5 // pred_region
        %s201 = ssub.s32 %s13, 1
        %s202 = sand.u32 %s40, 1
        %s203 = scalar_lea.sflag [#allocation4], %s202
        %s204 = sand.u32 %s40, 1
        %s205 = smul.addr %s204, 512
        %s206 = scalar_lea.vmem [#allocation3], %s205
        // Predicated region
        $region37: #{forward.4} parent=35 // pred_check
          %p207 = pneg %p53
        $region38: #{forward.4} parent=35 // pred_check_branch
          %209 = sbr.rel (%p207) target = $region40
        $region39: #{forward.4} parent=35 // pred_region
          %211 = dma.done %s203, 8192
        $region40: #{forward.4} parent=35 // pred_fallthru
          _
        %s212 = sand.u32 %s40, 1
        %s213 = scalar_lea.sflag [#allocation4], %s212
        %s214 = sand.u32 %s40, 1
        %s215 = smul.addr %s214, 512
        %s216 = scalar_lea.vmem [#allocation3], %s215
        %p217 = pneg %p53
        %p218 = pneg %p50
        %p219 = pneg %p74
        %p220 = pneg %p71
        %p221 = pneg %p95
        %p222 = pneg %p92
        %p223 = pneg %p116
        %p224 = pneg %p113
        %p225 = pneg %p142
        %p226 = pneg %p139
        %s227 = smul.u32 32, %s22
        %p228 = scmp.lt.s32.totalorder %s227, 63
        %s229 = scalar_select %p228, %s227, 63
        %s230 = smul.addr %s229, 4
        %s231 = scalar_lea.vmem %s4, %s230
        %s232 = smul.u32 32, %s22
        %s233 = smul.u32 4, %s23
        %s234 = smul.u32 32, %s22
        %p235 = scmp.lt.s32.totalorder %s234, 63
        %s236 = scalar_select %p235, %s234, 63
        %s237 = smul.addr %s236, 4
        %s238 = scalar_lea.vmem %s4, %s237
        %s239 = smul.u32 32, %s22
        %p240 = scmp.eq.s32.totalorder %s23, 0
        // Predicated region
        $region41: #{forward.4} parent=35 // pred_check
          %p241 = pneg %p240
        $region42: #{forward.4} parent=35 // pred_check_branch
          %243 = sbr.rel (%p241) target = $region44
        $region43: #{forward.4} parent=35 // pred_region
          %244 = vst [vmem:[#allocation2] sm:$0xff] 0.0
          %245 = vst [vmem:[#allocation2 + $0x8] sm:$0xff] 0.0
          %246 = vst [vmem:[#allocation2 + $0x10] sm:$0xff] 0.0
          %247 = vst [vmem:[#allocation2 + $0x18] sm:$0xff] 0.0
          %248 = vst [vmem:[#allocation2 + $0x20] sm:$0xff] 0.0
          %249 = vst [vmem:[#allocation2 + $0x28] sm:$0xff] 0.0
          %250 = vst [vmem:[#allocation2 + $0x30] sm:$0xff] 0.0
          %251 = vst [vmem:[#allocation2 + $0x38] sm:$0xff] 0.0
          %252 = vst [vmem:[#allocation2 + $0x40] sm:$0xff] 0.0
          %253 = vst [vmem:[#allocation2 + $0x48] sm:$0xff] 0.0
          %254 = vst [vmem:[#allocation2 + $0x50] sm:$0xff] 0.0
          %255 = vst [vmem:[#allocation2 + $0x58] sm:$0xff] 0.0
          %256 = vst [vmem:[#allocation2 + $0x60] sm:$0xff] 0.0
          %257 = vst [vmem:[#allocation2 + $0x68] sm:$0xff] 0.0
          %258 = vst [vmem:[#allocation2 + $0x70] sm:$0xff] 0.0
          %259 = vst [vmem:[#allocation2 + $0x78] sm:$0xff] 0.0
          %260 = vst [vmem:[#allocation2 + $0x80] sm:$0xff] 0.0
          %261 = vst [vmem:[#allocation2 + $0x88] sm:$0xff] 0.0
          %262 = vst [vmem:[#allocation2 + $0x90] sm:$0xff] 0.0
          %263 = vst [vmem:[#allocation2 + $0x98] sm:$0xff] 0.0
          %264 = vst [vmem:[#allocation2 + $0xa0] sm:$0xff] 0.0
          %265 = vst [vmem:[#allocation2 + $0xa8] sm:$0xff] 0.0
          %266 = vst [vmem:[#allocation2 + $0xb0] sm:$0xff] 0.0
          %267 = vst [vmem:[#allocation2 + $0xb8] sm:$0xff] 0.0
          %268 = vst [vmem:[#allocation2 + $0xc0] sm:$0xff] 0.0
          %269 = vst [vmem:[#allocation2 + $0xc8] sm:$0xff] 0.0
          %270 = vst [vmem:[#allocation2 + $0xd0] sm:$0xff] 0.0
          %271 = vst [vmem:[#allocation2 + $0xd8] sm:$0xff] 0.0
          %272 = vst [vmem:[#allocation2 + $0xe0] sm:$0xff] 0.0
          %273 = vst [vmem:[#allocation2 + $0xe8] sm:$0xff] 0.0
          %274 = vst [vmem:[#allocation2 + $0xf0] sm:$0xff] 0.0
          %275 = vst [vmem:[#allocation2 + $0xf8] sm:$0xff] 0.0
        $region44: #{forward.4} parent=35 // pred_fallthru
          _
        %s276 = smul.u32 %s23, 512
        %s277 = sshra.s32 %s276, 3
        %s278 = sand.u32 %s276, 7
        %s279 = smul.addr %s277, 4
        %s280 = scalar_lea.vmem %s1, %s279
        %v281 = vld [vmem:[%s280] sm:$0xf]
        %v282 = vld [vmem:[%s280 + $0x4] sm:$0xf]
        %v283 = vld [vmem:[%s280 + $0x8] sm:$0xf]
        %v284 = vld [vmem:[%s280 + $0xc] sm:$0xf]
        %v285 = vld [vmem:[%s280 + $0x10] sm:$0xf]
        %v286 = vld [vmem:[%s280 + $0x14] sm:$0xf]
        %v287 = vld [vmem:[%s280 + $0x18] sm:$0xf]
        %v288 = vld [vmem:[%s280 + $0x1c] sm:$0xf]
        %v289 = vld [vmem:[%s280 + $0x20] sm:$0xf]
        %v290 = vld [vmem:[%s280 + $0x24] sm:$0xf]
        %v291 = vld [vmem:[%s280 + $0x28] sm:$0xf]
        %v292 = vld [vmem:[%s280 + $0x2c] sm:$0xf]
        %v293 = vld [vmem:[%s280 + $0x30] sm:$0xf]
        %v294 = vld [vmem:[%s280 + $0x34] sm:$0xf]
        %v295 = vld [vmem:[%s280 + $0x38] sm:$0xf]
        %v296 = vld [vmem:[%s280 + $0x3c] sm:$0xf]
        %v297 = vld [vmem:[%s280 + $0x40] sm:$0xf]
        %v298 = vld [vmem:[%s280 + $0x44] sm:$0xf]
        %v299 = vld [vmem:[%s280 + $0x48] sm:$0xf]
        %v300 = vld [vmem:[%s280 + $0x4c] sm:$0xf]
        %v301 = vld [vmem:[%s280 + $0x50] sm:$0xf]
        %v302 = vld [vmem:[%s280 + $0x54] sm:$0xf]
        %v303 = vld [vmem:[%s280 + $0x58] sm:$0xf]
        %v304 = vld [vmem:[%s280 + $0x5c] sm:$0xf]
        %v305 = vld [vmem:[%s280 + $0x60] sm:$0xf]
        %v306 = vld [vmem:[%s280 + $0x64] sm:$0xf]
        %v307 = vld [vmem:[%s280 + $0x68] sm:$0xf]
        %v308 = vld [vmem:[%s280 + $0x6c] sm:$0xf]
        %v309 = vld [vmem:[%s280 + $0x70] sm:$0xf]
        %v310 = vld [vmem:[%s280 + $0x74] sm:$0xf]
        %v311 = vld [vmem:[%s280 + $0x78] sm:$0xf]
        %v312 = vld [vmem:[%s280 + $0x7c] sm:$0xf]
        %v313 = vld [vmem:[%s280 + $0x80] sm:$0xf]
        %v314 = vld [vmem:[%s280 + $0x84] sm:$0xf]
        %v315 = vld [vmem:[%s280 + $0x88] sm:$0xf]
        %v316 = vld [vmem:[%s280 + $0x8c] sm:$0xf]
        %v317 = vld [vmem:[%s280 + $0x90] sm:$0xf]
        %v318 = vld [vmem:[%s280 + $0x94] sm:$0xf]
        %v319 = vld [vmem:[%s280 + $0x98] sm:$0xf]
        %v320 = vld [vmem:[%s280 + $0x9c] sm:$0xf]
        %v321 = vld [vmem:[%s280 + $0xa0] sm:$0xf]
        %v322 = vld [vmem:[%s280 + $0xa4] sm:$0xf]
        %v323 = vld [vmem:[%s280 + $0xa8] sm:$0xf]
        %v324 = vld [vmem:[%s280 + $0xac] sm:$0xf]
        %v325 = vld [vmem:[%s280 + $0xb0] sm:$0xf]
        %v326 = vld [vmem:[%s280 + $0xb4] sm:$0xf]
        %v327 = vld [vmem:[%s280 + $0xb8] sm:$0xf]
        %v328 = vld [vmem:[%s280 + $0xbc] sm:$0xf]
        %v329 = vld [vmem:[%s280 + $0xc0] sm:$0xf]
        %v330 = vld [vmem:[%s280 + $0xc4] sm:$0xf]
        %v331 = vld [vmem:[%s280 + $0xc8] sm:$0xf]
        %v332 = vld [vmem:[%s280 + $0xcc] sm:$0xf]
        %v333 = vld [vmem:[%s280 + $0xd0] sm:$0xf]
        %v334 = vld [vmem:[%s280 + $0xd4] sm:$0xf]
        %v335 = vld [vmem:[%s280 + $0xd8] sm:$0xf]
        %v336 = vld [vmem:[%s280 + $0xdc] sm:$0xf]
        %v337 = vld [vmem:[%s280 + $0xe0] sm:$0xf]
        %v338 = vld [vmem:[%s280 + $0xe4] sm:$0xf]
        %v339 = vld [vmem:[%s280 + $0xe8] sm:$0xf]
        %v340 = vld [vmem:[%s280 + $0xec] sm:$0xf]
        %v341 = vld [vmem:[%s280 + $0xf0] sm:$0xf]
        %v342 = vld [vmem:[%s280 + $0xf4] sm:$0xf]
        %v343 = vld [vmem:[%s280 + $0xf8] sm:$0xf]
        %v344 = vld [vmem:[%s280 + $0xfc] sm:$0xf]
        %v345 = vld [vmem:[#allocation2] sm:$0xff]
        %v346 = vld [vmem:[#allocation2 + $0x8] sm:$0xff]
        %v347 = vld [vmem:[#allocation2 + $0x10] sm:$0xff]
        %v348 = vld [vmem:[#allocation2 + $0x18] sm:$0xff]
        %v349 = vld [vmem:[#allocation2 + $0x20] sm:$0xff]
        %v350 = vld [vmem:[#allocation2 + $0x28] sm:$0xff]
        %v351 = vld [vmem:[#allocation2 + $0x30] sm:$0xff]
        %v352 = vld [vmem:[#allocation2 + $0x38] sm:$0xff]
        %v353 = vld [vmem:[#allocation2 + $0x40] sm:$0xff]
        %v354 = vld [vmem:[#allocation2 + $0x48] sm:$0xff]
        %v355 = vld [vmem:[#allocation2 + $0x50] sm:$0xff]
        %v356 = vld [vmem:[#allocation2 + $0x58] sm:$0xff]
        %v357 = vld [vmem:[#allocation2 + $0x60] sm:$0xff]
        %v358 = vld [vmem:[#allocation2 + $0x68] sm:$0xff]
        %v359 = vld [vmem:[#allocation2 + $0x70] sm:$0xff]
        %v360 = vld [vmem:[#allocation2 + $0x78] sm:$0xff]
        %v361 = vld [vmem:[#allocation2 + $0x80] sm:$0xff]
        %v362 = vld [vmem:[#allocation2 + $0x88] sm:$0xff]
        %v363 = vld [vmem:[#allocation2 + $0x90] sm:$0xff]
        %v364 = vld [vmem:[#allocation2 + $0x98] sm:$0xff]
        %v365 = vld [vmem:[#allocation2 + $0xa0] sm:$0xff]
        %v366 = vld [vmem:[#allocation2 + $0xa8] sm:$0xff]
        %v367 = vld [vmem:[#allocation2 + $0xb0] sm:$0xff]
        %v368 = vld [vmem:[#allocation2 + $0xb8] sm:$0xff]
        %v369 = vld [vmem:[#allocation2 + $0xc0] sm:$0xff]
        %v370 = vld [vmem:[#allocation2 + $0xc8] sm:$0xff]
        %v371 = vld [vmem:[#allocation2 + $0xd0] sm:$0xff]
        %v372 = vld [vmem:[#allocation2 + $0xd8] sm:$0xff]
        %v373 = vld [vmem:[#allocation2 + $0xe0] sm:$0xff]
        %v374 = vld [vmem:[#allocation2 + $0xe8] sm:$0xff]
        %v375 = vld [vmem:[#allocation2 + $0xf0] sm:$0xff]
        %v376 = vld [vmem:[#allocation2 + $0xf8] sm:$0xff]
        %v377 = vld [vmem:[%s206] sm:$0xff]
        %v378 = vld [vmem:[%s206 + $0x8] sm:$0xff]
        %v379 = vld [vmem:[%s206 + $0x10] sm:$0xff]
        %v380 = vld [vmem:[%s206 + $0x18] sm:$0xff]
        %v381 = vld [vmem:[%s206 + $0x20] sm:$0xff]
        %v382 = vld [vmem:[%s206 + $0x28] sm:$0xff]
        %v383 = vld [vmem:[%s206 + $0x30] sm:$0xff]
        %v384 = vld [vmem:[%s206 + $0x38] sm:$0xff]
        %v385 = vld [vmem:[%s206 + $0x40] sm:$0xff]
        %v386 = vld [vmem:[%s206 + $0x48] sm:$0xff]
        %v387 = vld [vmem:[%s206 + $0x50] sm:$0xff]
        %v388 = vld [vmem:[%s206 + $0x58] sm:$0xff]
        %v389 = vld [vmem:[%s206 + $0x60] sm:$0xff]
        %v390 = vld [vmem:[%s206 + $0x68] sm:$0xff]
        %v391 = vld [vmem:[%s206 + $0x70] sm:$0xff]
        %v392 = vld [vmem:[%s206 + $0x78] sm:$0xff]
        %v393 = vld [vmem:[%s206 + $0x80] sm:$0xff]
        %v394 = vld [vmem:[%s206 + $0x88] sm:$0xff]
        %v395 = vld [vmem:[%s206 + $0x90] sm:$0xff]
        %v396 = vld [vmem:[%s206 + $0x98] sm:$0xff]
        %v397 = vld [vmem:[%s206 + $0xa0] sm:$0xff]
        %v398 = vld [vmem:[%s206 + $0xa8] sm:$0xff]
        %v399 = vld [vmem:[%s206 + $0xb0] sm:$0xff]
        %v400 = vld [vmem:[%s206 + $0xb8] sm:$0xff]
        %v401 = vld [vmem:[%s206 + $0xc0] sm:$0xff]
        %v402 = vld [vmem:[%s206 + $0xc8] sm:$0xff]
        %v403 = vld [vmem:[%s206 + $0xd0] sm:$0xff]
        %v404 = vld [vmem:[%s206 + $0xd8] sm:$0xff]
        %v405 = vld [vmem:[%s206 + $0xe0] sm:$0xff]
        %v406 = vld [vmem:[%s206 + $0xe8] sm:$0xff]
        %v407 = vld [vmem:[%s206 + $0xf0] sm:$0xff]
        %v408 = vld [vmem:[%s206 + $0xf8] sm:$0xff]
        %v409 = vld [vmem:[%s206 + $0x100] sm:$0xff]
        %v410 = vld [vmem:[%s206 + $0x108] sm:$0xff]
        %v411 = vld [vmem:[%s206 + $0x110] sm:$0xff]
        %v412 = vld [vmem:[%s206 + $0x118] sm:$0xff]
        %v413 = vld [vmem:[%s206 + $0x120] sm:$0xff]
        %v414 = vld [vmem:[%s206 + $0x128] sm:$0xff]
        %v415 = vld [vmem:[%s206 + $0x130] sm:$0xff]
        %v416 = vld [vmem:[%s206 + $0x138] sm:$0xff]
        %v417 = vld [vmem:[%s206 + $0x140] sm:$0xff]
        %v418 = vld [vmem:[%s206 + $0x148] sm:$0xff]
        %v419 = vld [vmem:[%s206 + $0x150] sm:$0xff]
        %v420 = vld [vmem:[%s206 + $0x158] sm:$0xff]
        %v421 = vld [vmem:[%s206 + $0x160] sm:$0xff]
        %v422 = vld [vmem:[%s206 + $0x168] sm:$0xff]
        %v423 = vld [vmem:[%s206 + $0x170] sm:$0xff]
        %v424 = vld [vmem:[%s206 + $0x178] sm:$0xff]
        %v425 = vld [vmem:[%s206 + $0x180] sm:$0xff]
        %v426 = vld [vmem:[%s206 + $0x188] sm:$0xff]
        %v427 = vld [vmem:[%s206 + $0x190] sm:$0xff]
        %v428 = vld [vmem:[%s206 + $0x198] sm:$0xff]
        %v429 = vld [vmem:[%s206 + $0x1a0] sm:$0xff]
        %v430 = vld [vmem:[%s206 + $0x1a8] sm:$0xff]
        %v431 = vld [vmem:[%s206 + $0x1b0] sm:$0xff]
        %v432 = vld [vmem:[%s206 + $0x1b8] sm:$0xff]
        %v433 = vld [vmem:[%s206 + $0x1c0] sm:$0xff]
        %v434 = vld [vmem:[%s206 + $0x1c8] sm:$0xff]
        %v435 = vld [vmem:[%s206 + $0x1d0] sm:$0xff]
        %v436 = vld [vmem:[%s206 + $0x1d8] sm:$0xff]
        %v437 = vld [vmem:[%s206 + $0x1e0] sm:$0xff]
        %v438 = vld [vmem:[%s206 + $0x1e8] sm:$0xff]
        %v439 = vld [vmem:[%s206 + $0x1f0] sm:$0xff]
        %v440 = vld [vmem:[%s206 + $0x1f8] sm:$0xff]
        %v505 = vunpack.c.l.b16 %v377
        %v506 = vunpack.c.h.b16 %v377
        %v507 = vunpack.c.l.b16 %v378
        %v508 = vunpack.c.h.b16 %v378
        %v509 = vunpack.c.l.b16 %v379
        %v510 = vunpack.c.h.b16 %v379
        %v511 = vunpack.c.l.b16 %v380
        %v512 = vunpack.c.h.b16 %v380
        %v513 = vunpack.c.l.b16 %v381
        %v514 = vunpack.c.h.b16 %v381
        %v515 = vunpack.c.l.b16 %v382
        %v516 = vunpack.c.h.b16 %v382
        %v517 = vunpack.c.l.b16 %v383
        %v518 = vunpack.c.h.b16 %v383
        %v519 = vunpack.c.l.b16 %v384
        %v520 = vunpack.c.h.b16 %v384
        %v521 = vunpack.c.l.b16 %v385
        %v522 = vunpack.c.h.b16 %v385
        %v523 = vunpack.c.l.b16 %v386
        %v524 = vunpack.c.h.b16 %v386
        %v525 = vunpack.c.l.b16 %v387
        %v526 = vunpack.c.h.b16 %v387
        %v527 = vunpack.c.l.b16 %v388
        %v528 = vunpack.c.h.b16 %v388
        %v529 = vunpack.c.l.b16 %v389
        %v530 = vunpack.c.h.b16 %v389
        %v531 = vunpack.c.l.b16 %v390
        %v532 = vunpack.c.h.b16 %v390
        %v533 = vunpack.c.l.b16 %v391
        %v534 = vunpack.c.h.b16 %v391
        %v535 = vunpack.c.l.b16 %v392
        %v536 = vunpack.c.h.b16 %v392
        %v537 = vunpack.c.l.b16 %v393
        %v538 = vunpack.c.h.b16 %v393
        %v539 = vunpack.c.l.b16 %v394
        %v540 = vunpack.c.h.b16 %v394
        %v541 = vunpack.c.l.b16 %v395
        %v542 = vunpack.c.h.b16 %v395
        %v543 = vunpack.c.l.b16 %v396
        %v544 = vunpack.c.h.b16 %v396
        %v545 = vunpack.c.l.b16 %v397
        %v546 = vunpack.c.h.b16 %v397
        %v547 = vunpack.c.l.b16 %v398
        %v548 = vunpack.c.h.b16 %v398
        %v549 = vunpack.c.l.b16 %v399
        %v550 = vunpack.c.h.b16 %v399
        %v551 = vunpack.c.l.b16 %v400
        %v552 = vunpack.c.h.b16 %v400
        %v553 = vunpack.c.l.b16 %v401
        %v554 = vunpack.c.h.b16 %v401
        %v555 = vunpack.c.l.b16 %v402
        %v556 = vunpack.c.h.b16 %v402
        %v557 = vunpack.c.l.b16 %v403
        %v558 = vunpack.c.h.b16 %v403
        %v559 = vunpack.c.l.b16 %v404
        %v560 = vunpack.c.h.b16 %v404
        %v561 = vunpack.c.l.b16 %v405
        %v562 = vunpack.c.h.b16 %v405
        %v563 = vunpack.c.l.b16 %v406
        %v564 = vunpack.c.h.b16 %v406
        %v565 = vunpack.c.l.b16 %v407
        %v566 = vunpack.c.h.b16 %v407
        %v567 = vunpack.c.l.b16 %v408
        %v568 = vunpack.c.h.b16 %v408
        %v569 = vunpack.c.l.b16 %v409
        %v570 = vunpack.c.h.b16 %v409
        %v571 = vunpack.c.l.b16 %v410
        %v572 = vunpack.c.h.b16 %v410
        %v573 = vunpack.c.l.b16 %v411
        %v574 = vunpack.c.h.b16 %v411
        %v575 = vunpack.c.l.b16 %v412
        %v576 = vunpack.c.h.b16 %v412
        %v577 = vunpack.c.l.b16 %v413
        %v578 = vunpack.c.h.b16 %v413
        %v579 = vunpack.c.l.b16 %v414
        %v580 = vunpack.c.h.b16 %v414
        %v581 = vunpack.c.l.b16 %v415
        %v582 = vunpack.c.h.b16 %v415
        %v583 = vunpack.c.l.b16 %v416
        %v584 = vunpack.c.h.b16 %v416
        %v585 = vunpack.c.l.b16 %v417
        %v586 = vunpack.c.h.b16 %v417
        %v587 = vunpack.c.l.b16 %v418
        %v588 = vunpack.c.h.b16 %v418
        %v589 = vunpack.c.l.b16 %v419
        %v590 = vunpack.c.h.b16 %v419
        %v591 = vunpack.c.l.b16 %v420
        %v592 = vunpack.c.h.b16 %v420
        %v593 = vunpack.c.l.b16 %v421
        %v594 = vunpack.c.h.b16 %v421
        %v595 = vunpack.c.l.b16 %v422
        %v596 = vunpack.c.h.b16 %v422
        %v597 = vunpack.c.l.b16 %v423
        %v598 = vunpack.c.h.b16 %v423
        %v599 = vunpack.c.l.b16 %v424
        %v600 = vunpack.c.h.b16 %v424
        %v601 = vunpack.c.l.b16 %v425
        %v602 = vunpack.c.h.b16 %v425
        %v603 = vunpack.c.l.b16 %v426
        %v604 = vunpack.c.h.b16 %v426
        %v605 = vunpack.c.l.b16 %v427
        %v606 = vunpack.c.h.b16 %v427
        %v607 = vunpack.c.l.b16 %v428
        %v608 = vunpack.c.h.b16 %v428
        %v609 = vunpack.c.l.b16 %v429
        %v610 = vunpack.c.h.b16 %v429
        %v611 = vunpack.c.l.b16 %v430
        %v612 = vunpack.c.h.b16 %v430
        %v613 = vunpack.c.l.b16 %v431
        %v614 = vunpack.c.h.b16 %v431
        %v615 = vunpack.c.l.b16 %v432
        %v616 = vunpack.c.h.b16 %v432
        %v617 = vunpack.c.l.b16 %v433
        %v618 = vunpack.c.h.b16 %v433
        %v619 = vunpack.c.l.b16 %v434
        %v620 = vunpack.c.h.b16 %v434
        %v621 = vunpack.c.l.b16 %v435
        %v622 = vunpack.c.h.b16 %v435
        %v623 = vunpack.c.l.b16 %v436
        %v624 = vunpack.c.h.b16 %v436
        %v625 = vunpack.c.l.b16 %v437
        %v626 = vunpack.c.h.b16 %v437
        %v627 = vunpack.c.l.b16 %v438
        %v628 = vunpack.c.h.b16 %v438
        %v629 = vunpack.c.l.b16 %v439
        %v630 = vunpack.c.h.b16 %v439
        %v631 = vunpack.c.l.b16 %v440
        %v632 = vunpack.c.h.b16 %v440
        %v633 = vpack.c.b16 %v509, %v505
        %v634 = vpack.c.b16 %v510, %v506
        %v635 = vpack.c.b16 %v511, %v507
        %v636 = vpack.c.b16 %v512, %v508
        %v637 = vpack.c.b16 %v517, %v513
        %v638 = vpack.c.b16 %v518, %v514
        %v639 = vpack.c.b16 %v519, %v515
        %v640 = vpack.c.b16 %v520, %v516
        %v641 = vpack.c.b16 %v525, %v521
        %v642 = vpack.c.b16 %v526, %v522
        %v643 = vpack.c.b16 %v527, %v523
        %v644 = vpack.c.b16 %v528, %v524
        %v645 = vpack.c.b16 %v533, %v529
        %v646 = vpack.c.b16 %v534, %v530
        %v647 = vpack.c.b16 %v535, %v531
        %v648 = vpack.c.b16 %v536, %v532
        %v649 = vpack.c.b16 %v541, %v537
        %v650 = vpack.c.b16 %v542, %v538
        %v651 = vpack.c.b16 %v543, %v539
        %v652 = vpack.c.b16 %v544, %v540
        %v653 = vpack.c.b16 %v549, %v545
        %v654 = vpack.c.b16 %v550, %v546
        %v655 = vpack.c.b16 %v551, %v547
        %v656 = vpack.c.b16 %v552, %v548
        %v657 = vpack.c.b16 %v557, %v553
        %v658 = vpack.c.b16 %v558, %v554
        %v659 = vpack.c.b16 %v559, %v555
        %v660 = vpack.c.b16 %v560, %v556
        %v661 = vpack.c.b16 %v565, %v561
        %v662 = vpack.c.b16 %v566, %v562
        %v663 = vpack.c.b16 %v567, %v563
        %v664 = vpack.c.b16 %v568, %v564
        %v665 = vpack.c.b16 %v573, %v569
        %v666 = vpack.c.b16 %v574, %v570
        %v667 = vpack.c.b16 %v575, %v571
        %v668 = vpack.c.b16 %v576, %v572
        %v669 = vpack.c.b16 %v581, %v577
        %v670 = vpack.c.b16 %v582, %v578
        %v671 = vpack.c.b16 %v583, %v579
        %v672 = vpack.c.b16 %v584, %v580
        %v673 = vpack.c.b16 %v589, %v585
        %v674 = vpack.c.b16 %v590, %v586
        %v675 = vpack.c.b16 %v591, %v587
        %v676 = vpack.c.b16 %v592, %v588
        %v677 = vpack.c.b16 %v597, %v593
        %v678 = vpack.c.b16 %v598, %v594
        %v679 = vpack.c.b16 %v599, %v595
        %v680 = vpack.c.b16 %v600, %v596
        %v681 = vpack.c.b16 %v605, %v601
        %v682 = vpack.c.b16 %v606, %v602
        %v683 = vpack.c.b16 %v607, %v603
        %v684 = vpack.c.b16 %v608, %v604
        %v685 = vpack.c.b16 %v613, %v609
        %v686 = vpack.c.b16 %v614, %v610
        %v687 = vpack.c.b16 %v615, %v611
        %v688 = vpack.c.b16 %v616, %v612
        %v689 = vpack.c.b16 %v621, %v617
        %v690 = vpack.c.b16 %v622, %v618
        %v691 = vpack.c.b16 %v623, %v619
        %v692 = vpack.c.b16 %v624, %v620
        %v693 = vpack.c.b16 %v629, %v625
        %v694 = vpack.c.b16 %v630, %v626
        %v695 = vpack.c.b16 %v631, %v627
        %v696 = vpack.c.b16 %v632, %v628
        %v825 = vunpack.c.l.b16 %v281
        %v826 = vunpack.c.l.b16 %v282
        %v827 = vunpack.c.l.b16 %v283
        %v828 = vunpack.c.l.b16 %v284
        %v829 = vunpack.c.l.b16 %v285
        %v830 = vunpack.c.l.b16 %v286
        %v831 = vunpack.c.l.b16 %v287
        %v832 = vunpack.c.l.b16 %v288
        %v833 = vunpack.c.l.b16 %v289
        %v834 = vunpack.c.l.b16 %v290
        %v835 = vunpack.c.l.b16 %v291
        %v836 = vunpack.c.l.b16 %v292
        %v837 = vunpack.c.l.b16 %v293
        %v838 = vunpack.c.l.b16 %v294
        %v839 = vunpack.c.l.b16 %v295
        %v840 = vunpack.c.l.b16 %v296
        %v841 = vunpack.c.l.b16 %v297
        %v842 = vunpack.c.l.b16 %v298
        %v843 = vunpack.c.l.b16 %v299
        %v844 = vunpack.c.l.b16 %v300
        %v845 = vunpack.c.l.b16 %v301
        %v846 = vunpack.c.l.b16 %v302
        %v847 = vunpack.c.l.b16 %v303
        %v848 = vunpack.c.l.b16 %v304
        %v849 = vunpack.c.l.b16 %v305
        %v850 = vunpack.c.l.b16 %v306
        %v851 = vunpack.c.l.b16 %v307
        %v852 = vunpack.c.l.b16 %v308
        %v853 = vunpack.c.l.b16 %v309
        %v854 = vunpack.c.l.b16 %v310
        %v855 = vunpack.c.l.b16 %v311
        %v856 = vunpack.c.l.b16 %v312
        %v857 = vunpack.c.l.b16 %v313
        %v858 = vunpack.c.l.b16 %v314
        %v859 = vunpack.c.l.b16 %v315
        %v860 = vunpack.c.l.b16 %v316
        %v861 = vunpack.c.l.b16 %v317
        %v862 = vunpack.c.l.b16 %v318
        %v863 = vunpack.c.l.b16 %v319
        %v864 = vunpack.c.l.b16 %v320
        %v865 = vunpack.c.l.b16 %v321
        %v866 = vunpack.c.l.b16 %v322
        %v867 = vunpack.c.l.b16 %v323
        %v868 = vunpack.c.l.b16 %v324
        %v869 = vunpack.c.l.b16 %v325
        %v870 = vunpack.c.l.b16 %v326
        %v871 = vunpack.c.l.b16 %v327
        %v872 = vunpack.c.l.b16 %v328
        %v873 = vunpack.c.l.b16 %v329
        %v874 = vunpack.c.l.b16 %v330
        %v875 = vunpack.c.l.b16 %v331
        %v876 = vunpack.c.l.b16 %v332
        %v877 = vunpack.c.l.b16 %v333
        %v878 = vunpack.c.l.b16 %v334
        %v879 = vunpack.c.l.b16 %v335
        %v880 = vunpack.c.l.b16 %v336
        %v881 = vunpack.c.l.b16 %v337
        %v882 = vunpack.c.l.b16 %v338
        %v883 = vunpack.c.l.b16 %v339
        %v884 = vunpack.c.l.b16 %v340
        %v885 = vunpack.c.l.b16 %v341
        %v886 = vunpack.c.l.b16 %v342
        %v887 = vunpack.c.l.b16 %v343
        %v888 = vunpack.c.l.b16 %v344
        %v889 = vpack.c.b16 %v826, %v825
        %v890 = vpack.c.b16 %v828, %v827
        %v891 = vpack.c.b16 %v830, %v829
        %v892 = vpack.c.b16 %v832, %v831
        %v893 = vpack.c.b16 %v834, %v833
        %v894 = vpack.c.b16 %v836, %v835
        %v895 = vpack.c.b16 %v838, %v837
        %v896 = vpack.c.b16 %v840, %v839
        %v897 = vpack.c.b16 %v842, %v841
        %v898 = vpack.c.b16 %v844, %v843
        %v899 = vpack.c.b16 %v846, %v845
        %v900 = vpack.c.b16 %v848, %v847
        %v901 = vpack.c.b16 %v850, %v849
        %v902 = vpack.c.b16 %v852, %v851
        %v903 = vpack.c.b16 %v854, %v853
        %v904 = vpack.c.b16 %v856, %v855
        %v905 = vpack.c.b16 %v858, %v857
        %v906 = vpack.c.b16 %v860, %v859
        %v907 = vpack.c.b16 %v862, %v861
        %v908 = vpack.c.b16 %v864, %v863
        %v909 = vpack.c.b16 %v866, %v865
        %v910 = vpack.c.b16 %v868, %v867
        %v911 = vpack.c.b16 %v870, %v869
        %v912 = vpack.c.b16 %v872, %v871
        %v913 = vpack.c.b16 %v874, %v873
        %v914 = vpack.c.b16 %v876, %v875
        %v915 = vpack.c.b16 %v878, %v877
        %v916 = vpack.c.b16 %v880, %v879
        %v917 = vpack.c.b16 %v882, %v881
        %v918 = vpack.c.b16 %v884, %v883
        %v919 = vpack.c.b16 %v886, %v885
        %v920 = vpack.c.b16 %v888, %v887
        %953 = vmatpush.bf16.msra.mxu0 %v896
        %954 = vmatpush.bf16.msra.mxu0 %v895
        %955 = vmatpush.bf16.msra.mxu0 %v894
        %956 = vmatpush.bf16.msra.mxu0 %v893
        %957 = vmatpush.bf16.msra.mxu0 %v892
        %958 = vmatpush.bf16.msra.mxu0 %v891
        %959 = vmatpush.bf16.msra.mxu0 %v890
        %960 = vmatpush.bf16.msra.mxu0 %v889
        %961 = vmatmul.bf16.gmra.mxu0 %v633
        %v962 = vpop.f32.mrf.mxu0
        %v963 = vadd.f32 0.0, %v962
        %v964 = vpop.f32.mrf.mxu0
        %v965 = vadd.f32 0.0, %v964
        %966 = vmatmul.bf16.gmra.mxu0 %v637
        %v967 = vpop.f32.mrf.mxu0
        %v968 = vadd.f32 0.0, %v967
        %v969 = vpop.f32.mrf.mxu0
        %v970 = vadd.f32 0.0, %v969
        %971 = vmatmul.bf16.gmra.mxu0 %v641
        %v972 = vpop.f32.mrf.mxu0
        %v973 = vadd.f32 0.0, %v972
        %v974 = vpop.f32.mrf.mxu0
        %v975 = vadd.f32 0.0, %v974
        %976 = vmatmul.bf16.gmra.mxu0 %v645
        %v977 = vpop.f32.mrf.mxu0
        %v978 = vadd.f32 0.0, %v977
        %v979 = vpop.f32.mrf.mxu0
        %v980 = vadd.f32 0.0, %v979
        %981 = vmatmul.bf16.gmra.mxu0 %v649
        %v982 = vpop.f32.mrf.mxu0
        %v983 = vadd.f32 0.0, %v982
        %v984 = vpop.f32.mrf.mxu0
        %v985 = vadd.f32 0.0, %v984
        %986 = vmatmul.bf16.gmra.mxu0 %v653
        %v987 = vpop.f32.mrf.mxu0
        %v988 = vadd.f32 0.0, %v987
        %v989 = vpop.f32.mrf.mxu0
        %v990 = vadd.f32 0.0, %v989
        %991 = vmatmul.bf16.gmra.mxu0 %v657
        %v992 = vpop.f32.mrf.mxu0
        %v993 = vadd.f32 0.0, %v992
        %v994 = vpop.f32.mrf.mxu0
        %v995 = vadd.f32 0.0, %v994
        %996 = vmatmul.bf16.gmra.mxu0 %v661
        %v997 = vpop.f32.mrf.mxu0
        %v998 = vadd.f32 0.0, %v997
        %v999 = vpop.f32.mrf.mxu0
        %v1000 = vadd.f32 0.0, %v999
        %1001 = vmatmul.bf16.gmra.mxu0 %v665
        %v1002 = vpop.f32.mrf.mxu0
        %v1003 = vadd.f32 0.0, %v1002
        %v1004 = vpop.f32.mrf.mxu0
        %v1005 = vadd.f32 0.0, %v1004
        %1006 = vmatmul.bf16.gmra.mxu0 %v669
        %v1007 = vpop.f32.mrf.mxu0
        %v1008 = vadd.f32 0.0, %v1007
        %v1009 = vpop.f32.mrf.mxu0
        %v1010 = vadd.f32 0.0, %v1009
        %1011 = vmatmul.bf16.gmra.mxu0 %v673
        %v1012 = vpop.f32.mrf.mxu0
        %v1013 = vadd.f32 0.0, %v1012
        %v1014 = vpop.f32.mrf.mxu0
        %v1015 = vadd.f32 0.0, %v1014
        %1016 = vmatmul.bf16.gmra.mxu0 %v677
        %v1017 = vpop.f32.mrf.mxu0
        %v1018 = vadd.f32 0.0, %v1017
        %v1019 = vpop.f32.mrf.mxu0
        %v1020 = vadd.f32 0.0, %v1019
        %1021 = vmatmul.bf16.gmra.mxu0 %v681
        %v1022 = vpop.f32.mrf.mxu0
        %v1023 = vadd.f32 0.0, %v1022
        %v1024 = vpop.f32.mrf.mxu0
        %v1025 = vadd.f32 0.0, %v1024
        %1026 = vmatmul.bf16.gmra.mxu0 %v685
        %v1027 = vpop.f32.mrf.mxu0
        %v1028 = vadd.f32 0.0, %v1027
        %v1029 = vpop.f32.mrf.mxu0
        %v1030 = vadd.f32 0.0, %v1029
        %1031 = vmatmul.bf16.gmra.mxu0 %v689
        %v1032 = vpop.f32.mrf.mxu0
        %v1033 = vadd.f32 0.0, %v1032
        %v1034 = vpop.f32.mrf.mxu0
        %v1035 = vadd.f32 0.0, %v1034
        %1036 = vmatmul.bf16.gmra.mxu0 %v693
        %v1037 = vpop.f32.mrf.mxu0
        %v1038 = vadd.f32 0.0, %v1037
        %v1039 = vpop.f32.mrf.mxu0
        %v1040 = vadd.f32 0.0, %v1039
        %1041 = vdwg.mxu0
        %1042 = vmatpush.bf16.msra.mxu0 %v904
        %1043 = vmatpush.bf16.msra.mxu0 %v903
        %1044 = vmatpush.bf16.msra.mxu0 %v902
        %1045 = vmatpush.bf16.msra.mxu0 %v901
        %1046 = vmatpush.bf16.msra.mxu0 %v900
        %1047 = vmatpush.bf16.msra.mxu0 %v899
        %1048 = vmatpush.bf16.msra.mxu0 %v898
        %1049 = vmatpush.bf16.msra.mxu0 %v897
        %1050 = vmatmul.bf16.gmra.mxu0 %v634
        %v1051 = vpop.f32.mrf.mxu0
        %v1052 = vadd.f32 %v963, %v1051
        %v1053 = vpop.f32.mrf.mxu0
        %v1054 = vadd.f32 %v965, %v1053
        %1055 = vmatmul.bf16.gmra.mxu0 %v638
        %v1056 = vpop.f32.mrf.mxu0
        %v1057 = vadd.f32 %v968, %v1056
        %v1058 = vpop.f32.mrf.mxu0
        %v1059 = vadd.f32 %v970, %v1058
        %1060 = vmatmul.bf16.gmra.mxu0 %v642
        %v1061 = vpop.f32.mrf.mxu0
        %v1062 = vadd.f32 %v973, %v1061
        %v1063 = vpop.f32.mrf.mxu0
        %v1064 = vadd.f32 %v975, %v1063
        %1065 = vmatmul.bf16.gmra.mxu0 %v646
        %v1066 = vpop.f32.mrf.mxu0
        %v1067 = vadd.f32 %v978, %v1066
        %v1068 = vpop.f32.mrf.mxu0
        %v1069 = vadd.f32 %v980, %v1068
        %1070 = vmatmul.bf16.gmra.mxu0 %v650
        %v1071 = vpop.f32.mrf.mxu0
        %v1072 = vadd.f32 %v983, %v1071
        %v1073 = vpop.f32.mrf.mxu0
        %v1074 = vadd.f32 %v985, %v1073
        %1075 = vmatmul.bf16.gmra.mxu0 %v654
        %v1076 = vpop.f32.mrf.mxu0
        %v1077 = vadd.f32 %v988, %v1076
        %v1078 = vpop.f32.mrf.mxu0
        %v1079 = vadd.f32 %v990, %v1078
        %1080 = vmatmul.bf16.gmra.mxu0 %v658
        %v1081 = vpop.f32.mrf.mxu0
        %v1082 = vadd.f32 %v993, %v1081
        %v1083 = vpop.f32.mrf.mxu0
        %v1084 = vadd.f32 %v995, %v1083
        %1085 = vmatmul.bf16.gmra.mxu0 %v662
        %v1086 = vpop.f32.mrf.mxu0
        %v1087 = vadd.f32 %v998, %v1086
        %v1088 = vpop.f32.mrf.mxu0
        %v1089 = vadd.f32 %v1000, %v1088
        %1090 = vmatmul.bf16.gmra.mxu0 %v666
        %v1091 = vpop.f32.mrf.mxu0
        %v1092 = vadd.f32 %v1003, %v1091
        %v1093 = vpop.f32.mrf.mxu0
        %v1094 = vadd.f32 %v1005, %v1093
        %1095 = vmatmul.bf16.gmra.mxu0 %v670
        %v1096 = vpop.f32.mrf.mxu0
        %v1097 = vadd.f32 %v1008, %v1096
        %v1098 = vpop.f32.mrf.mxu0
        %v1099 = vadd.f32 %v1010, %v1098
        %1100 = vmatmul.bf16.gmra.mxu0 %v674
        %v1101 = vpop.f32.mrf.mxu0
        %v1102 = vadd.f32 %v1013, %v1101
        %v1103 = vpop.f32.mrf.mxu0
        %v1104 = vadd.f32 %v1015, %v1103
        %1105 = vmatmul.bf16.gmra.mxu0 %v678
        %v1106 = vpop.f32.mrf.mxu0
        %v1107 = vadd.f32 %v1018, %v1106
        %v1108 = vpop.f32.mrf.mxu0
        %v1109 = vadd.f32 %v1020, %v1108
        %1110 = vmatmul.bf16.gmra.mxu0 %v682
        %v1111 = vpop.f32.mrf.mxu0
        %v1112 = vadd.f32 %v1023, %v1111
        %v1113 = vpop.f32.mrf.mxu0
        %v1114 = vadd.f32 %v1025, %v1113
        %1115 = vmatmul.bf16.gmra.mxu0 %v686
        %v1116 = vpop.f32.mrf.mxu0
        %v1117 = vadd.f32 %v1028, %v1116
        %v1118 = vpop.f32.mrf.mxu0
        %v1119 = vadd.f32 %v1030, %v1118
        %1120 = vmatmul.bf16.gmra.mxu0 %v690
        %v1121 = vpop.f32.mrf.mxu0
        %v1122 = vadd.f32 %v1033, %v1121
        %v1123 = vpop.f32.mrf.mxu0
        %v1124 = vadd.f32 %v1035, %v1123
        %1125 = vmatmul.bf16.gmra.mxu0 %v694
        %v1126 = vpop.f32.mrf.mxu0
        %v1127 = vadd.f32 %v1038, %v1126
        %v1128 = vpop.f32.mrf.mxu0
        %v1129 = vadd.f32 %v1040, %v1128
        %1130 = vdwg.mxu0
        %1131 = vmatpush.bf16.msra.mxu0 %v912
        %1132 = vmatpush.bf16.msra.mxu0 %v911
        %1133 = vmatpush.bf16.msra.mxu0 %v910
        %1134 = vmatpush.bf16.msra.mxu0 %v909
        %1135 = vmatpush.bf16.msra.mxu0 %v908
        %1136 = vmatpush.bf16.msra.mxu0 %v907
        %1137 = vmatpush.bf16.msra.mxu0 %v906
        %1138 = vmatpush.bf16.msra.mxu0 %v905
        %1139 = vmatmul.bf16.gmra.mxu0 %v635
        %v1140 = vpop.f32.mrf.mxu0
        %v1141 = vadd.f32 %v1052, %v1140
        %v1142 = vpop.f32.mrf.mxu0
        %v1143 = vadd.f32 %v1054, %v1142
        %1144 = vmatmul.bf16.gmra.mxu0 %v639
        %v1145 = vpop.f32.mrf.mxu0
        %v1146 = vadd.f32 %v1057, %v1145
        %v1147 = vpop.f32.mrf.mxu0
        %v1148 = vadd.f32 %v1059, %v1147
        %1149 = vmatmul.bf16.gmra.mxu0 %v643
        %v1150 = vpop.f32.mrf.mxu0
        %v1151 = vadd.f32 %v1062, %v1150
        %v1152 = vpop.f32.mrf.mxu0
        %v1153 = vadd.f32 %v1064, %v1152
        %1154 = vmatmul.bf16.gmra.mxu0 %v647
        %v1155 = vpop.f32.mrf.mxu0
        %v1156 = vadd.f32 %v1067, %v1155
        %v1157 = vpop.f32.mrf.mxu0
        %v1158 = vadd.f32 %v1069, %v1157
        %1159 = vmatmul.bf16.gmra.mxu0 %v651
        %v1160 = vpop.f32.mrf.mxu0
        %v1161 = vadd.f32 %v1072, %v1160
        %v1162 = vpop.f32.mrf.mxu0
        %v1163 = vadd.f32 %v1074, %v1162
        %1164 = vmatmul.bf16.gmra.mxu0 %v655
        %v1165 = vpop.f32.mrf.mxu0
        %v1166 = vadd.f32 %v1077, %v1165
        %v1167 = vpop.f32.mrf.mxu0
        %v1168 = vadd.f32 %v1079, %v1167
        %1169 = vmatmul.bf16.gmra.mxu0 %v659
        %v1170 = vpop.f32.mrf.mxu0
        %v1171 = vadd.f32 %v1082, %v1170
        %v1172 = vpop.f32.mrf.mxu0
        %v1173 = vadd.f32 %v1084, %v1172
        %1174 = vmatmul.bf16.gmra.mxu0 %v663
        %v1175 = vpop.f32.mrf.mxu0
        %v1176 = vadd.f32 %v1087, %v1175
        %v1177 = vpop.f32.mrf.mxu0
        %v1178 = vadd.f32 %v1089, %v1177
        %1179 = vmatmul.bf16.gmra.mxu0 %v667
        %v1180 = vpop.f32.mrf.mxu0
        %v1181 = vadd.f32 %v1092, %v1180
        %v1182 = vpop.f32.mrf.mxu0
        %v1183 = vadd.f32 %v1094, %v1182
        %1184 = vmatmul.bf16.gmra.mxu0 %v671
        %v1185 = vpop.f32.mrf.mxu0
        %v1186 = vadd.f32 %v1097, %v1185
        %v1187 = vpop.f32.mrf.mxu0
        %v1188 = vadd.f32 %v1099, %v1187
        %1189 = vmatmul.bf16.gmra.mxu0 %v675
        %v1190 = vpop.f32.mrf.mxu0
        %v1191 = vadd.f32 %v1102, %v1190
        %v1192 = vpop.f32.mrf.mxu0
        %v1193 = vadd.f32 %v1104, %v1192
        %1194 = vmatmul.bf16.gmra.mxu0 %v679
        %v1195 = vpop.f32.mrf.mxu0
        %v1196 = vadd.f32 %v1107, %v1195
        %v1197 = vpop.f32.mrf.mxu0
        %v1198 = vadd.f32 %v1109, %v1197
        %1199 = vmatmul.bf16.gmra.mxu0 %v683
        %v1200 = vpop.f32.mrf.mxu0
        %v1201 = vadd.f32 %v1112, %v1200
        %v1202 = vpop.f32.mrf.mxu0
        %v1203 = vadd.f32 %v1114, %v1202
        %1204 = vmatmul.bf16.gmra.mxu0 %v687
        %v1205 = vpop.f32.mrf.mxu0
        %v1206 = vadd.f32 %v1117, %v1205
        %v1207 = vpop.f32.mrf.mxu0
        %v1208 = vadd.f32 %v1119, %v1207
        %1209 = vmatmul.bf16.gmra.mxu0 %v691
        %v1210 = vpop.f32.mrf.mxu0
        %v1211 = vadd.f32 %v1122, %v1210
        %v1212 = vpop.f32.mrf.mxu0
        %v1213 = vadd.f32 %v1124, %v1212
        %1214 = vmatmul.bf16.gmra.mxu0 %v695
        %v1215 = vpop.f32.mrf.mxu0
        %v1216 = vadd.f32 %v1127, %v1215
        %v1217 = vpop.f32.mrf.mxu0
        %v1218 = vadd.f32 %v1129, %v1217
        %1219 = vdwg.mxu0
        %1220 = vmatpush.bf16.msra.mxu0 %v920
        %1221 = vmatpush.bf16.msra.mxu0 %v919
        %1222 = vmatpush.bf16.msra.mxu0 %v918
        %1223 = vmatpush.bf16.msra.mxu0 %v917
        %1224 = vmatpush.bf16.msra.mxu0 %v916
        %1225 = vmatpush.bf16.msra.mxu0 %v915
        %1226 = vmatpush.bf16.msra.mxu0 %v914
        %1227 = vmatpush.bf16.msra.mxu0 %v913
        %1228 = vmatmul.bf16.gmra.mxu0 %v636
        %v1229 = vpop.f32.mrf.mxu0
        %v1230 = vadd.f32 %v1141, %v1229
        %v1231 = vpop.f32.mrf.mxu0
        %v1232 = vadd.f32 %v1143, %v1231
        %1233 = vmatmul.bf16.gmra.mxu0 %v640
        %v1234 = vpop.f32.mrf.mxu0
        %v1235 = vadd.f32 %v1146, %v1234
        %v1236 = vpop.f32.mrf.mxu0
        %v1237 = vadd.f32 %v1148, %v1236
        %1238 = vmatmul.bf16.gmra.mxu0 %v644
        %v1239 = vpop.f32.mrf.mxu0
        %v1240 = vadd.f32 %v1151, %v1239
        %v1241 = vpop.f32.mrf.mxu0
        %v1242 = vadd.f32 %v1153, %v1241
        %1243 = vmatmul.bf16.gmra.mxu0 %v648
        %v1244 = vpop.f32.mrf.mxu0
        %v1245 = vadd.f32 %v1156, %v1244
        %v1246 = vpop.f32.mrf.mxu0
        %v1247 = vadd.f32 %v1158, %v1246
        %1248 = vmatmul.bf16.gmra.mxu0 %v652
        %v1249 = vpop.f32.mrf.mxu0
        %v1250 = vadd.f32 %v1161, %v1249
        %v1251 = vpop.f32.mrf.mxu0
        %v1252 = vadd.f32 %v1163, %v1251
        %1253 = vmatmul.bf16.gmra.mxu0 %v656
        %v1254 = vpop.f32.mrf.mxu0
        %v1255 = vadd.f32 %v1166, %v1254
        %v1256 = vpop.f32.mrf.mxu0
        %v1257 = vadd.f32 %v1168, %v1256
        %1258 = vmatmul.bf16.gmra.mxu0 %v660
        %v1259 = vpop.f32.mrf.mxu0
        %v1260 = vadd.f32 %v1171, %v1259
        %v1261 = vpop.f32.mrf.mxu0
        %v1262 = vadd.f32 %v1173, %v1261
        %1263 = vmatmul.bf16.gmra.mxu0 %v664
        %v1264 = vpop.f32.mrf.mxu0
        %v1265 = vadd.f32 %v1176, %v1264
        %v1266 = vpop.f32.mrf.mxu0
        %v1267 = vadd.f32 %v1178, %v1266
        %1268 = vmatmul.bf16.gmra.mxu0 %v668
        %v1269 = vpop.f32.mrf.mxu0
        %v1270 = vadd.f32 %v1181, %v1269
        %v1271 = vpop.f32.mrf.mxu0
        %v1272 = vadd.f32 %v1183, %v1271
        %1273 = vmatmul.bf16.gmra.mxu0 %v672
        %v1274 = vpop.f32.mrf.mxu0
        %v1275 = vadd.f32 %v1186, %v1274
        %v1276 = vpop.f32.mrf.mxu0
        %v1277 = vadd.f32 %v1188, %v1276
        %1278 = vmatmul.bf16.gmra.mxu0 %v676
        %v1279 = vpop.f32.mrf.mxu0
        %v1280 = vadd.f32 %v1191, %v1279
        %v1281 = vpop.f32.mrf.mxu0
        %v1282 = vadd.f32 %v1193, %v1281
        %1283 = vmatmul.bf16.gmra.mxu0 %v680
        %v1284 = vpop.f32.mrf.mxu0
        %v1285 = vadd.f32 %v1196, %v1284
        %v1286 = vpop.f32.mrf.mxu0
        %v1287 = vadd.f32 %v1198, %v1286
        %1288 = vmatmul.bf16.gmra.mxu0 %v684
        %v1289 = vpop.f32.mrf.mxu0
        %v1290 = vadd.f32 %v1201, %v1289
        %v1291 = vpop.f32.mrf.mxu0
        %v1292 = vadd.f32 %v1203, %v1291
        %1293 = vmatmul.bf16.gmra.mxu0 %v688
        %v1294 = vpop.f32.mrf.mxu0
        %v1295 = vadd.f32 %v1206, %v1294
        %v1296 = vpop.f32.mrf.mxu0
        %v1297 = vadd.f32 %v1208, %v1296
        %1298 = vmatmul.bf16.gmra.mxu0 %v692
        %v1299 = vpop.f32.mrf.mxu0
        %v1300 = vadd.f32 %v1211, %v1299
        %v1301 = vpop.f32.mrf.mxu0
        %v1302 = vadd.f32 %v1213, %v1301
        %1303 = vmatmul.bf16.gmra.mxu0 %v696
        %v1304 = vpop.f32.mrf.mxu0
        %v1305 = vadd.f32 %v1216, %v1304
        %v1306 = vpop.f32.mrf.mxu0
        %v1307 = vadd.f32 %v1218, %v1306
        %1308 = vdwg.mxu0
        %v1309 = vadd.f32 %v345, %v1230
        %v1310 = vadd.f32 %v346, %v1232
        %v1311 = vadd.f32 %v347, %v1235
        %v1312 = vadd.f32 %v348, %v1237
        %v1313 = vadd.f32 %v349, %v1240
        %v1314 = vadd.f32 %v350, %v1242
        %v1315 = vadd.f32 %v351, %v1245
        %v1316 = vadd.f32 %v352, %v1247
        %v1317 = vadd.f32 %v353, %v1250
        %v1318 = vadd.f32 %v354, %v1252
        %v1319 = vadd.f32 %v355, %v1255
        %v1320 = vadd.f32 %v356, %v1257
        %v1321 = vadd.f32 %v357, %v1260
        %v1322 = vadd.f32 %v358, %v1262
        %v1323 = vadd.f32 %v359, %v1265
        %v1324 = vadd.f32 %v360, %v1267
        %v1325 = vadd.f32 %v361, %v1270
        %v1326 = vadd.f32 %v362, %v1272
        %v1327 = vadd.f32 %v363, %v1275
        %v1328 = vadd.f32 %v364, %v1277
        %v1329 = vadd.f32 %v365, %v1280
        %v1330 = vadd.f32 %v366, %v1282
        %v1331 = vadd.f32 %v367, %v1285
        %v1332 = vadd.f32 %v368, %v1287
        %v1333 = vadd.f32 %v369, %v1290
        %v1334 = vadd.f32 %v370, %v1292
        %v1335 = vadd.f32 %v371, %v1295
        %v1336 = vadd.f32 %v372, %v1297
        %v1337 = vadd.f32 %v373, %v1300
        %v1338 = vadd.f32 %v374, %v1302
        %v1339 = vadd.f32 %v375, %v1305
        %v1340 = vadd.f32 %v376, %v1307
        %1341 = vst [vmem:[#allocation2] sm:$0xff] %v1309
        %1342 = vst [vmem:[#allocation2 + $0x8] sm:$0xff] %v1310
        %1343 = vst [vmem:[#allocation2 + $0x10] sm:$0xff] %v1311
        %1344 = vst [vmem:[#allocation2 + $0x18] sm:$0xff] %v1312
        %1345 = vst [vmem:[#allocation2 + $0x20] sm:$0xff] %v1313
        %1346 = vst [vmem:[#allocation2 + $0x28] sm:$0xff] %v1314
        %1347 = vst [vmem:[#allocation2 + $0x30] sm:$0xff] %v1315
        %1348 = vst [vmem:[#allocation2 + $0x38] sm:$0xff] %v1316
        %1349 = vst [vmem:[#allocation2 + $0x40] sm:$0xff] %v1317
        %1350 = vst [vmem:[#allocation2 + $0x48] sm:$0xff] %v1318
        %1351 = vst [vmem:[#allocation2 + $0x50] sm:$0xff] %v1319
        %1352 = vst [vmem:[#allocation2 + $0x58] sm:$0xff] %v1320
        %1353 = vst [vmem:[#allocation2 + $0x60] sm:$0xff] %v1321
        %1354 = vst [vmem:[#allocation2 + $0x68] sm:$0xff] %v1322
        %1355 = vst [vmem:[#allocation2 + $0x70] sm:$0xff] %v1323
        %1356 = vst [vmem:[#allocation2 + $0x78] sm:$0xff] %v1324
        %1357 = vst [vmem:[#allocation2 + $0x80] sm:$0xff] %v1325
        %1358 = vst [vmem:[#allocation2 + $0x88] sm:$0xff] %v1326
        %1359 = vst [vmem:[#allocation2 + $0x90] sm:$0xff] %v1327
        %1360 = vst [vmem:[#allocation2 + $0x98] sm:$0xff] %v1328
        %1361 = vst [vmem:[#allocation2 + $0xa0] sm:$0xff] %v1329
        %1362 = vst [vmem:[#allocation2 + $0xa8] sm:$0xff] %v1330
        %1363 = vst [vmem:[#allocation2 + $0xb0] sm:$0xff] %v1331
        %1364 = vst [vmem:[#allocation2 + $0xb8] sm:$0xff] %v1332
        %1365 = vst [vmem:[#allocation2 + $0xc0] sm:$0xff] %v1333
        %1366 = vst [vmem:[#allocation2 + $0xc8] sm:$0xff] %v1334
        %1367 = vst [vmem:[#allocation2 + $0xd0] sm:$0xff] %v1335
        %1368 = vst [vmem:[#allocation2 + $0xd8] sm:$0xff] %v1336
        %1369 = vst [vmem:[#allocation2 + $0xe0] sm:$0xff] %v1337
        %1370 = vst [vmem:[#allocation2 + $0xe8] sm:$0xff] %v1338
        %1371 = vst [vmem:[#allocation2 + $0xf0] sm:$0xff] %v1339
        %1372 = vst [vmem:[#allocation2 + $0xf8] sm:$0xff] %v1340
        // Predicated region
        $region45: #{forward.4} parent=35 // pred_check
          %p1373 = pneg %p240
        $region46: #{forward.4} parent=35 // pred_check_branch
          %1375 = sbr.rel (%p1373) target = $region48
        $region47: #{forward.4} parent=35 // pred_region
          %v1376 = vld [vmem:[#allocation2] sm:$0xff]
          %v1377 = vld [vmem:[#allocation2 + $0x8] sm:$0xff]
          %v1378 = vld [vmem:[#allocation2 + $0x10] sm:$0xff]
          %v1379 = vld [vmem:[#allocation2 + $0x18] sm:$0xff]
          %v1380 = vld [vmem:[#allocation2 + $0x20] sm:$0xff]
          %v1381 = vld [vmem:[#allocation2 + $0x28] sm:$0xff]
          %v1382 = vld [vmem:[#allocation2 + $0x30] sm:$0xff]
          %v1383 = vld [vmem:[#allocation2 + $0x38] sm:$0xff]
          %v1384 = vld [vmem:[#allocation2 + $0x40] sm:$0xff]
          %v1385 = vld [vmem:[#allocation2 + $0x48] sm:$0xff]
          %v1386 = vld [vmem:[#allocation2 + $0x50] sm:$0xff]
          %v1387 = vld [vmem:[#allocation2 + $0x58] sm:$0xff]
          %v1388 = vld [vmem:[#allocation2 + $0x60] sm:$0xff]
          %v1389 = vld [vmem:[#allocation2 + $0x68] sm:$0xff]
          %v1390 = vld [vmem:[#allocation2 + $0x70] sm:$0xff]
          %v1391 = vld [vmem:[#allocation2 + $0x78] sm:$0xff]
          %v1392 = vld [vmem:[#allocation2 + $0x80] sm:$0xff]
          %v1393 = vld [vmem:[#allocation2 + $0x88] sm:$0xff]
          %v1394 = vld [vmem:[#allocation2 + $0x90] sm:$0xff]
          %v1395 = vld [vmem:[#allocation2 + $0x98] sm:$0xff]
          %v1396 = vld [vmem:[#allocation2 + $0xa0] sm:$0xff]
          %v1397 = vld [vmem:[#allocation2 + $0xa8] sm:$0xff]
          %v1398 = vld [vmem:[#allocation2 + $0xb0] sm:$0xff]
          %v1399 = vld [vmem:[#allocation2 + $0xb8] sm:$0xff]
          %v1400 = vld [vmem:[#allocation2 + $0xc0] sm:$0xff]
          %v1401 = vld [vmem:[#allocation2 + $0xc8] sm:$0xff]
          %v1402 = vld [vmem:[#allocation2 + $0xd0] sm:$0xff]
          %v1403 = vld [vmem:[#allocation2 + $0xd8] sm:$0xff]
          %v1404 = vld [vmem:[#allocation2 + $0xe0] sm:$0xff]
          %v1405 = vld [vmem:[#allocation2 + $0xe8] sm:$0xff]
          %v1406 = vld [vmem:[#allocation2 + $0xf0] sm:$0xff]
          %v1407 = vld [vmem:[#allocation2 + $0xf8] sm:$0xff]
          %v1408 = vld [vmem:[%s2] sm:$0x1]
          %v1410 = vperm.slane %v1408, 0
          %v1412 = vadd.f32 %v1376, %v1410
          %v1413 = vadd.f32 %v1377, %v1410
          %v1414 = vadd.f32 %v1378, %v1410
          %v1415 = vadd.f32 %v1379, %v1410
          %v1416 = vadd.f32 %v1380, %v1410
          %v1417 = vadd.f32 %v1381, %v1410
          %v1418 = vadd.f32 %v1382, %v1410
          %v1419 = vadd.f32 %v1383, %v1410
          %v1420 = vadd.f32 %v1384, %v1410
          %v1421 = vadd.f32 %v1385, %v1410
          %v1422 = vadd.f32 %v1386, %v1410
          %v1423 = vadd.f32 %v1387, %v1410
          %v1424 = vadd.f32 %v1388, %v1410
          %v1425 = vadd.f32 %v1389, %v1410
          %v1426 = vadd.f32 %v1390, %v1410
          %v1427 = vadd.f32 %v1391, %v1410
          %v1428 = vadd.f32 %v1392, %v1410
          %v1429 = vadd.f32 %v1393, %v1410
          %v1430 = vadd.f32 %v1394, %v1410
          %v1431 = vadd.f32 %v1395, %v1410
          %v1432 = vadd.f32 %v1396, %v1410
          %v1433 = vadd.f32 %v1397, %v1410
          %v1434 = vadd.f32 %v1398, %v1410
          %v1435 = vadd.f32 %v1399, %v1410
          %v1436 = vadd.f32 %v1400, %v1410
          %v1437 = vadd.f32 %v1401, %v1410
          %v1438 = vadd.f32 %v1402, %v1410
          %v1439 = vadd.f32 %v1403, %v1410
          %v1440 = vadd.f32 %v1404, %v1410
          %v1441 = vadd.f32 %v1405, %v1410
          %v1442 = vadd.f32 %v1406, %v1410
          %v1443 = vadd.f32 %v1407, %v1410
          %v1444 = vmax.f32 %v1412, 0.0
          %v1445 = vmax.f32 %v1413, 0.0
          %v1446 = vmax.f32 %v1414, 0.0
          %v1447 = vmax.f32 %v1415, 0.0
          %v1448 = vmax.f32 %v1416, 0.0
          %v1449 = vmax.f32 %v1417, 0.0
          %v1450 = vmax.f32 %v1418, 0.0
          %v1451 = vmax.f32 %v1419, 0.0
          %v1452 = vmax.f32 %v1420, 0.0
          %v1453 = vmax.f32 %v1421, 0.0
          %v1454 = vmax.f32 %v1422, 0.0
          %v1455 = vmax.f32 %v1423, 0.0
          %v1456 = vmax.f32 %v1424, 0.0
          %v1457 = vmax.f32 %v1425, 0.0
          %v1458 = vmax.f32 %v1426, 0.0
          %v1459 = vmax.f32 %v1427, 0.0
          %v1460 = vmax.f32 %v1428, 0.0
          %v1461 = vmax.f32 %v1429, 0.0
          %v1462 = vmax.f32 %v1430, 0.0
          %v1463 = vmax.f32 %v1431, 0.0
          %v1464 = vmax.f32 %v1432, 0.0
          %v1465 = vmax.f32 %v1433, 0.0
          %v1466 = vmax.f32 %v1434, 0.0
          %v1467 = vmax.f32 %v1435, 0.0
          %v1468 = vmax.f32 %v1436, 0.0
          %v1469 = vmax.f32 %v1437, 0.0
          %v1470 = vmax.f32 %v1438, 0.0
          %v1471 = vmax.f32 %v1439, 0.0
          %v1472 = vmax.f32 %v1440, 0.0
          %v1473 = vmax.f32 %v1441, 0.0
          %v1474 = vmax.f32 %v1442, 0.0
          %v1475 = vmax.f32 %v1443, 0.0
          %v1476 = vpack.c.bf16 %v1445, %v1444
          %v1477 = vpack.c.bf16 %v1447, %v1446
          %v1478 = vpack.c.bf16 %v1449, %v1448
          %v1479 = vpack.c.bf16 %v1451, %v1450
          %v1480 = vpack.c.bf16 %v1453, %v1452
          %v1481 = vpack.c.bf16 %v1455, %v1454
          %v1482 = vpack.c.bf16 %v1457, %v1456
          %v1483 = vpack.c.bf16 %v1459, %v1458
          %v1484 = vpack.c.bf16 %v1461, %v1460
          %v1485 = vpack.c.bf16 %v1463, %v1462
          %v1486 = vpack.c.bf16 %v1465, %v1464
          %v1487 = vpack.c.bf16 %v1467, %v1466
          %v1488 = vpack.c.bf16 %v1469, %v1468
          %v1489 = vpack.c.bf16 %v1471, %v1470
          %v1490 = vpack.c.bf16 %v1473, %v1472
          %v1491 = vpack.c.bf16 %v1475, %v1474
          %v1492 = vld [vmem:[%s3] sm:$0xf]
          %v1493 = vld [vmem:[%s3 + $0x4] sm:$0xf]
          %v1494 = vld [vmem:[%s3 + $0x8] sm:$0xf]
          %v1495 = vld [vmem:[%s3 + $0xc] sm:$0xf]
          %v1496 = vld [vmem:[%s3 + $0x10] sm:$0xf]
          %v1497 = vld [vmem:[%s3 + $0x14] sm:$0xf]
          %v1498 = vld [vmem:[%s3 + $0x18] sm:$0xf]
          %v1499 = vld [vmem:[%s3 + $0x1c] sm:$0xf]
          %v1500 = vld [vmem:[%s3 + $0x20] sm:$0xf]
          %v1501 = vld [vmem:[%s3 + $0x24] sm:$0xf]
          %v1502 = vld [vmem:[%s3 + $0x28] sm:$0xf]
          %v1503 = vld [vmem:[%s3 + $0x2c] sm:$0xf]
          %v1504 = vld [vmem:[%s3 + $0x30] sm:$0xf]
          %v1505 = vld [vmem:[%s3 + $0x34] sm:$0xf]
          %v1506 = vld [vmem:[%s3 + $0x38] sm:$0xf]
          %v1507 = vld [vmem:[%s3 + $0x3c] sm:$0xf]
          %v1524 = vunpack.c.l.b16 %v1492
          %v1525 = vunpack.c.l.b16 %v1493
          %v1526 = vunpack.c.l.b16 %v1494
          %v1527 = vunpack.c.l.b16 %v1495
          %v1528 = vunpack.c.l.b16 %v1496
          %v1529 = vunpack.c.l.b16 %v1497
          %v1530 = vunpack.c.l.b16 %v1498
          %v1531 = vunpack.c.l.b16 %v1499
          %v1532 = vunpack.c.l.b16 %v1500
          %v1533 = vunpack.c.l.b16 %v1501
          %v1534 = vunpack.c.l.b16 %v1502
          %v1535 = vunpack.c.l.b16 %v1503
          %v1536 = vunpack.c.l.b16 %v1504
          %v1537 = vunpack.c.l.b16 %v1505
          %v1538 = vunpack.c.l.b16 %v1506
          %v1539 = vunpack.c.l.b16 %v1507
          %v1540 = vpack.c.b16 %v1525, %v1524
          %v1541 = vpack.c.b16 %v1527, %v1526
          %v1542 = vpack.c.b16 %v1529, %v1528
          %v1543 = vpack.c.b16 %v1531, %v1530
          %v1544 = vpack.c.b16 %v1533, %v1532
          %v1545 = vpack.c.b16 %v1535, %v1534
          %v1546 = vpack.c.b16 %v1537, %v1536
          %v1547 = vpack.c.b16 %v1539, %v1538
          %1556 = vmatpush.bf16.msra.mxu0 %v1547
          %1557 = vmatpush.bf16.msra.mxu0 %v1546
          %1558 = vmatpush.bf16.msra.mxu0 %v1545
          %1559 = vmatpush.bf16.msra.mxu0 %v1544
          %1560 = vmatpush.bf16.msra.mxu0 %v1543
          %1561 = vmatpush.bf16.msra.mxu0 %v1542
          %1562 = vmatpush.bf16.msra.mxu0 %v1541
          %1563 = vmatpush.bf16.msra.mxu0 %v1540
          %1564 = vmatmul.bf16.gmra.mxu0 %v1476
          %v1565 = vpop.f32.mrf.mxu0
          %v1566 = vadd.f32 0.0, %v1565
          %v1567 = vpop.f32.mrf.mxu0
          %v1568 = vadd.f32 0.0, %v1567
          %1569 = vmatmul.bf16.gmra.mxu0 %v1477
          %v1570 = vpop.f32.mrf.mxu0
          %v1571 = vadd.f32 0.0, %v1570
          %v1572 = vpop.f32.mrf.mxu0
          %v1573 = vadd.f32 0.0, %v1572
          %1574 = vmatmul.bf16.gmra.mxu0 %v1478
          %v1575 = vpop.f32.mrf.mxu0
          %v1576 = vadd.f32 0.0, %v1575
          %v1577 = vpop.f32.mrf.mxu0
          %v1578 = vadd.f32 0.0, %v1577
          %1579 = vmatmul.bf16.gmra.mxu0 %v1479
          %v1580 = vpop.f32.mrf.mxu0
          %v1581 = vadd.f32 0.0, %v1580
          %v1582 = vpop.f32.mrf.mxu0
          %v1583 = vadd.f32 0.0, %v1582
          %1584 = vmatmul.bf16.gmra.mxu0 %v1480
          %v1585 = vpop.f32.mrf.mxu0
          %v1586 = vadd.f32 0.0, %v1585
          %v1587 = vpop.f32.mrf.mxu0
          %v1588 = vadd.f32 0.0, %v1587
          %1589 = vmatmul.bf16.gmra.mxu0 %v1481
          %v1590 = vpop.f32.mrf.mxu0
          %v1591 = vadd.f32 0.0, %v1590
          %v1592 = vpop.f32.mrf.mxu0
          %v1593 = vadd.f32 0.0, %v1592
          %1594 = vmatmul.bf16.gmra.mxu0 %v1482
          %v1595 = vpop.f32.mrf.mxu0
          %v1596 = vadd.f32 0.0, %v1595
          %v1597 = vpop.f32.mrf.mxu0
          %v1598 = vadd.f32 0.0, %v1597
          %1599 = vmatmul.bf16.gmra.mxu0 %v1483
          %v1600 = vpop.f32.mrf.mxu0
          %v1601 = vadd.f32 0.0, %v1600
          %v1602 = vpop.f32.mrf.mxu0
          %v1603 = vadd.f32 0.0, %v1602
          %1604 = vmatmul.bf16.gmra.mxu0 %v1484
          %v1605 = vpop.f32.mrf.mxu0
          %v1606 = vadd.f32 0.0, %v1605
          %v1607 = vpop.f32.mrf.mxu0
          %v1608 = vadd.f32 0.0, %v1607
          %1609 = vmatmul.bf16.gmra.mxu0 %v1485
          %v1610 = vpop.f32.mrf.mxu0
          %v1611 = vadd.f32 0.0, %v1610
          %v1612 = vpop.f32.mrf.mxu0
          %v1613 = vadd.f32 0.0, %v1612
          %1614 = vmatmul.bf16.gmra.mxu0 %v1486
          %v1615 = vpop.f32.mrf.mxu0
          %v1616 = vadd.f32 0.0, %v1615
          %v1617 = vpop.f32.mrf.mxu0
          %v1618 = vadd.f32 0.0, %v1617
          %1619 = vmatmul.bf16.gmra.mxu0 %v1487
          %v1620 = vpop.f32.mrf.mxu0
          %v1621 = vadd.f32 0.0, %v1620
          %v1622 = vpop.f32.mrf.mxu0
          %v1623 = vadd.f32 0.0, %v1622
          %1624 = vmatmul.bf16.gmra.mxu0 %v1488
          %v1625 = vpop.f32.mrf.mxu0
          %v1626 = vadd.f32 0.0, %v1625
          %v1627 = vpop.f32.mrf.mxu0
          %v1628 = vadd.f32 0.0, %v1627
          %1629 = vmatmul.bf16.gmra.mxu0 %v1489
          %v1630 = vpop.f32.mrf.mxu0
          %v1631 = vadd.f32 0.0, %v1630
          %v1632 = vpop.f32.mrf.mxu0
          %v1633 = vadd.f32 0.0, %v1632
          %1634 = vmatmul.bf16.gmra.mxu0 %v1490
          %v1635 = vpop.f32.mrf.mxu0
          %v1636 = vadd.f32 0.0, %v1635
          %v1637 = vpop.f32.mrf.mxu0
          %v1638 = vadd.f32 0.0, %v1637
          %1639 = vmatmul.bf16.gmra.mxu0 %v1491
          %v1640 = vpop.f32.mrf.mxu0
          %v1641 = vadd.f32 0.0, %v1640
          %v1642 = vpop.f32.mrf.mxu0
          %v1643 = vadd.f32 0.0, %v1642
          %1644 = vdwg.mxu0
          %v1645 = vpack.c.bf16 %v1566, %v1566
          %v1646 = vpack.c.bf16 %v1568, %v1568
          %v1647 = vpack.c.bf16 %v1571, %v1571
          %v1648 = vpack.c.bf16 %v1573, %v1573
          %v1649 = vpack.c.bf16 %v1576, %v1576
          %v1650 = vpack.c.bf16 %v1578, %v1578
          %v1651 = vpack.c.bf16 %v1581, %v1581
          %v1652 = vpack.c.bf16 %v1583, %v1583
          %v1653 = vpack.c.bf16 %v1586, %v1586
          %v1654 = vpack.c.bf16 %v1588, %v1588
          %v1655 = vpack.c.bf16 %v1591, %v1591
          %v1656 = vpack.c.bf16 %v1593, %v1593
          %v1657 = vpack.c.bf16 %v1596, %v1596
          %v1658 = vpack.c.bf16 %v1598, %v1598
          %v1659 = vpack.c.bf16 %v1601, %v1601
          %v1660 = vpack.c.bf16 %v1603, %v1603
          %v1661 = vpack.c.bf16 %v1606, %v1606
          %v1662 = vpack.c.bf16 %v1608, %v1608
          %v1663 = vpack.c.bf16 %v1611, %v1611
          %v1664 = vpack.c.bf16 %v1613, %v1613
          %v1665 = vpack.c.bf16 %v1616, %v1616
          %v1666 = vpack.c.bf16 %v1618, %v1618
          %v1667 = vpack.c.bf16 %v1621, %v1621
          %v1668 = vpack.c.bf16 %v1623, %v1623
          %v1669 = vpack.c.bf16 %v1626, %v1626
          %v1670 = vpack.c.bf16 %v1628, %v1628
          %v1671 = vpack.c.bf16 %v1631, %v1631
          %v1672 = vpack.c.bf16 %v1633, %v1633
          %v1673 = vpack.c.bf16 %v1636, %v1636
          %v1674 = vpack.c.bf16 %v1638, %v1638
          %v1675 = vpack.c.bf16 %v1641, %v1641
          %v1676 = vpack.c.bf16 %v1643, %v1643
          %1677 = vst [vmem:[%s238] sm:$0xf] %v1645
          %1678 = vst [vmem:[%s238 + $0x4] sm:$0xf] %v1646
          %1679 = vst [vmem:[%s238 + $0x8] sm:$0xf] %v1647
          %1680 = vst [vmem:[%s238 + $0xc] sm:$0xf] %v1648
          %1681 = vst [vmem:[%s238 + $0x10] sm:$0xf] %v1649
          %1682 = vst [vmem:[%s238 + $0x14] sm:$0xf] %v1650
          %1683 = vst [vmem:[%s238 + $0x18] sm:$0xf] %v1651
          %1684 = vst [vmem:[%s238 + $0x1c] sm:$0xf] %v1652
          %1685 = vst [vmem:[%s238 + $0x20] sm:$0xf] %v1653
          %1686 = vst [vmem:[%s238 + $0x24] sm:$0xf] %v1654
          %1687 = vst [vmem:[%s238 + $0x28] sm:$0xf] %v1655
          %1688 = vst [vmem:[%s238 + $0x2c] sm:$0xf] %v1656
          %1689 = vst [vmem:[%s238 + $0x30] sm:$0xf] %v1657
          %1690 = vst [vmem:[%s238 + $0x34] sm:$0xf] %v1658
          %1691 = vst [vmem:[%s238 + $0x38] sm:$0xf] %v1659
          %1692 = vst [vmem:[%s238 + $0x3c] sm:$0xf] %v1660
          %1693 = vst [vmem:[%s238 + $0x40] sm:$0xf] %v1661
          %1694 = vst [vmem:[%s238 + $0x44] sm:$0xf] %v1662
          %1695 = vst [vmem:[%s238 + $0x48] sm:$0xf] %v1663
          %1696 = vst [vmem:[%s238 + $0x4c] sm:$0xf] %v1664
          %1697 = vst [vmem:[%s238 + $0x50] sm:$0xf] %v1665
          %1698 = vst [vmem:[%s238 + $0x54] sm:$0xf] %v1666
          %1699 = vst [vmem:[%s238 + $0x58] sm:$0xf] %v1667
          %1700 = vst [vmem:[%s238 + $0x5c] sm:$0xf] %v1668
          %1701 = vst [vmem:[%s238 + $0x60] sm:$0xf] %v1669
          %1702 = vst [vmem:[%s238 + $0x64] sm:$0xf] %v1670
          %1703 = vst [vmem:[%s238 + $0x68] sm:$0xf] %v1671
          %1704 = vst [vmem:[%s238 + $0x6c] sm:$0xf] %v1672
          %1705 = vst [vmem:[%s238 + $0x70] sm:$0xf] %v1673
          %1706 = vst [vmem:[%s238 + $0x74] sm:$0xf] %v1674
          %1707 = vst [vmem:[%s238 + $0x78] sm:$0xf] %v1675
          %1708 = vst [vmem:[%s238 + $0x7c] sm:$0xf] %v1676
        $region48: #{forward.4} parent=35 // pred_fallthru
          _
        %s1709 = smul.u32 32, %s22
        %p1710 = scmp.lt.s32.totalorder %s1709, 63
        %s1711 = scalar_select %p1710, %s1709, 63
        %s1712 = smul.addr %s1711, 4
        %s1713 = scalar_lea.vmem %s4, %s1712
        // Predicated region
        $region49: #{forward.4} parent=35 // pred_check
          %p1714 = pneg %p139
        $region50: #{forward.4} parent=35 // pred_check_branch
          %1716 = sbr.rel (%p1714) target = $region52
        $region51: #{forward.4} parent=35 // pred_region
          %s1717 = smul.u32 32, %s22
        $region52: #{forward.4} parent=35 // pred_fallthru
          _
      $region36: #{forward.4} parent=5 // pred_fallthru
        _
      %p1718 = scmp.le.s32.totalorder 2, %s13
      // Predicated region
      $region53: #{forward.4} parent=5 // pred_check
        %p1719 = pneg %p1718
      $region54: #{forward.4} parent=5 // pred_check_branch
        %1721 = sbr.rel (%p1719) target = $region56
      $region55: #{forward.4} parent=5 // pred_region
        %s1722 = ssub.s32 %s13, 2
        // Predicated region
        $region57: #{forward.4} parent=55 // pred_check
          %p1723 = pneg %p145
        $region58: #{forward.4} parent=55 // pred_check_branch
          %1725 = sbr.rel (%p1723) target = $region60
        $region59: #{forward.4} parent=55 // pred_region
          %s1726 = smul.u32 32, %s24
          %p1727 = scmp.lt.s32.totalorder %s1726, 63
          %s1728 = scalar_select %p1727, %s1726, 63
          %s1729 = smul.addr %s1728, 4
          %s1730 = scalar_lea.vmem %s4, %s1729
        $region60: #{forward.4} parent=55 // pred_fallthru
          _
      $region56: #{forward.4} parent=5 // pred_fallthru
        _
    $region6: #{forward.4} parent=1 // loop_footer
      %s17 = sadd.s32 1, %s13
    $region7: #{forward.4} parent=1 // loop_footer_branch
      %12 = sbr.rel target = $region3
    $region8: #{forward.4} parent=1 // loop_exit
      _
    %1731 = vsyncpa [#allocation4], 1
    %s1732 = scalar_lea.sflag [#allocation4], 1
    %1733 = vsyncpa %s1732, 1

// kernel: forward.5
$region0: #{forward.5}
  #allocation0 [shape = 'u32[]', space=smem, size = 0x4, offset = 0x4, fixed_abs, tag = 'smem constant byte address 0x4 - core index']
  #allocation1 [shape = 'u32[72,128]{1,0:T(1,128)}', space=vmem, size = 0x9000, scoped, tag = 'internal scratch']
  #allocation2 [shape = 'f32[256,128]{1,0:T(8,128)}', space=vmem, size = 0x20000, scoped, tag = 'scratch operand']
  %s0 = inlined_call_operand.hbm [shape: bf16[512,512], index: 0, kind: input, shape index: {}]
  %s1 = inlined_call_operand.vmem [shape: bf16[512,128], index: 1, kind: input, shape index: {}]
  %s2 = inlined_call_operand.hbm [shape: bf16[512,512], index: 2, kind: input, shape index: {}]
  %s3 = inlined_call_operand.vmem [shape: bf16[512,128], index: 3, kind: input, shape index: {}]
  %s4 = inlined_call_operand.vmem [shape: f32[1,128], index: 4, kind: input, shape index: {}]
  %s5 = inlined_call_operand.vmem [shape: f32[512,128], index: 5, kind: output, shape index: {}]
  %s6 = sld [smem:[#allocation0]]
  $region69: #{forward.5} parent=0
    _
  %s8 = ssub.s32 1, %s6
  %s9 = scalar_select 0, %s8, %s6
  $region1: #{forward.5} parent=0
    #allocation3 [shape = 'u8[524288]{0}', space=vmem, size = 0x80000, scoped, tag = 'input window, operand 0']
    #allocation4 [shape = 's32[2]{0}', space=sflag, size = 0x8, scoped, tag = 'scoped memory for forward.5']
    #allocation5 [shape = 'u8[524288]{0}', space=vmem, size = 0x80000, scoped, tag = 'input window, operand 2']
    #allocation6 [shape = 's32[2]{0}', space=sflag, size = 0x8, scoped, tag = 'scoped memory for forward.5']
    %10 = vsyncpa [#allocation4], 0
    %s11 = scalar_lea.sflag [#allocation4], 1
    %12 = vsyncpa %s11, 0
    %13 = vsyncpa [#allocation6], 0
    %s14 = scalar_lea.sflag [#allocation6], 1
    %15 = vsyncpa %s14, 0
    loop: start=0, step=1, limit=4
    $region2: #{forward.5} parent=1 // loop_pre_header
      _
    $region3: #{forward.5} parent=1 // loop_header
      %s17 = sphi 0, %s21
      %p18 = scmp.ge.s32.totalorder %s17, 4
      %s24 = sphi 0, %s36
      %s25 = sphi 0, %s32
      %s26 = sphi 0, %s24
      %s27 = sphi 0, %s25
      %s28 = sphi 0, %s26
      %s29 = sphi 0, %s27
      %s41 = sphi 0, %s43
      %s44 = sphi 0, %s41
      %s45 = sphi 0, %s44
      %s61 = sphi 0, %s45
      %s65 = sphi 0, %s65
      %s67 = sphi 0, %s65
      %s68 = sphi 0, %s67
      %s82 = sphi 0, %s68
      %s90 = sphi 0, %s92
      %s93 = sphi 0, %s90
      %s94 = sphi 0, %s93
      %s110 = sphi 0, %s94
      %s114 = sphi 0, %s114
      %s116 = sphi 0, %s114
      %s117 = sphi 0, %s116
      %s131 = sphi 0, %s117
      %s135 = sphi 0, %s135
      %s137 = sphi 0, %s135
      %s138 = sphi 0, %s137
      %s152 = sphi 0, %s138
      %s158 = sphi 0, %s160
      %s161 = sphi 0, %s158
      %s162 = sphi 0, %s161
      %s178 = sphi 0, %s162
    $region4: #{forward.5} parent=1 // loop_header_branch
      %20 = sbr.rel (%p18) target = $region8
    $region5: #{forward.5} parent=1 // loop_body
      %s22 = ssub.s32 %s17, 1
      %s23 = ssub.s32 %s17, 2
      %s30 = sadd.s32 1, %s25
      %p31 = scmp.ge.s32.totalorder %s30, 1
      %s32 = scalar_select %p31, 0, %s30
      %s33 = sadd.s32 1, %s24
      %s34 = scalar_select %p31, %s33, %s24
      %p35 = scmp.ge.s32.totalorder %s34, 2
      %s36 = scalar_select %p35, 0, %s34
      %s37 = ssub.s32 %s24, %s36
      %s38 = ssub.s32 %s25, %s32
      %s39 = sor.u32 %s37, %s38
      %p40 = scmp.eq.s32.totalorder %s39, 0
      %s42 = sadd.s32 %s41, 1
      %s43 = scalar_select %p40, %s41, %s42
      %p46 = pneg %p40
      %p47 = scmp.eq.s32.totalorder %s17, 1
      %p48 = por %p46, %p47
      %p49 = scmp.ne.s32.totalorder %s41, %s44
      %p50 = scmp.eq.s32.totalorder %s17, 0
      %p51 = por %p49, %p50
      %p52 = scmp.ne.s32.totalorder %s41, %s44
      %p53 = scmp.eq.s32.totalorder %s22, 1
      %p54 = por %p52, %p53
      %p55 = scmp.ne.s32.totalorder %s44, %s45
      %p56 = scmp.eq.s32.totalorder %s22, 0
      %p57 = por %p55, %p56
      %p58 = scmp.ne.s32.totalorder %s44, %s45
      %p59 = scmp.eq.s32.totalorder %s23, 1
      %p60 = por %p58, %p59
      %p62 = scmp.ne.s32.totalorder %s45, %s61
      %p63 = scmp.eq.s32.totalorder %s23, 0
      %p64 = por %p62, %p63
      %s66 = sadd.s32 %s65, 1
      %p69 = scmp.eq.s32.totalorder %s17, 1
      %p70 = scmp.ne.s32.totalorder %s65, %s67
      %p71 = scmp.eq.s32.totalorder %s17, 0
      %p72 = por %p70, %p71
      %p73 = scmp.ne.s32.totalorder %s65, %s67
      %p74 = scmp.eq.s32.totalorder %s22, 1
      %p75 = por %p73, %p74
      %p76 = scmp.ne.s32.totalorder %s67, %s68
      %p77 = scmp.eq.s32.totalorder %s22, 0
      %p78 = por %p76, %p77
      %p79 = scmp.ne.s32.totalorder %s67, %s68
      %p80 = scmp.eq.s32.totalorder %s23, 1
      %p81 = por %p79, %p80
      %p83 = scmp.ne.s32.totalorder %s68, %s82
      %p84 = scmp.eq.s32.totalorder %s23, 0
      %p85 = por %p83, %p84
      %s86 = ssub.s32 %s24, %s36
      %s87 = ssub.s32 %s25, %s32
      %s88 = sor.u32 %s86, %s87
      %p89 = scmp.eq.s32.totalorder %s88, 0
      %s91 = sadd.s32 %s90, 1
      %s92 = scalar_select %p89, %s90, %s91
      %p95 = pneg %p89
      %p96 = scmp.eq.s32.totalorder %s17, 1
      %p97 = por %p95, %p96
      %p98 = scmp.ne.s32.totalorder %s90, %s93
      %p99 = scmp.eq.s32.totalorder %s17, 0
      %p100 = por %p98, %p99
      %p101 = scmp.ne.s32.totalorder %s90, %s93
      %p102 = scmp.eq.s32.totalorder %s22, 1
      %p103 = por %p101, %p102
      %p104 = scmp.ne.s32.totalorder %s93, %s94
      %p105 = scmp.eq.s32.totalorder %s22, 0
      %p106 = por %p104, %p105
      %p107 = scmp.ne.s32.totalorder %s93, %s94
      %p108 = scmp.eq.s32.totalorder %s23, 1
      %p109 = por %p107, %p108
      %p111 = scmp.ne.s32.totalorder %s94, %s110
      %p112 = scmp.eq.s32.totalorder %s23, 0
      %p113 = por %p111, %p112
      %s115 = sadd.s32 %s114, 1
      %p118 = scmp.eq.s32.totalorder %s17, 1
      %p119 = scmp.ne.s32.totalorder %s114, %s116
      %p120 = scmp.eq.s32.totalorder %s17, 0
      %p121 = por %p119, %p120
      %p122 = scmp.ne.s32.totalorder %s114, %s116
      %p123 = scmp.eq.s32.totalorder %s22, 1
      %p124 = por %p122, %p123
      %p125 = scmp.ne.s32.totalorder %s116, %s117
      %p126 = scmp.eq.s32.totalorder %s22, 0
      %p127 = por %p125, %p126
      %p128 = scmp.ne.s32.totalorder %s116, %s117
      %p129 = scmp.eq.s32.totalorder %s23, 1
      %p130 = por %p128, %p129
      %p132 = scmp.ne.s32.totalorder %s117, %s131
      %p133 = scmp.eq.s32.totalorder %s23, 0
      %p134 = por %p132, %p133
      %s136 = sadd.s32 %s135, 1
      %p139 = scmp.eq.s32.totalorder %s17, 1
      %p140 = scmp.ne.s32.totalorder %s135, %s137
      %p141 = scmp.eq.s32.totalorder %s17, 0
      %p142 = por %p140, %p141
      %p143 = scmp.ne.s32.totalorder %s135, %s137
      %p144 = scmp.eq.s32.totalorder %s22, 1
      %p145 = por %p143, %p144
      %p146 = scmp.ne.s32.totalorder %s137, %s138
      %p147 = scmp.eq.s32.totalorder %s22, 0
      %p148 = por %p146, %p147
      %p149 = scmp.ne.s32.totalorder %s137, %s138
      %p150 = scmp.eq.s32.totalorder %s23, 1
      %p151 = por %p149, %p150
      %p153 = scmp.ne.s32.totalorder %s138, %s152
      %p154 = scmp.eq.s32.totalorder %s23, 0
      %p155 = por %p153, %p154
      %s156 = ssub.s32 %s24, %s36
      %p157 = scmp.eq.s32.totalorder %s156, 0
      %s159 = sadd.s32 %s158, 1
      %s160 = scalar_select %p157, %s158, %s159
      %p163 = pneg %p157
      %p164 = scmp.eq.s32.totalorder %s17, 1
      %p165 = por %p163, %p164
      %p166 = scmp.ne.s32.totalorder %s158, %s161
      %p167 = scmp.eq.s32.totalorder %s17, 0
      %p168 = por %p166, %p167
      %p169 = scmp.ne.s32.totalorder %s158, %s161
      %p170 = scmp.eq.s32.totalorder %s22, 1
      %p171 = por %p169, %p170
      %p172 = scmp.ne.s32.totalorder %s161, %s162
      %p173 = scmp.eq.s32.totalorder %s22, 0
      %p174 = por %p172, %p173
      %p175 = scmp.ne.s32.totalorder %s161, %s162
      %p176 = scmp.eq.s32.totalorder %s23, 1
      %p177 = por %p175, %p176
      %p179 = scmp.ne.s32.totalorder %s162, %s178
      %p180 = scmp.eq.s32.totalorder %s23, 0
      %p181 = por %p179, %p180
      %p182 = scmp.le.s32.totalorder 1, %s17
      %p183 = scmp.lt.s32.totalorder %s17, 3
      %p184 = pnand %p182, %p183
      %p185 = pneg %p184
      // Predicated region
      $region9: #{forward.5} parent=5 // pred_check
        _
      $region10: #{forward.5} parent=5 // pred_check_branch
        %187 = sbr.rel (%p184) target = $region12
      $region11: #{forward.5} parent=5 // pred_region
        %s188 = ssub.s32 %s17, 1
        // Predicated region
        $region13: #{forward.5} parent=11 // pred_check
          %p189 = pneg %p78
        $region14: #{forward.5} parent=11 // pred_check_branch
          %191 = sbr.rel (%p189) target = $region16
        $region15: #{forward.5} parent=11 // pred_region
          _
        $region16: #{forward.5} parent=11 // pred_fallthru
          _
        // Predicated region
        $region17: #{forward.5} parent=11 // pred_check
          %p192 = pneg %p127
        $region18: #{forward.5} parent=11 // pred_check_branch
          %194 = sbr.rel (%p192) target = $region20
        $region19: #{forward.5} parent=11 // pred_region
          _
        $region20: #{forward.5} parent=11 // pred_fallthru
          _
        // Predicated region
        $region21: #{forward.5} parent=11 // pred_check
          %p195 = pneg %p148
        $region22: #{forward.5} parent=11 // pred_check_branch
          %197 = sbr.rel (%p195) target = $region24
        $region23: #{forward.5} parent=11 // pred_region
          _
        $region24: #{forward.5} parent=11 // pred_fallthru
          _
      $region12: #{forward.5} parent=5 // pred_fallthru
        _
      %p198 = scmp.lt.s32.totalorder %s17, 2
      // Predicated region
      $region25: #{forward.5} parent=5 // pred_check
        %p199 = pneg %p198
      $region26: #{forward.5} parent=5 // pred_check_branch
        %201 = sbr.rel (%p199) target = $region28
      $region27: #{forward.5} parent=5 // pred_region
        // Predicated region
        $region29: #{forward.5} parent=27 // pred_check
          %p202 = pneg %p51
        $region30: #{forward.5} parent=27 // pred_check_branch
          %204 = sbr.rel (%p202) target = $region32
        $region31: #{forward.5} parent=27 // pred_region
          %s205 = sand.u32 %s41, 1
          %s206 = scalar_lea.sflag [#allocation4], %s205
          %s207 = sand.u32 %s41, 1
          %s208 = smul.addr %s207, 512
          %s209 = scalar_lea.vmem [#allocation3], %s208
          %s210 = smul.u32 32, %s24
          %s211 = smul.u32 4, %s25
          %213 = vsyncadd %s206, 0
          %s214 = smul.addr %s210, 4
          %s215 = sadd.s32 %s211, %s214
          %s216 = smul.addr %s215, 4
          %s217 = scalar_lea.hbm %s0, %s216
          %s218 = sshll.u32 %s217, 4
          %s219 = int_to_ptr.hbm [resolvable:$true] %s218
          %s220 = sshll.u32 %s209, 4
          %s221 = int_to_ptr.vmem [resolvable:$true] %s220
          %226 = dma.hbm_to_vmem [thread:$0]  %s219, 8192, %s221, %s206, 256, 256, 16
        $region32: #{forward.5} parent=27 // pred_fallthru
          _
        // Predicated region
        $region33: #{forward.5} parent=27 // pred_check
          %p227 = pneg %p100
        $region34: #{forward.5} parent=27 // pred_check_branch
          %229 = sbr.rel (%p227) target = $region36
        $region35: #{forward.5} parent=27 // pred_region
          %s230 = sand.u32 %s90, 1
          %s231 = scalar_lea.sflag [#allocation6], %s230
          %s232 = sand.u32 %s90, 1
          %s233 = smul.addr %s232, 512
          %s234 = scalar_lea.vmem [#allocation5], %s233
          %s235 = smul.u32 32, %s24
          %s236 = smul.u32 4, %s25
          %238 = vsyncadd %s231, 0
          %s239 = smul.addr %s235, 4
          %s240 = sadd.s32 %s236, %s239
          %s241 = smul.addr %s240, 4
          %s242 = scalar_lea.hbm %s2, %s241
          %s243 = sshll.u32 %s242, 4
          %s244 = int_to_ptr.hbm [resolvable:$true] %s243
          %s245 = sshll.u32 %s234, 4
          %s246 = int_to_ptr.vmem [resolvable:$true] %s245
          %251 = dma.hbm_to_vmem [thread:$0]  %s244, 8192, %s246, %s231, 256, 256, 16
        $region36: #{forward.5} parent=27 // pred_fallthru
          _
      $region28: #{forward.5} parent=5 // pred_fallthru
        _
      %p252 = scmp.le.s32.totalorder 1, %s17
      %p253 = scmp.lt.s32.totalorder %s17, 3
      %p254 = pnand %p252, %p253
      %p255 = pneg %p254
      // Predicated region
      $region37: #{forward.5} parent=5 // pred_check
        _
      $region38: #{forward.5} parent=5 // pred_check_branch
        %257 = sbr.rel (%p254) target = $region40
      $region39: #{forward.5} parent=5 // pred_region
        %s258 = ssub.s32 %s17, 1
        %s259 = sand.u32 %s44, 1
        %s260 = scalar_lea.sflag [#allocation4], %s259
        %s261 = sand.u32 %s44, 1
        %s262 = smul.addr %s261, 512
        %s263 = scalar_lea.vmem [#allocation3], %s262
        // Predicated region
        $region41: #{forward.5} parent=39 // pred_check
          %p264 = pneg %p57
        $region42: #{forward.5} parent=39 // pred_check_branch
          %266 = sbr.rel (%p264) target = $region44
        $region43: #{forward.5} parent=39 // pred_region
          %268 = dma.done %s260, 8192
        $region44: #{forward.5} parent=39 // pred_fallthru
          _
        %s269 = sand.u32 %s93, 1
        %s270 = scalar_lea.sflag [#allocation6], %s269
        %s271 = sand.u32 %s93, 1
        %s272 = smul.addr %s271, 512
        %s273 = scalar_lea.vmem [#allocation5], %s272
        // Predicated region
        $region45: #{forward.5} parent=39 // pred_check
          %p274 = pneg %p106
        $region46: #{forward.5} parent=39 // pred_check_branch
          %276 = sbr.rel (%p274) target = $region48
        $region47: #{forward.5} parent=39 // pred_region
          %278 = dma.done %s270, 8192
        $region48: #{forward.5} parent=39 // pred_fallthru
          _
        %s279 = sand.u32 %s44, 1
        %s280 = scalar_lea.sflag [#allocation4], %s279
        %s281 = sand.u32 %s44, 1
        %s282 = smul.addr %s281, 512
        %s283 = scalar_lea.vmem [#allocation3], %s282
        %p284 = pneg %p57
        %p285 = pneg %p54
        %p286 = pneg %p78
        %p287 = pneg %p75
        %s288 = sand.u32 %s93, 1
        %s289 = scalar_lea.sflag [#allocation6], %s288
        %s290 = sand.u32 %s93, 1
        %s291 = smul.addr %s290, 512
        %s292 = scalar_lea.vmem [#allocation5], %s291
        %p293 = pneg %p106
        %p294 = pneg %p103
        %p295 = pneg %p127
        %p296 = pneg %p124
        %p297 = pneg %p148
        %p298 = pneg %p145
        %p299 = pneg %p174
        %p300 = pneg %p171
        %s301 = smul.u32 32, %s26
        %p302 = scmp.lt.s32.totalorder %s301, 63
        %s303 = scalar_select %p302, %s301, 63
        %s304 = smul.addr %s303, 8
        %s305 = scalar_lea.vmem %s5, %s304
        %s306 = smul.u32 32, %s26
        %s307 = smul.u32 4, %s27
        %s308 = smul.u32 32, %s26
        %s309 = smul.u32 4, %s27
        %s310 = smul.u32 32, %s26
        %p311 = scmp.lt.s32.totalorder %s310, 63
        %s312 = scalar_select %p311, %s310, 63
        %s313 = smul.addr %s312, 8
        %s314 = scalar_lea.vmem %s5, %s313
        %s315 = smul.u32 32, %s26
        %p316 = scmp.eq.s32.totalorder %s27, 0
        // Predicated region
        $region49: #{forward.5} parent=39 // pred_check
          %p317 = pneg %p316
        $region50: #{forward.5} parent=39 // pred_check_branch
          %319 = sbr.rel (%p317) target = $region52
        $region51: #{forward.5} parent=39 // pred_region
          %320 = vst [vmem:[#allocation2] sm:$0xff] 0.0
          %321 = vst [vmem:[#allocation2 + $0x8] sm:$0xff] 0.0
          %322 = vst [vmem:[#allocation2 + $0x10] sm:$0xff] 0.0
          %323 = vst [vmem:[#allocation2 + $0x18] sm:$0xff] 0.0
          %324 = vst [vmem:[#allocation2 + $0x20] sm:$0xff] 0.0
          %325 = vst [vmem:[#allocation2 + $0x28] sm:$0xff] 0.0
          %326 = vst [vmem:[#allocation2 + $0x30] sm:$0xff] 0.0
          %327 = vst [vmem:[#allocation2 + $0x38] sm:$0xff] 0.0
          %328 = vst [vmem:[#allocation2 + $0x40] sm:$0xff] 0.0
          %329 = vst [vmem:[#allocation2 + $0x48] sm:$0xff] 0.0
          %330 = vst [vmem:[#allocation2 + $0x50] sm:$0xff] 0.0
          %331 = vst [vmem:[#allocation2 + $0x58] sm:$0xff] 0.0
          %332 = vst [vmem:[#allocation2 + $0x60] sm:$0xff] 0.0
          %333 = vst [vmem:[#allocation2 + $0x68] sm:$0xff] 0.0
          %334 = vst [vmem:[#allocation2 + $0x70] sm:$0xff] 0.0
          %335 = vst [vmem:[#allocation2 + $0x78] sm:$0xff] 0.0
          %336 = vst [vmem:[#allocation2 + $0x80] sm:$0xff] 0.0
          %337 = vst [vmem:[#allocation2 + $0x88] sm:$0xff] 0.0
          %338 = vst [vmem:[#allocation2 + $0x90] sm:$0xff] 0.0
          %339 = vst [vmem:[#allocation2 + $0x98] sm:$0xff] 0.0
          %340 = vst [vmem:[#allocation2 + $0xa0] sm:$0xff] 0.0
          %341 = vst [vmem:[#allocation2 + $0xa8] sm:$0xff] 0.0
          %342 = vst [vmem:[#allocation2 + $0xb0] sm:$0xff] 0.0
          %343 = vst [vmem:[#allocation2 + $0xb8] sm:$0xff] 0.0
          %344 = vst [vmem:[#allocation2 + $0xc0] sm:$0xff] 0.0
          %345 = vst [vmem:[#allocation2 + $0xc8] sm:$0xff] 0.0
          %346 = vst [vmem:[#allocation2 + $0xd0] sm:$0xff] 0.0
          %347 = vst [vmem:[#allocation2 + $0xd8] sm:$0xff] 0.0
          %348 = vst [vmem:[#allocation2 + $0xe0] sm:$0xff] 0.0
          %349 = vst [vmem:[#allocation2 + $0xe8] sm:$0xff] 0.0
          %350 = vst [vmem:[#allocation2 + $0xf0] sm:$0xff] 0.0
          %351 = vst [vmem:[#allocation2 + $0xf8] sm:$0xff] 0.0
        $region52: #{forward.5} parent=39 // pred_fallthru
          _
        %s352 = smul.u32 %s27, 512
        %s353 = sshra.s32 %s352, 3
        %s354 = sand.u32 %s352, 7
        %s355 = smul.addr %s353, 4
        %s356 = scalar_lea.vmem %s1, %s355
        %v357 = vld [vmem:[%s356] sm:$0xf]
        %v358 = vld [vmem:[%s356 + $0x4] sm:$0xf]
        %v359 = vld [vmem:[%s356 + $0x8] sm:$0xf]
        %v360 = vld [vmem:[%s356 + $0xc] sm:$0xf]
        %v361 = vld [vmem:[%s356 + $0x10] sm:$0xf]
        %v362 = vld [vmem:[%s356 + $0x14] sm:$0xf]
        %v363 = vld [vmem:[%s356 + $0x18] sm:$0xf]
        %v364 = vld [vmem:[%s356 + $0x1c] sm:$0xf]
        %v365 = vld [vmem:[%s356 + $0x20] sm:$0xf]
        %v366 = vld [vmem:[%s356 + $0x24] sm:$0xf]
        %v367 = vld [vmem:[%s356 + $0x28] sm:$0xf]
        %v368 = vld [vmem:[%s356 + $0x2c] sm:$0xf]
        %v369 = vld [vmem:[%s356 + $0x30] sm:$0xf]
        %v370 = vld [vmem:[%s356 + $0x34] sm:$0xf]
        %v371 = vld [vmem:[%s356 + $0x38] sm:$0xf]
        %v372 = vld [vmem:[%s356 + $0x3c] sm:$0xf]
        %v373 = vld [vmem:[%s356 + $0x40] sm:$0xf]
        %v374 = vld [vmem:[%s356 + $0x44] sm:$0xf]
        %v375 = vld [vmem:[%s356 + $0x48] sm:$0xf]
        %v376 = vld [vmem:[%s356 + $0x4c] sm:$0xf]
        %v377 = vld [vmem:[%s356 + $0x50] sm:$0xf]
        %v378 = vld [vmem:[%s356 + $0x54] sm:$0xf]
        %v379 = vld [vmem:[%s356 + $0x58] sm:$0xf]
        %v380 = vld [vmem:[%s356 + $0x5c] sm:$0xf]
        %v381 = vld [vmem:[%s356 + $0x60] sm:$0xf]
        %v382 = vld [vmem:[%s356 + $0x64] sm:$0xf]
        %v383 = vld [vmem:[%s356 + $0x68] sm:$0xf]
        %v384 = vld [vmem:[%s356 + $0x6c] sm:$0xf]
        %v385 = vld [vmem:[%s356 + $0x70] sm:$0xf]
        %v386 = vld [vmem:[%s356 + $0x74] sm:$0xf]
        %v387 = vld [vmem:[%s356 + $0x78] sm:$0xf]
        %v388 = vld [vmem:[%s356 + $0x7c] sm:$0xf]
        %v389 = vld [vmem:[%s356 + $0x80] sm:$0xf]
        %v390 = vld [vmem:[%s356 + $0x84] sm:$0xf]
        %v391 = vld [vmem:[%s356 + $0x88] sm:$0xf]
        %v392 = vld [vmem:[%s356 + $0x8c] sm:$0xf]
        %v393 = vld [vmem:[%s356 + $0x90] sm:$0xf]
        %v394 = vld [vmem:[%s356 + $0x94] sm:$0xf]
        %v395 = vld [vmem:[%s356 + $0x98] sm:$0xf]
        %v396 = vld [vmem:[%s356 + $0x9c] sm:$0xf]
        %v397 = vld [vmem:[%s356 + $0xa0] sm:$0xf]
        %v398 = vld [vmem:[%s356 + $0xa4] sm:$0xf]
        %v399 = vld [vmem:[%s356 + $0xa8] sm:$0xf]
        %v400 = vld [vmem:[%s356 + $0xac] sm:$0xf]
        %v401 = vld [vmem:[%s356 + $0xb0] sm:$0xf]
        %v402 = vld [vmem:[%s356 + $0xb4] sm:$0xf]
        %v403 = vld [vmem:[%s356 + $0xb8] sm:$0xf]
        %v404 = vld [vmem:[%s356 + $0xbc] sm:$0xf]
        %v405 = vld [vmem:[%s356 + $0xc0] sm:$0xf]
        %v406 = vld [vmem:[%s356 + $0xc4] sm:$0xf]
        %v407 = vld [vmem:[%s356 + $0xc8] sm:$0xf]
        %v408 = vld [vmem:[%s356 + $0xcc] sm:$0xf]
        %v409 = vld [vmem:[%s356 + $0xd0] sm:$0xf]
        %v410 = vld [vmem:[%s356 + $0xd4] sm:$0xf]
        %v411 = vld [vmem:[%s356 + $0xd8] sm:$0xf]
        %v412 = vld [vmem:[%s356 + $0xdc] sm:$0xf]
        %v413 = vld [vmem:[%s356 + $0xe0] sm:$0xf]
        %v414 = vld [vmem:[%s356 + $0xe4] sm:$0xf]
        %v415 = vld [vmem:[%s356 + $0xe8] sm:$0xf]
        %v416 = vld [vmem:[%s356 + $0xec] sm:$0xf]
        %v417 = vld [vmem:[%s356 + $0xf0] sm:$0xf]
        %v418 = vld [vmem:[%s356 + $0xf4] sm:$0xf]
        %v419 = vld [vmem:[%s356 + $0xf8] sm:$0xf]
        %v420 = vld [vmem:[%s356 + $0xfc] sm:$0xf]
        %s421 = smul.addr %s353, 4
        %s422 = scalar_lea.vmem %s3, %s421
        %v423 = vld [vmem:[%s422] sm:$0xf]
        %v424 = vld [vmem:[%s422 + $0x4] sm:$0xf]
        %v425 = vld [vmem:[%s422 + $0x8] sm:$0xf]
        %v426 = vld [vmem:[%s422 + $0xc] sm:$0xf]
        %v427 = vld [vmem:[%s422 + $0x10] sm:$0xf]
        %v428 = vld [vmem:[%s422 + $0x14] sm:$0xf]
        %v429 = vld [vmem:[%s422 + $0x18] sm:$0xf]
        %v430 = vld [vmem:[%s422 + $0x1c] sm:$0xf]
        %v431 = vld [vmem:[%s422 + $0x20] sm:$0xf]
        %v432 = vld [vmem:[%s422 + $0x24] sm:$0xf]
        %v433 = vld [vmem:[%s422 + $0x28] sm:$0xf]
        %v434 = vld [vmem:[%s422 + $0x2c] sm:$0xf]
        %v435 = vld [vmem:[%s422 + $0x30] sm:$0xf]
        %v436 = vld [vmem:[%s422 + $0x34] sm:$0xf]
        %v437 = vld [vmem:[%s422 + $0x38] sm:$0xf]
        %v438 = vld [vmem:[%s422 + $0x3c] sm:$0xf]
        %v439 = vld [vmem:[%s422 + $0x40] sm:$0xf]
        %v440 = vld [vmem:[%s422 + $0x44] sm:$0xf]
        %v441 = vld [vmem:[%s422 + $0x48] sm:$0xf]
        %v442 = vld [vmem:[%s422 + $0x4c] sm:$0xf]
        %v443 = vld [vmem:[%s422 + $0x50] sm:$0xf]
        %v444 = vld [vmem:[%s422 + $0x54] sm:$0xf]
        %v445 = vld [vmem:[%s422 + $0x58] sm:$0xf]
        %v446 = vld [vmem:[%s422 + $0x5c] sm:$0xf]
        %v447 = vld [vmem:[%s422 + $0x60] sm:$0xf]
        %v448 = vld [vmem:[%s422 + $0x64] sm:$0xf]
        %v449 = vld [vmem:[%s422 + $0x68] sm:$0xf]
        %v450 = vld [vmem:[%s422 + $0x6c] sm:$0xf]
        %v451 = vld [vmem:[%s422 + $0x70] sm:$0xf]
        %v452 = vld [vmem:[%s422 + $0x74] sm:$0xf]
        %v453 = vld [vmem:[%s422 + $0x78] sm:$0xf]
        %v454 = vld [vmem:[%s422 + $0x7c] sm:$0xf]
        %v455 = vld [vmem:[%s422 + $0x80] sm:$0xf]
        %v456 = vld [vmem:[%s422 + $0x84] sm:$0xf]
        %v457 = vld [vmem:[%s422 + $0x88] sm:$0xf]
        %v458 = vld [vmem:[%s422 + $0x8c] sm:$0xf]
        %v459 = vld [vmem:[%s422 + $0x90] sm:$0xf]
        %v460 = vld [vmem:[%s422 + $0x94] sm:$0xf]
        %v461 = vld [vmem:[%s422 + $0x98] sm:$0xf]
        %v462 = vld [vmem:[%s422 + $0x9c] sm:$0xf]
        %v463 = vld [vmem:[%s422 + $0xa0] sm:$0xf]
        %v464 = vld [vmem:[%s422 + $0xa4] sm:$0xf]
        %v465 = vld [vmem:[%s422 + $0xa8] sm:$0xf]
        %v466 = vld [vmem:[%s422 + $0xac] sm:$0xf]
        %v467 = vld [vmem:[%s422 + $0xb0] sm:$0xf]
        %v468 = vld [vmem:[%s422 + $0xb4] sm:$0xf]
        %v469 = vld [vmem:[%s422 + $0xb8] sm:$0xf]
        %v470 = vld [vmem:[%s422 + $0xbc] sm:$0xf]
        %v471 = vld [vmem:[%s422 + $0xc0] sm:$0xf]
        %v472 = vld [vmem:[%s422 + $0xc4] sm:$0xf]
        %v473 = vld [vmem:[%s422 + $0xc8] sm:$0xf]
        %v474 = vld [vmem:[%s422 + $0xcc] sm:$0xf]
        %v475 = vld [vmem:[%s422 + $0xd0] sm:$0xf]
        %v476 = vld [vmem:[%s422 + $0xd4] sm:$0xf]
        %v477 = vld [vmem:[%s422 + $0xd8] sm:$0xf]
        %v478 = vld [vmem:[%s422 + $0xdc] sm:$0xf]
        %v479 = vld [vmem:[%s422 + $0xe0] sm:$0xf]
        %v480 = vld [vmem:[%s422 + $0xe4] sm:$0xf]
        %v481 = vld [vmem:[%s422 + $0xe8] sm:$0xf]
        %v482 = vld [vmem:[%s422 + $0xec] sm:$0xf]
        %v483 = vld [vmem:[%s422 + $0xf0] sm:$0xf]
        %v484 = vld [vmem:[%s422 + $0xf4] sm:$0xf]
        %v485 = vld [vmem:[%s422 + $0xf8] sm:$0xf]
        %v486 = vld [vmem:[%s422 + $0xfc] sm:$0xf]
        %v487 = vld [vmem:[#allocation2] sm:$0xff]
        %v488 = vld [vmem:[#allocation2 + $0x8] sm:$0xff]
        %v489 = vld [vmem:[#allocation2 + $0x10] sm:$0xff]
        %v490 = vld [vmem:[#allocation2 + $0x18] sm:$0xff]
        %v491 = vld [vmem:[#allocation2 + $0x20] sm:$0xff]
        %v492 = vld [vmem:[#allocation2 + $0x28] sm:$0xff]
        %v493 = vld [vmem:[#allocation2 + $0x30] sm:$0xff]
        %v494 = vld [vmem:[#allocation2 + $0x38] sm:$0xff]
        %v495 = vld [vmem:[#allocation2 + $0x40] sm:$0xff]
        %v496 = vld [vmem:[#allocation2 + $0x48] sm:$0xff]
        %v497 = vld [vmem:[#allocation2 + $0x50] sm:$0xff]
        %v498 = vld [vmem:[#allocation2 + $0x58] sm:$0xff]
        %v499 = vld [vmem:[#allocation2 + $0x60] sm:$0xff]
        %v500 = vld [vmem:[#allocation2 + $0x68] sm:$0xff]
        %v501 = vld [vmem:[#allocation2 + $0x70] sm:$0xff]
        %v502 = vld [vmem:[#allocation2 + $0x78] sm:$0xff]
        %v503 = vld [vmem:[#allocation2 + $0x80] sm:$0xff]
        %v504 = vld [vmem:[#allocation2 + $0x88] sm:$0xff]
        %v505 = vld [vmem:[#allocation2 + $0x90] sm:$0xff]
        %v506 = vld [vmem:[#allocation2 + $0x98] sm:$0xff]
        %v507 = vld [vmem:[#allocation2 + $0xa0] sm:$0xff]
        %v508 = vld [vmem:[#allocation2 + $0xa8] sm:$0xff]
        %v509 = vld [vmem:[#allocation2 + $0xb0] sm:$0xff]
        %v510 = vld [vmem:[#allocation2 + $0xb8] sm:$0xff]
        %v511 = vld [vmem:[#allocation2 + $0xc0] sm:$0xff]
        %v512 = vld [vmem:[#allocation2 + $0xc8] sm:$0xff]
        %v513 = vld [vmem:[#allocation2 + $0xd0] sm:$0xff]
        %v514 = vld [vmem:[#allocation2 + $0xd8] sm:$0xff]
        %v515 = vld [vmem:[#allocation2 + $0xe0] sm:$0xff]
        %v516 = vld [vmem:[#allocation2 + $0xe8] sm:$0xff]
        %v517 = vld [vmem:[#allocation2 + $0xf0] sm:$0xff]
        %v518 = vld [vmem:[#allocation2 + $0xf8] sm:$0xff]
        %v519 = vld [vmem:[%s263] sm:$0xff]
        %v520 = vld [vmem:[%s263 + $0x8] sm:$0xff]
        %v521 = vld [vmem:[%s263 + $0x10] sm:$0xff]
        %v522 = vld [vmem:[%s263 + $0x18] sm:$0xff]
        %v523 = vld [vmem:[%s263 + $0x20] sm:$0xff]
        %v524 = vld [vmem:[%s263 + $0x28] sm:$0xff]
        %v525 = vld [vmem:[%s263 + $0x30] sm:$0xff]
        %v526 = vld [vmem:[%s263 + $0x38] sm:$0xff]
        %v527 = vld [vmem:[%s263 + $0x40] sm:$0xff]
        %v528 = vld [vmem:[%s263 + $0x48] sm:$0xff]
        %v529 = vld [vmem:[%s263 + $0x50] sm:$0xff]
        %v530 = vld [vmem:[%s263 + $0x58] sm:$0xff]
        %v531 = vld [vmem:[%s263 + $0x60] sm:$0xff]
        %v532 = vld [vmem:[%s263 + $0x68] sm:$0xff]
        %v533 = vld [vmem:[%s263 + $0x70] sm:$0xff]
        %v534 = vld [vmem:[%s263 + $0x78] sm:$0xff]
        %v535 = vld [vmem:[%s263 + $0x80] sm:$0xff]
        %v536 = vld [vmem:[%s263 + $0x88] sm:$0xff]
        %v537 = vld [vmem:[%s263 + $0x90] sm:$0xff]
        %v538 = vld [vmem:[%s263 + $0x98] sm:$0xff]
        %v539 = vld [vmem:[%s263 + $0xa0] sm:$0xff]
        %v540 = vld [vmem:[%s263 + $0xa8] sm:$0xff]
        %v541 = vld [vmem:[%s263 + $0xb0] sm:$0xff]
        %v542 = vld [vmem:[%s263 + $0xb8] sm:$0xff]
        %v543 = vld [vmem:[%s263 + $0xc0] sm:$0xff]
        %v544 = vld [vmem:[%s263 + $0xc8] sm:$0xff]
        %v545 = vld [vmem:[%s263 + $0xd0] sm:$0xff]
        %v546 = vld [vmem:[%s263 + $0xd8] sm:$0xff]
        %v547 = vld [vmem:[%s263 + $0xe0] sm:$0xff]
        %v548 = vld [vmem:[%s263 + $0xe8] sm:$0xff]
        %v549 = vld [vmem:[%s263 + $0xf0] sm:$0xff]
        %v550 = vld [vmem:[%s263 + $0xf8] sm:$0xff]
        %v551 = vld [vmem:[%s263 + $0x100] sm:$0xff]
        %v552 = vld [vmem:[%s263 + $0x108] sm:$0xff]
        %v553 = vld [vmem:[%s263 + $0x110] sm:$0xff]
        %v554 = vld [vmem:[%s263 + $0x118] sm:$0xff]
        %v555 = vld [vmem:[%s263 + $0x120] sm:$0xff]
        %v556 = vld [vmem:[%s263 + $0x128] sm:$0xff]
        %v557 = vld [vmem:[%s263 + $0x130] sm:$0xff]
        %v558 = vld [vmem:[%s263 + $0x138] sm:$0xff]
        %v559 = vld [vmem:[%s263 + $0x140] sm:$0xff]
        %v560 = vld [vmem:[%s263 + $0x148] sm:$0xff]
        %v561 = vld [vmem:[%s263 + $0x150] sm:$0xff]
        %v562 = vld [vmem:[%s263 + $0x158] sm:$0xff]
        %v563 = vld [vmem:[%s263 + $0x160] sm:$0xff]
        %v564 = vld [vmem:[%s263 + $0x168] sm:$0xff]
        %v565 = vld [vmem:[%s263 + $0x170] sm:$0xff]
        %v566 = vld [vmem:[%s263 + $0x178] sm:$0xff]
        %v567 = vld [vmem:[%s263 + $0x180] sm:$0xff]
        %v568 = vld [vmem:[%s263 + $0x188] sm:$0xff]
        %v569 = vld [vmem:[%s263 + $0x190] sm:$0xff]
        %v570 = vld [vmem:[%s263 + $0x198] sm:$0xff]
        %v571 = vld [vmem:[%s263 + $0x1a0] sm:$0xff]
        %v572 = vld [vmem:[%s263 + $0x1a8] sm:$0xff]
        %v573 = vld [vmem:[%s263 + $0x1b0] sm:$0xff]
        %v574 = vld [vmem:[%s263 + $0x1b8] sm:$0xff]
        %v575 = vld [vmem:[%s263 + $0x1c0] sm:$0xff]
        %v576 = vld [vmem:[%s263 + $0x1c8] sm:$0xff]
        %v577 = vld [vmem:[%s263 + $0x1d0] sm:$0xff]
        %v578 = vld [vmem:[%s263 + $0x1d8] sm:$0xff]
        %v579 = vld [vmem:[%s263 + $0x1e0] sm:$0xff]
        %v580 = vld [vmem:[%s263 + $0x1e8] sm:$0xff]
        %v581 = vld [vmem:[%s263 + $0x1f0] sm:$0xff]
        %v582 = vld [vmem:[%s263 + $0x1f8] sm:$0xff]
        %v583 = vld [vmem:[%s273] sm:$0xff]
        %v584 = vld [vmem:[%s273 + $0x8] sm:$0xff]
        %v585 = vld [vmem:[%s273 + $0x10] sm:$0xff]
        %v586 = vld [vmem:[%s273 + $0x18] sm:$0xff]
        %v587 = vld [vmem:[%s273 + $0x20] sm:$0xff]
        %v588 = vld [vmem:[%s273 + $0x28] sm:$0xff]
        %v589 = vld [vmem:[%s273 + $0x30] sm:$0xff]
        %v590 = vld [vmem:[%s273 + $0x38] sm:$0xff]
        %v591 = vld [vmem:[%s273 + $0x40] sm:$0xff]
        %v592 = vld [vmem:[%s273 + $0x48] sm:$0xff]
        %v593 = vld [vmem:[%s273 + $0x50] sm:$0xff]
        %v594 = vld [vmem:[%s273 + $0x58] sm:$0xff]
        %v595 = vld [vmem:[%s273 + $0x60] sm:$0xff]
        %v596 = vld [vmem:[%s273 + $0x68] sm:$0xff]
        %v597 = vld [vmem:[%s273 + $0x70] sm:$0xff]
        %v598 = vld [vmem:[%s273 + $0x78] sm:$0xff]
        %v599 = vld [vmem:[%s273 + $0x80] sm:$0xff]
        %v600 = vld [vmem:[%s273 + $0x88] sm:$0xff]
        %v601 = vld [vmem:[%s273 + $0x90] sm:$0xff]
        %v602 = vld [vmem:[%s273 + $0x98] sm:$0xff]
        %v603 = vld [vmem:[%s273 + $0xa0] sm:$0xff]
        %v604 = vld [vmem:[%s273 + $0xa8] sm:$0xff]
        %v605 = vld [vmem:[%s273 + $0xb0] sm:$0xff]
        %v606 = vld [vmem:[%s273 + $0xb8] sm:$0xff]
        %v607 = vld [vmem:[%s273 + $0xc0] sm:$0xff]
        %v608 = vld [vmem:[%s273 + $0xc8] sm:$0xff]
        %v609 = vld [vmem:[%s273 + $0xd0] sm:$0xff]
        %v610 = vld [vmem:[%s273 + $0xd8] sm:$0xff]
        %v611 = vld [vmem:[%s273 + $0xe0] sm:$0xff]
        %v612 = vld [vmem:[%s273 + $0xe8] sm:$0xff]
        %v613 = vld [vmem:[%s273 + $0xf0] sm:$0xff]
        %v614 = vld [vmem:[%s273 + $0xf8] sm:$0xff]
        %v615 = vld [vmem:[%s273 + $0x100] sm:$0xff]
        %v616 = vld [vmem:[%s273 + $0x108] sm:$0xff]
        %v617 = vld [vmem:[%s273 + $0x110] sm:$0xff]
        %v618 = vld [vmem:[%s273 + $0x118] sm:$0xff]
        %v619 = vld [vmem:[%s273 + $0x120] sm:$0xff]
        %v620 = vld [vmem:[%s273 + $0x128] sm:$0xff]
        %v621 = vld [vmem:[%s273 + $0x130] sm:$0xff]
        %v622 = vld [vmem:[%s273 + $0x138] sm:$0xff]
        %v623 = vld [vmem:[%s273 + $0x140] sm:$0xff]
        %v624 = vld [vmem:[%s273 + $0x148] sm:$0xff]
        %v625 = vld [vmem:[%s273 + $0x150] sm:$0xff]
        %v626 = vld [vmem:[%s273 + $0x158] sm:$0xff]
        %v627 = vld [vmem:[%s273 + $0x160] sm:$0xff]
        %v628 = vld [vmem:[%s273 + $0x168] sm:$0xff]
        %v629 = vld [vmem:[%s273 + $0x170] sm:$0xff]
        %v630 = vld [vmem:[%s273 + $0x178] sm:$0xff]
        %v631 = vld [vmem:[%s273 + $0x180] sm:$0xff]
        %v632 = vld [vmem:[%s273 + $0x188] sm:$0xff]
        %v633 = vld [vmem:[%s273 + $0x190] sm:$0xff]
        %v634 = vld [vmem:[%s273 + $0x198] sm:$0xff]
        %v635 = vld [vmem:[%s273 + $0x1a0] sm:$0xff]
        %v636 = vld [vmem:[%s273 + $0x1a8] sm:$0xff]
        %v637 = vld [vmem:[%s273 + $0x1b0] sm:$0xff]
        %v638 = vld [vmem:[%s273 + $0x1b8] sm:$0xff]
        %v639 = vld [vmem:[%s273 + $0x1c0] sm:$0xff]
        %v640 = vld [vmem:[%s273 + $0x1c8] sm:$0xff]
        %v641 = vld [vmem:[%s273 + $0x1d0] sm:$0xff]
        %v642 = vld [vmem:[%s273 + $0x1d8] sm:$0xff]
        %v643 = vld [vmem:[%s273 + $0x1e0] sm:$0xff]
        %v644 = vld [vmem:[%s273 + $0x1e8] sm:$0xff]
        %v645 = vld [vmem:[%s273 + $0x1f0] sm:$0xff]
        %v646 = vld [vmem:[%s273 + $0x1f8] sm:$0xff]
        %v711 = vunpack.c.l.b16 %v583
        %v712 = vunpack.c.h.b16 %v583
        %v713 = vunpack.c.l.b16 %v584
        %v714 = vunpack.c.h.b16 %v584
        %v715 = vunpack.c.l.b16 %v585
        %v716 = vunpack.c.h.b16 %v585
        %v717 = vunpack.c.l.b16 %v586
        %v718 = vunpack.c.h.b16 %v586
        %v719 = vunpack.c.l.b16 %v587
        %v720 = vunpack.c.h.b16 %v587
        %v721 = vunpack.c.l.b16 %v588
        %v722 = vunpack.c.h.b16 %v588
        %v723 = vunpack.c.l.b16 %v589
        %v724 = vunpack.c.h.b16 %v589
        %v725 = vunpack.c.l.b16 %v590
        %v726 = vunpack.c.h.b16 %v590
        %v727 = vunpack.c.l.b16 %v591
        %v728 = vunpack.c.h.b16 %v591
        %v729 = vunpack.c.l.b16 %v592
        %v730 = vunpack.c.h.b16 %v592
        %v731 = vunpack.c.l.b16 %v593
        %v732 = vunpack.c.h.b16 %v593
        %v733 = vunpack.c.l.b16 %v594
        %v734 = vunpack.c.h.b16 %v594
        %v735 = vunpack.c.l.b16 %v595
        %v736 = vunpack.c.h.b16 %v595
        %v737 = vunpack.c.l.b16 %v596
        %v738 = vunpack.c.h.b16 %v596
        %v739 = vunpack.c.l.b16 %v597
        %v740 = vunpack.c.h.b16 %v597
        %v741 = vunpack.c.l.b16 %v598
        %v742 = vunpack.c.h.b16 %v598
        %v743 = vunpack.c.l.b16 %v599
        %v744 = vunpack.c.h.b16 %v599
        %v745 = vunpack.c.l.b16 %v600
        %v746 = vunpack.c.h.b16 %v600
        %v747 = vunpack.c.l.b16 %v601
        %v748 = vunpack.c.h.b16 %v601
        %v749 = vunpack.c.l.b16 %v602
        %v750 = vunpack.c.h.b16 %v602
        %v751 = vunpack.c.l.b16 %v603
        %v752 = vunpack.c.h.b16 %v603
        %v753 = vunpack.c.l.b16 %v604
        %v754 = vunpack.c.h.b16 %v604
        %v755 = vunpack.c.l.b16 %v605
        %v756 = vunpack.c.h.b16 %v605
        %v757 = vunpack.c.l.b16 %v606
        %v758 = vunpack.c.h.b16 %v606
        %v759 = vunpack.c.l.b16 %v607
        %v760 = vunpack.c.h.b16 %v607
        %v761 = vunpack.c.l.b16 %v608
        %v762 = vunpack.c.h.b16 %v608
        %v763 = vunpack.c.l.b16 %v609
        %v764 = vunpack.c.h.b16 %v609
        %v765 = vunpack.c.l.b16 %v610
        %v766 = vunpack.c.h.b16 %v610
        %v767 = vunpack.c.l.b16 %v611
        %v768 = vunpack.c.h.b16 %v611
        %v769 = vunpack.c.l.b16 %v612
        %v770 = vunpack.c.h.b16 %v612
        %v771 = vunpack.c.l.b16 %v613
        %v772 = vunpack.c.h.b16 %v613
        %v773 = vunpack.c.l.b16 %v614
        %v774 = vunpack.c.h.b16 %v614
        %v775 = vunpack.c.l.b16 %v615
        %v776 = vunpack.c.h.b16 %v615
        %v777 = vunpack.c.l.b16 %v616
        %v778 = vunpack.c.h.b16 %v616
        %v779 = vunpack.c.l.b16 %v617
        %v780 = vunpack.c.h.b16 %v617
        %v781 = vunpack.c.l.b16 %v618
        %v782 = vunpack.c.h.b16 %v618
        %v783 = vunpack.c.l.b16 %v619
        %v784 = vunpack.c.h.b16 %v619
        %v785 = vunpack.c.l.b16 %v620
        %v786 = vunpack.c.h.b16 %v620
        %v787 = vunpack.c.l.b16 %v621
        %v788 = vunpack.c.h.b16 %v621
        %v789 = vunpack.c.l.b16 %v622
        %v790 = vunpack.c.h.b16 %v622
        %v791 = vunpack.c.l.b16 %v623
        %v792 = vunpack.c.h.b16 %v623
        %v793 = vunpack.c.l.b16 %v624
        %v794 = vunpack.c.h.b16 %v624
        %v795 = vunpack.c.l.b16 %v625
        %v796 = vunpack.c.h.b16 %v625
        %v797 = vunpack.c.l.b16 %v626
        %v798 = vunpack.c.h.b16 %v626
        %v799 = vunpack.c.l.b16 %v627
        %v800 = vunpack.c.h.b16 %v627
        %v801 = vunpack.c.l.b16 %v628
        %v802 = vunpack.c.h.b16 %v628
        %v803 = vunpack.c.l.b16 %v629
        %v804 = vunpack.c.h.b16 %v629
        %v805 = vunpack.c.l.b16 %v630
        %v806 = vunpack.c.h.b16 %v630
        %v807 = vunpack.c.l.b16 %v631
        %v808 = vunpack.c.h.b16 %v631
        %v809 = vunpack.c.l.b16 %v632
        %v810 = vunpack.c.h.b16 %v632
        %v811 = vunpack.c.l.b16 %v633
        %v812 = vunpack.c.h.b16 %v633
        %v813 = vunpack.c.l.b16 %v634
        %v814 = vunpack.c.h.b16 %v634
        %v815 = vunpack.c.l.b16 %v635
        %v816 = vunpack.c.h.b16 %v635
        %v817 = vunpack.c.l.b16 %v636
        %v818 = vunpack.c.h.b16 %v636
        %v819 = vunpack.c.l.b16 %v637
        %v820 = vunpack.c.h.b16 %v637
        %v821 = vunpack.c.l.b16 %v638
        %v822 = vunpack.c.h.b16 %v638
        %v823 = vunpack.c.l.b16 %v639
        %v824 = vunpack.c.h.b16 %v639
        %v825 = vunpack.c.l.b16 %v640
        %v826 = vunpack.c.h.b16 %v640
        %v827 = vunpack.c.l.b16 %v641
        %v828 = vunpack.c.h.b16 %v641
        %v829 = vunpack.c.l.b16 %v642
        %v830 = vunpack.c.h.b16 %v642
        %v831 = vunpack.c.l.b16 %v643
        %v832 = vunpack.c.h.b16 %v643
        %v833 = vunpack.c.l.b16 %v644
        %v834 = vunpack.c.h.b16 %v644
        %v835 = vunpack.c.l.b16 %v645
        %v836 = vunpack.c.h.b16 %v645
        %v837 = vunpack.c.l.b16 %v646
        %v838 = vunpack.c.h.b16 %v646
        %v839 = vpack.c.b16 %v715, %v711
        %v840 = vpack.c.b16 %v716, %v712
        %v841 = vpack.c.b16 %v717, %v713
        %v842 = vpack.c.b16 %v718, %v714
        %v843 = vpack.c.b16 %v723, %v719
        %v844 = vpack.c.b16 %v724, %v720
        %v845 = vpack.c.b16 %v725, %v721
        %v846 = vpack.c.b16 %v726, %v722
        %v847 = vpack.c.b16 %v731, %v727
        %v848 = vpack.c.b16 %v732, %v728
        %v849 = vpack.c.b16 %v733, %v729
        %v850 = vpack.c.b16 %v734, %v730
        %v851 = vpack.c.b16 %v739, %v735
        %v852 = vpack.c.b16 %v740, %v736
        %v853 = vpack.c.b16 %v741, %v737
        %v854 = vpack.c.b16 %v742, %v738
        %v855 = vpack.c.b16 %v747, %v743
        %v856 = vpack.c.b16 %v748, %v744
        %v857 = vpack.c.b16 %v749, %v745
        %v858 = vpack.c.b16 %v750, %v746
        %v859 = vpack.c.b16 %v755, %v751
        %v860 = vpack.c.b16 %v756, %v752
        %v861 = vpack.c.b16 %v757, %v753
        %v862 = vpack.c.b16 %v758, %v754
        %v863 = vpack.c.b16 %v763, %v759
        %v864 = vpack.c.b16 %v764, %v760
        %v865 = vpack.c.b16 %v765, %v761
        %v866 = vpack.c.b16 %v766, %v762
        %v867 = vpack.c.b16 %v771, %v767
        %v868 = vpack.c.b16 %v772, %v768
        %v869 = vpack.c.b16 %v773, %v769
        %v870 = vpack.c.b16 %v774, %v770
        %v871 = vpack.c.b16 %v779, %v775
        %v872 = vpack.c.b16 %v780, %v776
        %v873 = vpack.c.b16 %v781, %v777
        %v874 = vpack.c.b16 %v782, %v778
        %v875 = vpack.c.b16 %v787, %v783
        %v876 = vpack.c.b16 %v788, %v784
        %v877 = vpack.c.b16 %v789, %v785
        %v878 = vpack.c.b16 %v790, %v786
        %v879 = vpack.c.b16 %v795, %v791
        %v880 = vpack.c.b16 %v796, %v792
        %v881 = vpack.c.b16 %v797, %v793
        %v882 = vpack.c.b16 %v798, %v794
        %v883 = vpack.c.b16 %v803, %v799
        %v884 = vpack.c.b16 %v804, %v800
        %v885 = vpack.c.b16 %v805, %v801
        %v886 = vpack.c.b16 %v806, %v802
        %v887 = vpack.c.b16 %v811, %v807
        %v888 = vpack.c.b16 %v812, %v808
        %v889 = vpack.c.b16 %v813, %v809
        %v890 = vpack.c.b16 %v814, %v810
        %v891 = vpack.c.b16 %v819, %v815
        %v892 = vpack.c.b16 %v820, %v816
        %v893 = vpack.c.b16 %v821, %v817
        %v894 = vpack.c.b16 %v822, %v818
        %v895 = vpack.c.b16 %v827, %v823
        %v896 = vpack.c.b16 %v828, %v824
        %v897 = vpack.c.b16 %v829, %v825
        %v898 = vpack.c.b16 %v830, %v826
        %v899 = vpack.c.b16 %v835, %v831
        %v900 = vpack.c.b16 %v836, %v832
        %v901 = vpack.c.b16 %v837, %v833
        %v902 = vpack.c.b16 %v838, %v834
        %v1031 = vunpack.c.l.b16 %v423
        %v1032 = vunpack.c.l.b16 %v424
        %v1033 = vunpack.c.l.b16 %v425
        %v1034 = vunpack.c.l.b16 %v426
        %v1035 = vunpack.c.l.b16 %v427
        %v1036 = vunpack.c.l.b16 %v428
        %v1037 = vunpack.c.l.b16 %v429
        %v1038 = vunpack.c.l.b16 %v430
        %v1039 = vunpack.c.l.b16 %v431
        %v1040 = vunpack.c.l.b16 %v432
        %v1041 = vunpack.c.l.b16 %v433
        %v1042 = vunpack.c.l.b16 %v434
        %v1043 = vunpack.c.l.b16 %v435
        %v1044 = vunpack.c.l.b16 %v436
        %v1045 = vunpack.c.l.b16 %v437
        %v1046 = vunpack.c.l.b16 %v438
        %v1047 = vunpack.c.l.b16 %v439
        %v1048 = vunpack.c.l.b16 %v440
        %v1049 = vunpack.c.l.b16 %v441
        %v1050 = vunpack.c.l.b16 %v442
        %v1051 = vunpack.c.l.b16 %v443
        %v1052 = vunpack.c.l.b16 %v444
        %v1053 = vunpack.c.l.b16 %v445
        %v1054 = vunpack.c.l.b16 %v446
        %v1055 = vunpack.c.l.b16 %v447
        %v1056 = vunpack.c.l.b16 %v448
        %v1057 = vunpack.c.l.b16 %v449
        %v1058 = vunpack.c.l.b16 %v450
        %v1059 = vunpack.c.l.b16 %v451
        %v1060 = vunpack.c.l.b16 %v452
        %v1061 = vunpack.c.l.b16 %v453
        %v1062 = vunpack.c.l.b16 %v454
        %v1063 = vunpack.c.l.b16 %v455
        %v1064 = vunpack.c.l.b16 %v456
        %v1065 = vunpack.c.l.b16 %v457
        %v1066 = vunpack.c.l.b16 %v458
        %v1067 = vunpack.c.l.b16 %v459
        %v1068 = vunpack.c.l.b16 %v460
        %v1069 = vunpack.c.l.b16 %v461
        %v1070 = vunpack.c.l.b16 %v462
        %v1071 = vunpack.c.l.b16 %v463
        %v1072 = vunpack.c.l.b16 %v464
        %v1073 = vunpack.c.l.b16 %v465
        %v1074 = vunpack.c.l.b16 %v466
        %v1075 = vunpack.c.l.b16 %v467
        %v1076 = vunpack.c.l.b16 %v468
        %v1077 = vunpack.c.l.b16 %v469
        %v1078 = vunpack.c.l.b16 %v470
        %v1079 = vunpack.c.l.b16 %v471
        %v1080 = vunpack.c.l.b16 %v472
        %v1081 = vunpack.c.l.b16 %v473
        %v1082 = vunpack.c.l.b16 %v474
        %v1083 = vunpack.c.l.b16 %v475
        %v1084 = vunpack.c.l.b16 %v476
        %v1085 = vunpack.c.l.b16 %v477
        %v1086 = vunpack.c.l.b16 %v478
        %v1087 = vunpack.c.l.b16 %v479
        %v1088 = vunpack.c.l.b16 %v480
        %v1089 = vunpack.c.l.b16 %v481
        %v1090 = vunpack.c.l.b16 %v482
        %v1091 = vunpack.c.l.b16 %v483
        %v1092 = vunpack.c.l.b16 %v484
        %v1093 = vunpack.c.l.b16 %v485
        %v1094 = vunpack.c.l.b16 %v486
        %v1095 = vpack.c.b16 %v1032, %v1031
        %v1096 = vpack.c.b16 %v1034, %v1033
        %v1097 = vpack.c.b16 %v1036, %v1035
        %v1098 = vpack.c.b16 %v1038, %v1037
        %v1099 = vpack.c.b16 %v1040, %v1039
        %v1100 = vpack.c.b16 %v1042, %v1041
        %v1101 = vpack.c.b16 %v1044, %v1043
        %v1102 = vpack.c.b16 %v1046, %v1045
        %v1103 = vpack.c.b16 %v1048, %v1047
        %v1104 = vpack.c.b16 %v1050, %v1049
        %v1105 = vpack.c.b16 %v1052, %v1051
        %v1106 = vpack.c.b16 %v1054, %v1053
        %v1107 = vpack.c.b16 %v1056, %v1055
        %v1108 = vpack.c.b16 %v1058, %v1057
        %v1109 = vpack.c.b16 %v1060, %v1059
        %v1110 = vpack.c.b16 %v1062, %v1061
        %v1111 = vpack.c.b16 %v1064, %v1063
        %v1112 = vpack.c.b16 %v1066, %v1065
        %v1113 = vpack.c.b16 %v1068, %v1067
        %v1114 = vpack.c.b16 %v1070, %v1069
        %v1115 = vpack.c.b16 %v1072, %v1071
        %v1116 = vpack.c.b16 %v1074, %v1073
        %v1117 = vpack.c.b16 %v1076, %v1075
        %v1118 = vpack.c.b16 %v1078, %v1077
        %v1119 = vpack.c.b16 %v1080, %v1079
        %v1120 = vpack.c.b16 %v1082, %v1081
        %v1121 = vpack.c.b16 %v1084, %v1083
        %v1122 = vpack.c.b16 %v1086, %v1085
        %v1123 = vpack.c.b16 %v1088, %v1087
        %v1124 = vpack.c.b16 %v1090, %v1089
        %v1125 = vpack.c.b16 %v1092, %v1091
        %v1126 = vpack.c.b16 %v1094, %v1093
        %1159 = vmatpush.bf16.msra.mxu0 %v1102
        %1160 = vmatpush.bf16.msra.mxu0 %v1101
        %1161 = vmatpush.bf16.msra.mxu0 %v1100
        %1162 = vmatpush.bf16.msra.mxu0 %v1099
        %1163 = vmatpush.bf16.msra.mxu0 %v1098
        %1164 = vmatpush.bf16.msra.mxu0 %v1097
        %1165 = vmatpush.bf16.msra.mxu0 %v1096
        %1166 = vmatpush.bf16.msra.mxu0 %v1095
        %1167 = vmatmul.bf16.gmra.mxu0 %v839
        %v1168 = vpop.f32.mrf.mxu0
        %v1169 = vadd.f32 0.0, %v1168
        %v1170 = vpop.f32.mrf.mxu0
        %v1171 = vadd.f32 0.0, %v1170
        %1172 = vmatmul.bf16.gmra.mxu0 %v843
        %v1173 = vpop.f32.mrf.mxu0
        %v1174 = vadd.f32 0.0, %v1173
        %v1175 = vpop.f32.mrf.mxu0
        %v1176 = vadd.f32 0.0, %v1175
        %1177 = vmatmul.bf16.gmra.mxu0 %v847
        %v1178 = vpop.f32.mrf.mxu0
        %v1179 = vadd.f32 0.0, %v1178
        %v1180 = vpop.f32.mrf.mxu0
        %v1181 = vadd.f32 0.0, %v1180
        %1182 = vmatmul.bf16.gmra.mxu0 %v851
        %v1183 = vpop.f32.mrf.mxu0
        %v1184 = vadd.f32 0.0, %v1183
        %v1185 = vpop.f32.mrf.mxu0
        %v1186 = vadd.f32 0.0, %v1185
        %1187 = vmatmul.bf16.gmra.mxu0 %v855
        %v1188 = vpop.f32.mrf.mxu0
        %v1189 = vadd.f32 0.0, %v1188
        %v1190 = vpop.f32.mrf.mxu0
        %v1191 = vadd.f32 0.0, %v1190
        %1192 = vmatmul.bf16.gmra.mxu0 %v859
        %v1193 = vpop.f32.mrf.mxu0
        %v1194 = vadd.f32 0.0, %v1193
        %v1195 = vpop.f32.mrf.mxu0
        %v1196 = vadd.f32 0.0, %v1195
        %1197 = vmatmul.bf16.gmra.mxu0 %v863
        %v1198 = vpop.f32.mrf.mxu0
        %v1199 = vadd.f32 0.0, %v1198
        %v1200 = vpop.f32.mrf.mxu0
        %v1201 = vadd.f32 0.0, %v1200
        %1202 = vmatmul.bf16.gmra.mxu0 %v867
        %v1203 = vpop.f32.mrf.mxu0
        %v1204 = vadd.f32 0.0, %v1203
        %v1205 = vpop.f32.mrf.mxu0
        %v1206 = vadd.f32 0.0, %v1205
        %1207 = vmatmul.bf16.gmra.mxu0 %v871
        %v1208 = vpop.f32.mrf.mxu0
        %v1209 = vadd.f32 0.0, %v1208
        %v1210 = vpop.f32.mrf.mxu0
        %v1211 = vadd.f32 0.0, %v1210
        %1212 = vmatmul.bf16.gmra.mxu0 %v875
        %v1213 = vpop.f32.mrf.mxu0
        %v1214 = vadd.f32 0.0, %v1213
        %v1215 = vpop.f32.mrf.mxu0
        %v1216 = vadd.f32 0.0, %v1215
        %1217 = vmatmul.bf16.gmra.mxu0 %v879
        %v1218 = vpop.f32.mrf.mxu0
        %v1219 = vadd.f32 0.0, %v1218
        %v1220 = vpop.f32.mrf.mxu0
        %v1221 = vadd.f32 0.0, %v1220
        %1222 = vmatmul.bf16.gmra.mxu0 %v883
        %v1223 = vpop.f32.mrf.mxu0
        %v1224 = vadd.f32 0.0, %v1223
        %v1225 = vpop.f32.mrf.mxu0
        %v1226 = vadd.f32 0.0, %v1225
        %1227 = vmatmul.bf16.gmra.mxu0 %v887
        %v1228 = vpop.f32.mrf.mxu0
        %v1229 = vadd.f32 0.0, %v1228
        %v1230 = vpop.f32.mrf.mxu0
        %v1231 = vadd.f32 0.0, %v1230
        %1232 = vmatmul.bf16.gmra.mxu0 %v891
        %v1233 = vpop.f32.mrf.mxu0
        %v1234 = vadd.f32 0.0, %v1233
        %v1235 = vpop.f32.mrf.mxu0
        %v1236 = vadd.f32 0.0, %v1235
        %1237 = vmatmul.bf16.gmra.mxu0 %v895
        %v1238 = vpop.f32.mrf.mxu0
        %v1239 = vadd.f32 0.0, %v1238
        %v1240 = vpop.f32.mrf.mxu0
        %v1241 = vadd.f32 0.0, %v1240
        %1242 = vmatmul.bf16.gmra.mxu0 %v899
        %v1243 = vpop.f32.mrf.mxu0
        %v1244 = vadd.f32 0.0, %v1243
        %v1245 = vpop.f32.mrf.mxu0
        %v1246 = vadd.f32 0.0, %v1245
        %1247 = vdwg.mxu0
        %1248 = vmatpush.bf16.msra.mxu0 %v1110
        %1249 = vmatpush.bf16.msra.mxu0 %v1109
        %1250 = vmatpush.bf16.msra.mxu0 %v1108
        %1251 = vmatpush.bf16.msra.mxu0 %v1107
        %1252 = vmatpush.bf16.msra.mxu0 %v1106
        %1253 = vmatpush.bf16.msra.mxu0 %v1105
        %1254 = vmatpush.bf16.msra.mxu0 %v1104
        %1255 = vmatpush.bf16.msra.mxu0 %v1103
        %1256 = vmatmul.bf16.gmra.mxu0 %v840
        %v1257 = vpop.f32.mrf.mxu0
        %v1258 = vadd.f32 %v1169, %v1257
        %v1259 = vpop.f32.mrf.mxu0
        %v1260 = vadd.f32 %v1171, %v1259
        %1261 = vmatmul.bf16.gmra.mxu0 %v844
        %v1262 = vpop.f32.mrf.mxu0
        %v1263 = vadd.f32 %v1174, %v1262
        %v1264 = vpop.f32.mrf.mxu0
        %v1265 = vadd.f32 %v1176, %v1264
        %1266 = vmatmul.bf16.gmra.mxu0 %v848
        %v1267 = vpop.f32.mrf.mxu0
        %v1268 = vadd.f32 %v1179, %v1267
        %v1269 = vpop.f32.mrf.mxu0
        %v1270 = vadd.f32 %v1181, %v1269
        %1271 = vmatmul.bf16.gmra.mxu0 %v852
        %v1272 = vpop.f32.mrf.mxu0
        %v1273 = vadd.f32 %v1184, %v1272
        %v1274 = vpop.f32.mrf.mxu0
        %v1275 = vadd.f32 %v1186, %v1274
        %1276 = vmatmul.bf16.gmra.mxu0 %v856
        %v1277 = vpop.f32.mrf.mxu0
        %v1278 = vadd.f32 %v1189, %v1277
        %v1279 = vpop.f32.mrf.mxu0
        %v1280 = vadd.f32 %v1191, %v1279
        %1281 = vmatmul.bf16.gmra.mxu0 %v860
        %v1282 = vpop.f32.mrf.mxu0
        %v1283 = vadd.f32 %v1194, %v1282
        %v1284 = vpop.f32.mrf.mxu0
        %v1285 = vadd.f32 %v1196, %v1284
        %1286 = vmatmul.bf16.gmra.mxu0 %v864
        %v1287 = vpop.f32.mrf.mxu0
        %v1288 = vadd.f32 %v1199, %v1287
        %v1289 = vpop.f32.mrf.mxu0
        %v1290 = vadd.f32 %v1201, %v1289
        %1291 = vmatmul.bf16.gmra.mxu0 %v868
        %v1292 = vpop.f32.mrf.mxu0
        %v1293 = vadd.f32 %v1204, %v1292
        %v1294 = vpop.f32.mrf.mxu0
        %v1295 = vadd.f32 %v1206, %v1294
        %1296 = vmatmul.bf16.gmra.mxu0 %v872
        %v1297 = vpop.f32.mrf.mxu0
        %v1298 = vadd.f32 %v1209, %v1297
        %v1299 = vpop.f32.mrf.mxu0
        %v1300 = vadd.f32 %v1211, %v1299
        %1301 = vmatmul.bf16.gmra.mxu0 %v876
        %v1302 = vpop.f32.mrf.mxu0
        %v1303 = vadd.f32 %v1214, %v1302
        %v1304 = vpop.f32.mrf.mxu0
        %v1305 = vadd.f32 %v1216, %v1304
        %1306 = vmatmul.bf16.gmra.mxu0 %v880
        %v1307 = vpop.f32.mrf.mxu0
        %v1308 = vadd.f32 %v1219, %v1307
        %v1309 = vpop.f32.mrf.mxu0
        %v1310 = vadd.f32 %v1221, %v1309
        %1311 = vmatmul.bf16.gmra.mxu0 %v884
        %v1312 = vpop.f32.mrf.mxu0
        %v1313 = vadd.f32 %v1224, %v1312
        %v1314 = vpop.f32.mrf.mxu0
        %v1315 = vadd.f32 %v1226, %v1314
        %1316 = vmatmul.bf16.gmra.mxu0 %v888
        %v1317 = vpop.f32.mrf.mxu0
        %v1318 = vadd.f32 %v1229, %v1317
        %v1319 = vpop.f32.mrf.mxu0
        %v1320 = vadd.f32 %v1231, %v1319
        %1321 = vmatmul.bf16.gmra.mxu0 %v892
        %v1322 = vpop.f32.mrf.mxu0
        %v1323 = vadd.f32 %v1234, %v1322
        %v1324 = vpop.f32.mrf.mxu0
        %v1325 = vadd.f32 %v1236, %v1324
        %1326 = vmatmul.bf16.gmra.mxu0 %v896
        %v1327 = vpop.f32.mrf.mxu0
        %v1328 = vadd.f32 %v1239, %v1327
        %v1329 = vpop.f32.mrf.mxu0
        %v1330 = vadd.f32 %v1241, %v1329
        %1331 = vmatmul.bf16.gmra.mxu0 %v900
        %v1332 = vpop.f32.mrf.mxu0
        %v1333 = vadd.f32 %v1244, %v1332
        %v1334 = vpop.f32.mrf.mxu0
        %v1335 = vadd.f32 %v1246, %v1334
        %1336 = vdwg.mxu0
        %1337 = vmatpush.bf16.msra.mxu0 %v1118
        %1338 = vmatpush.bf16.msra.mxu0 %v1117
        %1339 = vmatpush.bf16.msra.mxu0 %v1116
        %1340 = vmatpush.bf16.msra.mxu0 %v1115
        %1341 = vmatpush.bf16.msra.mxu0 %v1114
        %1342 = vmatpush.bf16.msra.mxu0 %v1113
        %1343 = vmatpush.bf16.msra.mxu0 %v1112
        %1344 = vmatpush.bf16.msra.mxu0 %v1111
        %1345 = vmatmul.bf16.gmra.mxu0 %v841
        %v1346 = vpop.f32.mrf.mxu0
        %v1347 = vadd.f32 %v1258, %v1346
        %v1348 = vpop.f32.mrf.mxu0
        %v1349 = vadd.f32 %v1260, %v1348
        %1350 = vmatmul.bf16.gmra.mxu0 %v845
        %v1351 = vpop.f32.mrf.mxu0
        %v1352 = vadd.f32 %v1263, %v1351
        %v1353 = vpop.f32.mrf.mxu0
        %v1354 = vadd.f32 %v1265, %v1353
        %1355 = vmatmul.bf16.gmra.mxu0 %v849
        %v1356 = vpop.f32.mrf.mxu0
        %v1357 = vadd.f32 %v1268, %v1356
        %v1358 = vpop.f32.mrf.mxu0
        %v1359 = vadd.f32 %v1270, %v1358
        %1360 = vmatmul.bf16.gmra.mxu0 %v853
        %v1361 = vpop.f32.mrf.mxu0
        %v1362 = vadd.f32 %v1273, %v1361
        %v1363 = vpop.f32.mrf.mxu0
        %v1364 = vadd.f32 %v1275, %v1363
        %1365 = vmatmul.bf16.gmra.mxu0 %v857
        %v1366 = vpop.f32.mrf.mxu0
        %v1367 = vadd.f32 %v1278, %v1366
        %v1368 = vpop.f32.mrf.mxu0
        %v1369 = vadd.f32 %v1280, %v1368
        %1370 = vmatmul.bf16.gmra.mxu0 %v861
        %v1371 = vpop.f32.mrf.mxu0
        %v1372 = vadd.f32 %v1283, %v1371
        %v1373 = vpop.f32.mrf.mxu0
        %v1374 = vadd.f32 %v1285, %v1373
        %1375 = vmatmul.bf16.gmra.mxu0 %v865
        %v1376 = vpop.f32.mrf.mxu0
        %v1377 = vadd.f32 %v1288, %v1376
        %v1378 = vpop.f32.mrf.mxu0
        %v1379 = vadd.f32 %v1290, %v1378
        %1380 = vmatmul.bf16.gmra.mxu0 %v869
        %v1381 = vpop.f32.mrf.mxu0
        %v1382 = vadd.f32 %v1293, %v1381
        %v1383 = vpop.f32.mrf.mxu0
        %v1384 = vadd.f32 %v1295, %v1383
        %1385 = vmatmul.bf16.gmra.mxu0 %v873
        %v1386 = vpop.f32.mrf.mxu0
        %v1387 = vadd.f32 %v1298, %v1386
        %v1388 = vpop.f32.mrf.mxu0
        %v1389 = vadd.f32 %v1300, %v1388
        %1390 = vmatmul.bf16.gmra.mxu0 %v877
        %v1391 = vpop.f32.mrf.mxu0
        %v1392 = vadd.f32 %v1303, %v1391
        %v1393 = vpop.f32.mrf.mxu0
        %v1394 = vadd.f32 %v1305, %v1393
        %1395 = vmatmul.bf16.gmra.mxu0 %v881
        %v1396 = vpop.f32.mrf.mxu0
        %v1397 = vadd.f32 %v1308, %v1396
        %v1398 = vpop.f32.mrf.mxu0
        %v1399 = vadd.f32 %v1310, %v1398
        %1400 = vmatmul.bf16.gmra.mxu0 %v885
        %v1401 = vpop.f32.mrf.mxu0
        %v1402 = vadd.f32 %v1313, %v1401
        %v1403 = vpop.f32.mrf.mxu0
        %v1404 = vadd.f32 %v1315, %v1403
        %1405 = vmatmul.bf16.gmra.mxu0 %v889
        %v1406 = vpop.f32.mrf.mxu0
        %v1407 = vadd.f32 %v1318, %v1406
        %v1408 = vpop.f32.mrf.mxu0
        %v1409 = vadd.f32 %v1320, %v1408
        %1410 = vmatmul.bf16.gmra.mxu0 %v893
        %v1411 = vpop.f32.mrf.mxu0
        %v1412 = vadd.f32 %v1323, %v1411
        %v1413 = vpop.f32.mrf.mxu0
        %v1414 = vadd.f32 %v1325, %v1413
        %1415 = vmatmul.bf16.gmra.mxu0 %v897
        %v1416 = vpop.f32.mrf.mxu0
        %v1417 = vadd.f32 %v1328, %v1416
        %v1418 = vpop.f32.mrf.mxu0
        %v1419 = vadd.f32 %v1330, %v1418
        %1420 = vmatmul.bf16.gmra.mxu0 %v901
        %v1421 = vpop.f32.mrf.mxu0
        %v1422 = vadd.f32 %v1333, %v1421
        %v1423 = vpop.f32.mrf.mxu0
        %v1424 = vadd.f32 %v1335, %v1423
        %1425 = vdwg.mxu0
        %1426 = vmatpush.bf16.msra.mxu0 %v1126
        %1427 = vmatpush.bf16.msra.mxu0 %v1125
        %1428 = vmatpush.bf16.msra.mxu0 %v1124
        %1429 = vmatpush.bf16.msra.mxu0 %v1123
        %1430 = vmatpush.bf16.msra.mxu0 %v1122
        %1431 = vmatpush.bf16.msra.mxu0 %v1121
        %1432 = vmatpush.bf16.msra.mxu0 %v1120
        %1433 = vmatpush.bf16.msra.mxu0 %v1119
        %1434 = vmatmul.bf16.gmra.mxu0 %v842
        %v1435 = vpop.f32.mrf.mxu0
        %v1436 = vadd.f32 %v1347, %v1435
        %v1437 = vpop.f32.mrf.mxu0
        %v1438 = vadd.f32 %v1349, %v1437
        %1439 = vmatmul.bf16.gmra.mxu0 %v846
        %v1440 = vpop.f32.mrf.mxu0
        %v1441 = vadd.f32 %v1352, %v1440
        %v1442 = vpop.f32.mrf.mxu0
        %v1443 = vadd.f32 %v1354, %v1442
        %1444 = vmatmul.bf16.gmra.mxu0 %v850
        %v1445 = vpop.f32.mrf.mxu0
        %v1446 = vadd.f32 %v1357, %v1445
        %v1447 = vpop.f32.mrf.mxu0
        %v1448 = vadd.f32 %v1359, %v1447
        %1449 = vmatmul.bf16.gmra.mxu0 %v854
        %v1450 = vpop.f32.mrf.mxu0
        %v1451 = vadd.f32 %v1362, %v1450
        %v1452 = vpop.f32.mrf.mxu0
        %v1453 = vadd.f32 %v1364, %v1452
        %1454 = vmatmul.bf16.gmra.mxu0 %v858
        %v1455 = vpop.f32.mrf.mxu0
        %v1456 = vadd.f32 %v1367, %v1455
        %v1457 = vpop.f32.mrf.mxu0
        %v1458 = vadd.f32 %v1369, %v1457
        %1459 = vmatmul.bf16.gmra.mxu0 %v862
        %v1460 = vpop.f32.mrf.mxu0
        %v1461 = vadd.f32 %v1372, %v1460
        %v1462 = vpop.f32.mrf.mxu0
        %v1463 = vadd.f32 %v1374, %v1462
        %1464 = vmatmul.bf16.gmra.mxu0 %v866
        %v1465 = vpop.f32.mrf.mxu0
        %v1466 = vadd.f32 %v1377, %v1465
        %v1467 = vpop.f32.mrf.mxu0
        %v1468 = vadd.f32 %v1379, %v1467
        %1469 = vmatmul.bf16.gmra.mxu0 %v870
        %v1470 = vpop.f32.mrf.mxu0
        %v1471 = vadd.f32 %v1382, %v1470
        %v1472 = vpop.f32.mrf.mxu0
        %v1473 = vadd.f32 %v1384, %v1472
        %1474 = vmatmul.bf16.gmra.mxu0 %v874
        %v1475 = vpop.f32.mrf.mxu0
        %v1476 = vadd.f32 %v1387, %v1475
        %v1477 = vpop.f32.mrf.mxu0
        %v1478 = vadd.f32 %v1389, %v1477
        %1479 = vmatmul.bf16.gmra.mxu0 %v878
        %v1480 = vpop.f32.mrf.mxu0
        %v1481 = vadd.f32 %v1392, %v1480
        %v1482 = vpop.f32.mrf.mxu0
        %v1483 = vadd.f32 %v1394, %v1482
        %1484 = vmatmul.bf16.gmra.mxu0 %v882
        %v1485 = vpop.f32.mrf.mxu0
        %v1486 = vadd.f32 %v1397, %v1485
        %v1487 = vpop.f32.mrf.mxu0
        %v1488 = vadd.f32 %v1399, %v1487
        %1489 = vmatmul.bf16.gmra.mxu0 %v886
        %v1490 = vpop.f32.mrf.mxu0
        %v1491 = vadd.f32 %v1402, %v1490
        %v1492 = vpop.f32.mrf.mxu0
        %v1493 = vadd.f32 %v1404, %v1492
        %1494 = vmatmul.bf16.gmra.mxu0 %v890
        %v1495 = vpop.f32.mrf.mxu0
        %v1496 = vadd.f32 %v1407, %v1495
        %v1497 = vpop.f32.mrf.mxu0
        %v1498 = vadd.f32 %v1409, %v1497
        %1499 = vmatmul.bf16.gmra.mxu0 %v894
        %v1500 = vpop.f32.mrf.mxu0
        %v1501 = vadd.f32 %v1412, %v1500
        %v1502 = vpop.f32.mrf.mxu0
        %v1503 = vadd.f32 %v1414, %v1502
        %1504 = vmatmul.bf16.gmra.mxu0 %v898
        %v1505 = vpop.f32.mrf.mxu0
        %v1506 = vadd.f32 %v1417, %v1505
        %v1507 = vpop.f32.mrf.mxu0
        %v1508 = vadd.f32 %v1419, %v1507
        %1509 = vmatmul.bf16.gmra.mxu0 %v902
        %v1510 = vpop.f32.mrf.mxu0
        %v1511 = vadd.f32 %v1422, %v1510
        %v1512 = vpop.f32.mrf.mxu0
        %v1513 = vadd.f32 %v1424, %v1512
        %1514 = vdwg.mxu0
        %v1579 = vunpack.c.l.b16 %v519
        %v1580 = vunpack.c.h.b16 %v519
        %v1581 = vunpack.c.l.b16 %v520
        %v1582 = vunpack.c.h.b16 %v520
        %v1583 = vunpack.c.l.b16 %v521
        %v1584 = vunpack.c.h.b16 %v521
        %v1585 = vunpack.c.l.b16 %v522
        %v1586 = vunpack.c.h.b16 %v522
        %v1587 = vunpack.c.l.b16 %v523
        %v1588 = vunpack.c.h.b16 %v523
        %v1589 = vunpack.c.l.b16 %v524
        %v1590 = vunpack.c.h.b16 %v524
        %v1591 = vunpack.c.l.b16 %v525
        %v1592 = vunpack.c.h.b16 %v525
        %v1593 = vunpack.c.l.b16 %v526
        %v1594 = vunpack.c.h.b16 %v526
        %v1595 = vunpack.c.l.b16 %v527
        %v1596 = vunpack.c.h.b16 %v527
        %v1597 = vunpack.c.l.b16 %v528
        %v1598 = vunpack.c.h.b16 %v528
        %v1599 = vunpack.c.l.b16 %v529
        %v1600 = vunpack.c.h.b16 %v529
        %v1601 = vunpack.c.l.b16 %v530
        %v1602 = vunpack.c.h.b16 %v530
        %v1603 = vunpack.c.l.b16 %v531
        %v1604 = vunpack.c.h.b16 %v531
        %v1605 = vunpack.c.l.b16 %v532
        %v1606 = vunpack.c.h.b16 %v532
        %v1607 = vunpack.c.l.b16 %v533
        %v1608 = vunpack.c.h.b16 %v533
        %v1609 = vunpack.c.l.b16 %v534
        %v1610 = vunpack.c.h.b16 %v534
        %v1611 = vunpack.c.l.b16 %v535
        %v1612 = vunpack.c.h.b16 %v535
        %v1613 = vunpack.c.l.b16 %v536
        %v1614 = vunpack.c.h.b16 %v536
        %v1615 = vunpack.c.l.b16 %v537
        %v1616 = vunpack.c.h.b16 %v537
        %v1617 = vunpack.c.l.b16 %v538
        %v1618 = vunpack.c.h.b16 %v538
        %v1619 = vunpack.c.l.b16 %v539
        %v1620 = vunpack.c.h.b16 %v539
        %v1621 = vunpack.c.l.b16 %v540
        %v1622 = vunpack.c.h.b16 %v540
        %v1623 = vunpack.c.l.b16 %v541
        %v1624 = vunpack.c.h.b16 %v541
        %v1625 = vunpack.c.l.b16 %v542
        %v1626 = vunpack.c.h.b16 %v542
        %v1627 = vunpack.c.l.b16 %v543
        %v1628 = vunpack.c.h.b16 %v543
        %v1629 = vunpack.c.l.b16 %v544
        %v1630 = vunpack.c.h.b16 %v544
        %v1631 = vunpack.c.l.b16 %v545
        %v1632 = vunpack.c.h.b16 %v545
        %v1633 = vunpack.c.l.b16 %v546
        %v1634 = vunpack.c.h.b16 %v546
        %v1635 = vunpack.c.l.b16 %v547
        %v1636 = vunpack.c.h.b16 %v547
        %v1637 = vunpack.c.l.b16 %v548
        %v1638 = vunpack.c.h.b16 %v548
        %v1639 = vunpack.c.l.b16 %v549
        %v1640 = vunpack.c.h.b16 %v549
        %v1641 = vunpack.c.l.b16 %v550
        %v1642 = vunpack.c.h.b16 %v550
        %v1643 = vunpack.c.l.b16 %v551
        %v1644 = vunpack.c.h.b16 %v551
        %v1645 = vunpack.c.l.b16 %v552
        %v1646 = vunpack.c.h.b16 %v552
        %v1647 = vunpack.c.l.b16 %v553
        %v1648 = vunpack.c.h.b16 %v553
        %v1649 = vunpack.c.l.b16 %v554
        %v1650 = vunpack.c.h.b16 %v554
        %v1651 = vunpack.c.l.b16 %v555
        %v1652 = vunpack.c.h.b16 %v555
        %v1653 = vunpack.c.l.b16 %v556
        %v1654 = vunpack.c.h.b16 %v556
        %v1655 = vunpack.c.l.b16 %v557
        %v1656 = vunpack.c.h.b16 %v557
        %v1657 = vunpack.c.l.b16 %v558
        %v1658 = vunpack.c.h.b16 %v558
        %v1659 = vunpack.c.l.b16 %v559
        %v1660 = vunpack.c.h.b16 %v559
        %v1661 = vunpack.c.l.b16 %v560
        %v1662 = vunpack.c.h.b16 %v560
        %v1663 = vunpack.c.l.b16 %v561
        %v1664 = vunpack.c.h.b16 %v561
        %v1665 = vunpack.c.l.b16 %v562
        %v1666 = vunpack.c.h.b16 %v562
        %v1667 = vunpack.c.l.b16 %v563
        %v1668 = vunpack.c.h.b16 %v563
        %v1669 = vunpack.c.l.b16 %v564
        %v1670 = vunpack.c.h.b16 %v564
        %v1671 = vunpack.c.l.b16 %v565
        %v1672 = vunpack.c.h.b16 %v565
        %v1673 = vunpack.c.l.b16 %v566
        %v1674 = vunpack.c.h.b16 %v566
        %v1675 = vunpack.c.l.b16 %v567
        %v1676 = vunpack.c.h.b16 %v567
        %v1677 = vunpack.c.l.b16 %v568
        %v1678 = vunpack.c.h.b16 %v568
        %v1679 = vunpack.c.l.b16 %v569
        %v1680 = vunpack.c.h.b16 %v569
        %v1681 = vunpack.c.l.b16 %v570
        %v1682 = vunpack.c.h.b16 %v570
        %v1683 = vunpack.c.l.b16 %v571
        %v1684 = vunpack.c.h.b16 %v571
        %v1685 = vunpack.c.l.b16 %v572
        %v1686 = vunpack.c.h.b16 %v572
        %v1687 = vunpack.c.l.b16 %v573
        %v1688 = vunpack.c.h.b16 %v573
        %v1689 = vunpack.c.l.b16 %v574
        %v1690 = vunpack.c.h.b16 %v574
        %v1691 = vunpack.c.l.b16 %v575
        %v1692 = vunpack.c.h.b16 %v575
        %v1693 = vunpack.c.l.b16 %v576
        %v1694 = vunpack.c.h.b16 %v576
        %v1695 = vunpack.c.l.b16 %v577
        %v1696 = vunpack.c.h.b16 %v577
        %v1697 = vunpack.c.l.b16 %v578
        %v1698 = vunpack.c.h.b16 %v578
        %v1699 = vunpack.c.l.b16 %v579
        %v1700 = vunpack.c.h.b16 %v579
        %v1701 = vunpack.c.l.b16 %v580
        %v1702 = vunpack.c.h.b16 %v580
        %v1703 = vunpack.c.l.b16 %v581
        %v1704 = vunpack.c.h.b16 %v581
        %v1705 = vunpack.c.l.b16 %v582
        %v1706 = vunpack.c.h.b16 %v582
        %v1707 = vpack.c.b16 %v1583, %v1579
        %v1708 = vpack.c.b16 %v1584, %v1580
        %v1709 = vpack.c.b16 %v1585, %v1581
        %v1710 = vpack.c.b16 %v1586, %v1582
        %v1711 = vpack.c.b16 %v1591, %v1587
        %v1712 = vpack.c.b16 %v1592, %v1588
        %v1713 = vpack.c.b16 %v1593, %v1589
        %v1714 = vpack.c.b16 %v1594, %v1590
        %v1715 = vpack.c.b16 %v1599, %v1595
        %v1716 = vpack.c.b16 %v1600, %v1596
        %v1717 = vpack.c.b16 %v1601, %v1597
        %v1718 = vpack.c.b16 %v1602, %v1598
        %v1719 = vpack.c.b16 %v1607, %v1603
        %v1720 = vpack.c.b16 %v1608, %v1604
        %v1721 = vpack.c.b16 %v1609, %v1605
        %v1722 = vpack.c.b16 %v1610, %v1606
        %v1723 = vpack.c.b16 %v1615, %v1611
        %v1724 = vpack.c.b16 %v1616, %v1612
        %v1725 = vpack.c.b16 %v1617, %v1613
        %v1726 = vpack.c.b16 %v1618, %v1614
        %v1727 = vpack.c.b16 %v1623, %v1619
        %v1728 = vpack.c.b16 %v1624, %v1620
        %v1729 = vpack.c.b16 %v1625, %v1621
        %v1730 = vpack.c.b16 %v1626, %v1622
        %v1731 = vpack.c.b16 %v1631, %v1627
        %v1732 = vpack.c.b16 %v1632, %v1628
        %v1733 = vpack.c.b16 %v1633, %v1629
        %v1734 = vpack.c.b16 %v1634, %v1630
        %v1735 = vpack.c.b16 %v1639, %v1635
        %v1736 = vpack.c.b16 %v1640, %v1636
        %v1737 = vpack.c.b16 %v1641, %v1637
        %v1738 = vpack.c.b16 %v1642, %v1638
        %v1739 = vpack.c.b16 %v1647, %v1643
        %v1740 = vpack.c.b16 %v1648, %v1644
        %v1741 = vpack.c.b16 %v1649, %v1645
        %v1742 = vpack.c.b16 %v1650, %v1646
        %v1743 = vpack.c.b16 %v1655, %v1651
        %v1744 = vpack.c.b16 %v1656, %v1652
        %v1745 = vpack.c.b16 %v1657, %v1653
        %v1746 = vpack.c.b16 %v1658, %v1654
        %v1747 = vpack.c.b16 %v1663, %v1659
        %v1748 = vpack.c.b16 %v1664, %v1660
        %v1749 = vpack.c.b16 %v1665, %v1661
        %v1750 = vpack.c.b16 %v1666, %v1662
        %v1751 = vpack.c.b16 %v1671, %v1667
        %v1752 = vpack.c.b16 %v1672, %v1668
        %v1753 = vpack.c.b16 %v1673, %v1669
        %v1754 = vpack.c.b16 %v1674, %v1670
        %v1755 = vpack.c.b16 %v1679, %v1675
        %v1756 = vpack.c.b16 %v1680, %v1676
        %v1757 = vpack.c.b16 %v1681, %v1677
        %v1758 = vpack.c.b16 %v1682, %v1678
        %v1759 = vpack.c.b16 %v1687, %v1683
        %v1760 = vpack.c.b16 %v1688, %v1684
        %v1761 = vpack.c.b16 %v1689, %v1685
        %v1762 = vpack.c.b16 %v1690, %v1686
        %v1763 = vpack.c.b16 %v1695, %v1691
        %v1764 = vpack.c.b16 %v1696, %v1692
        %v1765 = vpack.c.b16 %v1697, %v1693
        %v1766 = vpack.c.b16 %v1698, %v1694
        %v1767 = vpack.c.b16 %v1703, %v1699
        %v1768 = vpack.c.b16 %v1704, %v1700
        %v1769 = vpack.c.b16 %v1705, %v1701
        %v1770 = vpack.c.b16 %v1706, %v1702
        %v1899 = vunpack.c.l.b16 %v357
        %v1900 = vunpack.c.l.b16 %v358
        %v1901 = vunpack.c.l.b16 %v359
        %v1902 = vunpack.c.l.b16 %v360
        %v1903 = vunpack.c.l.b16 %v361
        %v1904 = vunpack.c.l.b16 %v362
        %v1905 = vunpack.c.l.b16 %v363
        %v1906 = vunpack.c.l.b16 %v364
        %v1907 = vunpack.c.l.b16 %v365
        %v1908 = vunpack.c.l.b16 %v366
        %v1909 = vunpack.c.l.b16 %v367
        %v1910 = vunpack.c.l.b16 %v368
        %v1911 = vunpack.c.l.b16 %v369
        %v1912 = vunpack.c.l.b16 %v370
        %v1913 = vunpack.c.l.b16 %v371
        %v1914 = vunpack.c.l.b16 %v372
        %v1915 = vunpack.c.l.b16 %v373
        %v1916 = vunpack.c.l.b16 %v374
        %v1917 = vunpack.c.l.b16 %v375
        %v1918 = vunpack.c.l.b16 %v376
        %v1919 = vunpack.c.l.b16 %v377
        %v1920 = vunpack.c.l.b16 %v378
        %v1921 = vunpack.c.l.b16 %v379
        %v1922 = vunpack.c.l.b16 %v380
        %v1923 = vunpack.c.l.b16 %v381
        %v1924 = vunpack.c.l.b16 %v382
        %v1925 = vunpack.c.l.b16 %v383
        %v1926 = vunpack.c.l.b16 %v384
        %v1927 = vunpack.c.l.b16 %v385
        %v1928 = vunpack.c.l.b16 %v386
        %v1929 = vunpack.c.l.b16 %v387
        %v1930 = vunpack.c.l.b16 %v388
        %v1931 = vunpack.c.l.b16 %v389
        %v1932 = vunpack.c.l.b16 %v390
        %v1933 = vunpack.c.l.b16 %v391
        %v1934 = vunpack.c.l.b16 %v392
        %v1935 = vunpack.c.l.b16 %v393
        %v1936 = vunpack.c.l.b16 %v394
        %v1937 = vunpack.c.l.b16 %v395
        %v1938 = vunpack.c.l.b16 %v396
        %v1939 = vunpack.c.l.b16 %v397
        %v1940 = vunpack.c.l.b16 %v398
        %v1941 = vunpack.c.l.b16 %v399
        %v1942 = vunpack.c.l.b16 %v400
        %v1943 = vunpack.c.l.b16 %v401
        %v1944 = vunpack.c.l.b16 %v402
        %v1945 = vunpack.c.l.b16 %v403
        %v1946 = vunpack.c.l.b16 %v404
        %v1947 = vunpack.c.l.b16 %v405
        %v1948 = vunpack.c.l.b16 %v406
        %v1949 = vunpack.c.l.b16 %v407
        %v1950 = vunpack.c.l.b16 %v408
        %v1951 = vunpack.c.l.b16 %v409
        %v1952 = vunpack.c.l.b16 %v410
        %v1953 = vunpack.c.l.b16 %v411
        %v1954 = vunpack.c.l.b16 %v412
        %v1955 = vunpack.c.l.b16 %v413
        %v1956 = vunpack.c.l.b16 %v414
        %v1957 = vunpack.c.l.b16 %v415
        %v1958 = vunpack.c.l.b16 %v416
        %v1959 = vunpack.c.l.b16 %v417
        %v1960 = vunpack.c.l.b16 %v418
        %v1961 = vunpack.c.l.b16 %v419
        %v1962 = vunpack.c.l.b16 %v420
        %v1963 = vpack.c.b16 %v1900, %v1899
        %v1964 = vpack.c.b16 %v1902, %v1901
        %v1965 = vpack.c.b16 %v1904, %v1903
        %v1966 = vpack.c.b16 %v1906, %v1905
        %v1967 = vpack.c.b16 %v1908, %v1907
        %v1968 = vpack.c.b16 %v1910, %v1909
        %v1969 = vpack.c.b16 %v1912, %v1911
        %v1970 = vpack.c.b16 %v1914, %v1913
        %v1971 = vpack.c.b16 %v1916, %v1915
        %v1972 = vpack.c.b16 %v1918, %v1917
        %v1973 = vpack.c.b16 %v1920, %v1919
        %v1974 = vpack.c.b16 %v1922, %v1921
        %v1975 = vpack.c.b16 %v1924, %v1923
        %v1976 = vpack.c.b16 %v1926, %v1925
        %v1977 = vpack.c.b16 %v1928, %v1927
        %v1978 = vpack.c.b16 %v1930, %v1929
        %v1979 = vpack.c.b16 %v1932, %v1931
        %v1980 = vpack.c.b16 %v1934, %v1933
        %v1981 = vpack.c.b16 %v1936, %v1935
        %v1982 = vpack.c.b16 %v1938, %v1937
        %v1983 = vpack.c.b16 %v1940, %v1939
        %v1984 = vpack.c.b16 %v1942, %v1941
        %v1985 = vpack.c.b16 %v1944, %v1943
        %v1986 = vpack.c.b16 %v1946, %v1945
        %v1987 = vpack.c.b16 %v1948, %v1947
        %v1988 = vpack.c.b16 %v1950, %v1949
        %v1989 = vpack.c.b16 %v1952, %v1951
        %v1990 = vpack.c.b16 %v1954, %v1953
        %v1991 = vpack.c.b16 %v1956, %v1955
        %v1992 = vpack.c.b16 %v1958, %v1957
        %v1993 = vpack.c.b16 %v1960, %v1959
        %v1994 = vpack.c.b16 %v1962, %v1961
        %2027 = vmatpush.bf16.msra.mxu0 %v1970
        %2028 = vmatpush.bf16.msra.mxu0 %v1969
        %2029 = vmatpush.bf16.msra.mxu0 %v1968
        %2030 = vmatpush.bf16.msra.mxu0 %v1967
        %2031 = vmatpush.bf16.msra.mxu0 %v1966
        %2032 = vmatpush.bf16.msra.mxu0 %v1965
        %2033 = vmatpush.bf16.msra.mxu0 %v1964
        %2034 = vmatpush.bf16.msra.mxu0 %v1963
        %2035 = vmatmul.bf16.gmra.mxu0 %v1707
        %v2036 = vpop.f32.mrf.mxu0
        %v2037 = vadd.f32 %v1436, %v2036
        %v2038 = vpop.f32.mrf.mxu0
        %v2039 = vadd.f32 %v1438, %v2038
        %2040 = vmatmul.bf16.gmra.mxu0 %v1711
        %v2041 = vpop.f32.mrf.mxu0
        %v2042 = vadd.f32 %v1441, %v2041
        %v2043 = vpop.f32.mrf.mxu0
        %v2044 = vadd.f32 %v1443, %v2043
        %2045 = vmatmul.bf16.gmra.mxu0 %v1715
        %v2046 = vpop.f32.mrf.mxu0
        %v2047 = vadd.f32 %v1446, %v2046
        %v2048 = vpop.f32.mrf.mxu0
        %v2049 = vadd.f32 %v1448, %v2048
        %2050 = vmatmul.bf16.gmra.mxu0 %v1719
        %v2051 = vpop.f32.mrf.mxu0
        %v2052 = vadd.f32 %v1451, %v2051
        %v2053 = vpop.f32.mrf.mxu0
        %v2054 = vadd.f32 %v1453, %v2053
        %2055 = vmatmul.bf16.gmra.mxu0 %v1723
        %v2056 = vpop.f32.mrf.mxu0
        %v2057 = vadd.f32 %v1456, %v2056
        %v2058 = vpop.f32.mrf.mxu0
        %v2059 = vadd.f32 %v1458, %v2058
        %2060 = vmatmul.bf16.gmra.mxu0 %v1727
        %v2061 = vpop.f32.mrf.mxu0
        %v2062 = vadd.f32 %v1461, %v2061
        %v2063 = vpop.f32.mrf.mxu0
        %v2064 = vadd.f32 %v1463, %v2063
        %2065 = vmatmul.bf16.gmra.mxu0 %v1731
        %v2066 = vpop.f32.mrf.mxu0
        %v2067 = vadd.f32 %v1466, %v2066
        %v2068 = vpop.f32.mrf.mxu0
        %v2069 = vadd.f32 %v1468, %v2068
        %2070 = vmatmul.bf16.gmra.mxu0 %v1735
        %v2071 = vpop.f32.mrf.mxu0
        %v2072 = vadd.f32 %v1471, %v2071
        %v2073 = vpop.f32.mrf.mxu0
        %v2074 = vadd.f32 %v1473, %v2073
        %2075 = vmatmul.bf16.gmra.mxu0 %v1739
        %v2076 = vpop.f32.mrf.mxu0
        %v2077 = vadd.f32 %v1476, %v2076
        %v2078 = vpop.f32.mrf.mxu0
        %v2079 = vadd.f32 %v1478, %v2078
        %2080 = vmatmul.bf16.gmra.mxu0 %v1743
        %v2081 = vpop.f32.mrf.mxu0
        %v2082 = vadd.f32 %v1481, %v2081
        %v2083 = vpop.f32.mrf.mxu0
        %v2084 = vadd.f32 %v1483, %v2083
        %2085 = vmatmul.bf16.gmra.mxu0 %v1747
        %v2086 = vpop.f32.mrf.mxu0
        %v2087 = vadd.f32 %v1486, %v2086
        %v2088 = vpop.f32.mrf.mxu0
        %v2089 = vadd.f32 %v1488, %v2088
        %2090 = vmatmul.bf16.gmra.mxu0 %v1751
        %v2091 = vpop.f32.mrf.mxu0
        %v2092 = vadd.f32 %v1491, %v2091
        %v2093 = vpop.f32.mrf.mxu0
        %v2094 = vadd.f32 %v1493, %v2093
        %2095 = vmatmul.bf16.gmra.mxu0 %v1755
        %v2096 = vpop.f32.mrf.mxu0
        %v2097 = vadd.f32 %v1496, %v2096
        %v2098 = vpop.f32.mrf.mxu0
        %v2099 = vadd.f32 %v1498, %v2098
        %2100 = vmatmul.bf16.gmra.mxu0 %v1759
        %v2101 = vpop.f32.mrf.mxu0
        %v2102 = vadd.f32 %v1501, %v2101
        %v2103 = vpop.f32.mrf.mxu0
        %v2104 = vadd.f32 %v1503, %v2103
        %2105 = vmatmul.bf16.gmra.mxu0 %v1763
        %v2106 = vpop.f32.mrf.mxu0
        %v2107 = vadd.f32 %v1506, %v2106
        %v2108 = vpop.f32.mrf.mxu0
        %v2109 = vadd.f32 %v1508, %v2108
        %2110 = vmatmul.bf16.gmra.mxu0 %v1767
        %v2111 = vpop.f32.mrf.mxu0
        %v2112 = vadd.f32 %v1511, %v2111
        %v2113 = vpop.f32.mrf.mxu0
        %v2114 = vadd.f32 %v1513, %v2113
        %2115 = vdwg.mxu0
        %2116 = vmatpush.bf16.msra.mxu0 %v1978
        %2117 = vmatpush.bf16.msra.mxu0 %v1977
        %2118 = vmatpush.bf16.msra.mxu0 %v1976
        %2119 = vmatpush.bf16.msra.mxu0 %v1975
        %2120 = vmatpush.bf16.msra.mxu0 %v1974
        %2121 = vmatpush.bf16.msra.mxu0 %v1973
        %2122 = vmatpush.bf16.msra.mxu0 %v1972
        %2123 = vmatpush.bf16.msra.mxu0 %v1971
        %2124 = vmatmul.bf16.gmra.mxu0 %v1708
        %v2125 = vpop.f32.mrf.mxu0
        %v2126 = vadd.f32 %v2037, %v2125
        %v2127 = vpop.f32.mrf.mxu0
        %v2128 = vadd.f32 %v2039, %v2127
        %2129 = vmatmul.bf16.gmra.mxu0 %v1712
        %v2130 = vpop.f32.mrf.mxu0
        %v2131 = vadd.f32 %v2042, %v2130
        %v2132 = vpop.f32.mrf.mxu0
        %v2133 = vadd.f32 %v2044, %v2132
        %2134 = vmatmul.bf16.gmra.mxu0 %v1716
        %v2135 = vpop.f32.mrf.mxu0
        %v2136 = vadd.f32 %v2047, %v2135
        %v2137 = vpop.f32.mrf.mxu0
        %v2138 = vadd.f32 %v2049, %v2137
        %2139 = vmatmul.bf16.gmra.mxu0 %v1720
        %v2140 = vpop.f32.mrf.mxu0
        %v2141 = vadd.f32 %v2052, %v2140
        %v2142 = vpop.f32.mrf.mxu0
        %v2143 = vadd.f32 %v2054, %v2142
        %2144 = vmatmul.bf16.gmra.mxu0 %v1724
        %v2145 = vpop.f32.mrf.mxu0
        %v2146 = vadd.f32 %v2057, %v2145
        %v2147 = vpop.f32.mrf.mxu0
        %v2148 = vadd.f32 %v2059, %v2147
        %2149 = vmatmul.bf16.gmra.mxu0 %v1728
        %v2150 = vpop.f32.mrf.mxu0
        %v2151 = vadd.f32 %v2062, %v2150
        %v2152 = vpop.f32.mrf.mxu0
        %v2153 = vadd.f32 %v2064, %v2152
        %2154 = vmatmul.bf16.gmra.mxu0 %v1732
        %v2155 = vpop.f32.mrf.mxu0
        %v2156 = vadd.f32 %v2067, %v2155
        %v2157 = vpop.f32.mrf.mxu0
        %v2158 = vadd.f32 %v2069, %v2157
        %2159 = vmatmul.bf16.gmra.mxu0 %v1736
        %v2160 = vpop.f32.mrf.mxu0
        %v2161 = vadd.f32 %v2072, %v2160
        %v2162 = vpop.f32.mrf.mxu0
        %v2163 = vadd.f32 %v2074, %v2162
        %2164 = vmatmul.bf16.gmra.mxu0 %v1740
        %v2165 = vpop.f32.mrf.mxu0
        %v2166 = vadd.f32 %v2077, %v2165
        %v2167 = vpop.f32.mrf.mxu0
        %v2168 = vadd.f32 %v2079, %v2167
        %2169 = vmatmul.bf16.gmra.mxu0 %v1744
        %v2170 = vpop.f32.mrf.mxu0
        %v2171 = vadd.f32 %v2082, %v2170
        %v2172 = vpop.f32.mrf.mxu0
        %v2173 = vadd.f32 %v2084, %v2172
        %2174 = vmatmul.bf16.gmra.mxu0 %v1748
        %v2175 = vpop.f32.mrf.mxu0
        %v2176 = vadd.f32 %v2087, %v2175
        %v2177 = vpop.f32.mrf.mxu0
        %v2178 = vadd.f32 %v2089, %v2177
        %2179 = vmatmul.bf16.gmra.mxu0 %v1752
        %v2180 = vpop.f32.mrf.mxu0
        %v2181 = vadd.f32 %v2092, %v2180
        %v2182 = vpop.f32.mrf.mxu0
        %v2183 = vadd.f32 %v2094, %v2182
        %2184 = vmatmul.bf16.gmra.mxu0 %v1756
        %v2185 = vpop.f32.mrf.mxu0
        %v2186 = vadd.f32 %v2097, %v2185
        %v2187 = vpop.f32.mrf.mxu0
        %v2188 = vadd.f32 %v2099, %v2187
        %2189 = vmatmul.bf16.gmra.mxu0 %v1760
        %v2190 = vpop.f32.mrf.mxu0
        %v2191 = vadd.f32 %v2102, %v2190
        %v2192 = vpop.f32.mrf.mxu0
        %v2193 = vadd.f32 %v2104, %v2192
        %2194 = vmatmul.bf16.gmra.mxu0 %v1764
        %v2195 = vpop.f32.mrf.mxu0
        %v2196 = vadd.f32 %v2107, %v2195
        %v2197 = vpop.f32.mrf.mxu0
        %v2198 = vadd.f32 %v2109, %v2197
        %2199 = vmatmul.bf16.gmra.mxu0 %v1768
        %v2200 = vpop.f32.mrf.mxu0
        %v2201 = vadd.f32 %v2112, %v2200
        %v2202 = vpop.f32.mrf.mxu0
        %v2203 = vadd.f32 %v2114, %v2202
        %2204 = vdwg.mxu0
        %2205 = vmatpush.bf16.msra.mxu0 %v1986
        %2206 = vmatpush.bf16.msra.mxu0 %v1985
        %2207 = vmatpush.bf16.msra.mxu0 %v1984
        %2208 = vmatpush.bf16.msra.mxu0 %v1983
        %2209 = vmatpush.bf16.msra.mxu0 %v1982
        %2210 = vmatpush.bf16.msra.mxu0 %v1981
        %2211 = vmatpush.bf16.msra.mxu0 %v1980
        %2212 = vmatpush.bf16.msra.mxu0 %v1979
        %2213 = vmatmul.bf16.gmra.mxu0 %v1709
        %v2214 = vpop.f32.mrf.mxu0
        %v2215 = vadd.f32 %v2126, %v2214
        %v2216 = vpop.f32.mrf.mxu0
        %v2217 = vadd.f32 %v2128, %v2216
        %2218 = vmatmul.bf16.gmra.mxu0 %v1713
        %v2219 = vpop.f32.mrf.mxu0
        %v2220 = vadd.f32 %v2131, %v2219
        %v2221 = vpop.f32.mrf.mxu0
        %v2222 = vadd.f32 %v2133, %v2221
        %2223 = vmatmul.bf16.gmra.mxu0 %v1717
        %v2224 = vpop.f32.mrf.mxu0
        %v2225 = vadd.f32 %v2136, %v2224
        %v2226 = vpop.f32.mrf.mxu0
        %v2227 = vadd.f32 %v2138, %v2226
        %2228 = vmatmul.bf16.gmra.mxu0 %v1721
        %v2229 = vpop.f32.mrf.mxu0
        %v2230 = vadd.f32 %v2141, %v2229
        %v2231 = vpop.f32.mrf.mxu0
        %v2232 = vadd.f32 %v2143, %v2231
        %2233 = vmatmul.bf16.gmra.mxu0 %v1725
        %v2234 = vpop.f32.mrf.mxu0
        %v2235 = vadd.f32 %v2146, %v2234
        %v2236 = vpop.f32.mrf.mxu0
        %v2237 = vadd.f32 %v2148, %v2236
        %2238 = vmatmul.bf16.gmra.mxu0 %v1729
        %v2239 = vpop.f32.mrf.mxu0
        %v2240 = vadd.f32 %v2151, %v2239
        %v2241 = vpop.f32.mrf.mxu0
        %v2242 = vadd.f32 %v2153, %v2241
        %2243 = vmatmul.bf16.gmra.mxu0 %v1733
        %v2244 = vpop.f32.mrf.mxu0
        %v2245 = vadd.f32 %v2156, %v2244
        %v2246 = vpop.f32.mrf.mxu0
        %v2247 = vadd.f32 %v2158, %v2246
        %2248 = vmatmul.bf16.gmra.mxu0 %v1737
        %v2249 = vpop.f32.mrf.mxu0
        %v2250 = vadd.f32 %v2161, %v2249
        %v2251 = vpop.f32.mrf.mxu0
        %v2252 = vadd.f32 %v2163, %v2251
        %2253 = vmatmul.bf16.gmra.mxu0 %v1741
        %v2254 = vpop.f32.mrf.mxu0
        %v2255 = vadd.f32 %v2166, %v2254
        %v2256 = vpop.f32.mrf.mxu0
        %v2257 = vadd.f32 %v2168, %v2256
        %2258 = vmatmul.bf16.gmra.mxu0 %v1745
        %v2259 = vpop.f32.mrf.mxu0
        %v2260 = vadd.f32 %v2171, %v2259
        %v2261 = vpop.f32.mrf.mxu0
        %v2262 = vadd.f32 %v2173, %v2261
        %2263 = vmatmul.bf16.gmra.mxu0 %v1749
        %v2264 = vpop.f32.mrf.mxu0
        %v2265 = vadd.f32 %v2176, %v2264
        %v2266 = vpop.f32.mrf.mxu0
        %v2267 = vadd.f32 %v2178, %v2266
        %2268 = vmatmul.bf16.gmra.mxu0 %v1753
        %v2269 = vpop.f32.mrf.mxu0
        %v2270 = vadd.f32 %v2181, %v2269
        %v2271 = vpop.f32.mrf.mxu0
        %v2272 = vadd.f32 %v2183, %v2271
        %2273 = vmatmul.bf16.gmra.mxu0 %v1757
        %v2274 = vpop.f32.mrf.mxu0
        %v2275 = vadd.f32 %v2186, %v2274
        %v2276 = vpop.f32.mrf.mxu0
        %v2277 = vadd.f32 %v2188, %v2276
        %2278 = vmatmul.bf16.gmra.mxu0 %v1761
        %v2279 = vpop.f32.mrf.mxu0
        %v2280 = vadd.f32 %v2191, %v2279
        %v2281 = vpop.f32.mrf.mxu0
        %v2282 = vadd.f32 %v2193, %v2281
        %2283 = vmatmul.bf16.gmra.mxu0 %v1765
        %v2284 = vpop.f32.mrf.mxu0
        %v2285 = vadd.f32 %v2196, %v2284
        %v2286 = vpop.f32.mrf.mxu0
        %v2287 = vadd.f32 %v2198, %v2286
        %2288 = vmatmul.bf16.gmra.mxu0 %v1769
        %v2289 = vpop.f32.mrf.mxu0
        %v2290 = vadd.f32 %v2201, %v2289
        %v2291 = vpop.f32.mrf.mxu0
        %v2292 = vadd.f32 %v2203, %v2291
        %2293 = vdwg.mxu0
        %2294 = vmatpush.bf16.msra.mxu0 %v1994
        %2295 = vmatpush.bf16.msra.mxu0 %v1993
        %2296 = vmatpush.bf16.msra.mxu0 %v1992
        %2297 = vmatpush.bf16.msra.mxu0 %v1991
        %2298 = vmatpush.bf16.msra.mxu0 %v1990
        %2299 = vmatpush.bf16.msra.mxu0 %v1989
        %2300 = vmatpush.bf16.msra.mxu0 %v1988
        %2301 = vmatpush.bf16.msra.mxu0 %v1987
        %2302 = vmatmul.bf16.gmra.mxu0 %v1710
        %v2303 = vpop.f32.mrf.mxu0
        %v2304 = vadd.f32 %v2215, %v2303
        %v2305 = vpop.f32.mrf.mxu0
        %v2306 = vadd.f32 %v2217, %v2305
        %2307 = vmatmul.bf16.gmra.mxu0 %v1714
        %v2308 = vpop.f32.mrf.mxu0
        %v2309 = vadd.f32 %v2220, %v2308
        %v2310 = vpop.f32.mrf.mxu0
        %v2311 = vadd.f32 %v2222, %v2310
        %2312 = vmatmul.bf16.gmra.mxu0 %v1718
        %v2313 = vpop.f32.mrf.mxu0
        %v2314 = vadd.f32 %v2225, %v2313
        %v2315 = vpop.f32.mrf.mxu0
        %v2316 = vadd.f32 %v2227, %v2315
        %2317 = vmatmul.bf16.gmra.mxu0 %v1722
        %v2318 = vpop.f32.mrf.mxu0
        %v2319 = vadd.f32 %v2230, %v2318
        %v2320 = vpop.f32.mrf.mxu0
        %v2321 = vadd.f32 %v2232, %v2320
        %2322 = vmatmul.bf16.gmra.mxu0 %v1726
        %v2323 = vpop.f32.mrf.mxu0
        %v2324 = vadd.f32 %v2235, %v2323
        %v2325 = vpop.f32.mrf.mxu0
        %v2326 = vadd.f32 %v2237, %v2325
        %2327 = vmatmul.bf16.gmra.mxu0 %v1730
        %v2328 = vpop.f32.mrf.mxu0
        %v2329 = vadd.f32 %v2240, %v2328
        %v2330 = vpop.f32.mrf.mxu0
        %v2331 = vadd.f32 %v2242, %v2330
        %2332 = vmatmul.bf16.gmra.mxu0 %v1734
        %v2333 = vpop.f32.mrf.mxu0
        %v2334 = vadd.f32 %v2245, %v2333
        %v2335 = vpop.f32.mrf.mxu0
        %v2336 = vadd.f32 %v2247, %v2335
        %2337 = vmatmul.bf16.gmra.mxu0 %v1738
        %v2338 = vpop.f32.mrf.mxu0
        %v2339 = vadd.f32 %v2250, %v2338
        %v2340 = vpop.f32.mrf.mxu0
        %v2341 = vadd.f32 %v2252, %v2340
        %2342 = vmatmul.bf16.gmra.mxu0 %v1742
        %v2343 = vpop.f32.mrf.mxu0
        %v2344 = vadd.f32 %v2255, %v2343
        %v2345 = vpop.f32.mrf.mxu0
        %v2346 = vadd.f32 %v2257, %v2345
        %2347 = vmatmul.bf16.gmra.mxu0 %v1746
        %v2348 = vpop.f32.mrf.mxu0
        %v2349 = vadd.f32 %v2260, %v2348
        %v2350 = vpop.f32.mrf.mxu0
        %v2351 = vadd.f32 %v2262, %v2350
        %2352 = vmatmul.bf16.gmra.mxu0 %v1750
        %v2353 = vpop.f32.mrf.mxu0
        %v2354 = vadd.f32 %v2265, %v2353
        %v2355 = vpop.f32.mrf.mxu0
        %v2356 = vadd.f32 %v2267, %v2355
        %2357 = vmatmul.bf16.gmra.mxu0 %v1754
        %v2358 = vpop.f32.mrf.mxu0
        %v2359 = vadd.f32 %v2270, %v2358
        %v2360 = vpop.f32.mrf.mxu0
        %v2361 = vadd.f32 %v2272, %v2360
        %2362 = vmatmul.bf16.gmra.mxu0 %v1758
        %v2363 = vpop.f32.mrf.mxu0
        %v2364 = vadd.f32 %v2275, %v2363
        %v2365 = vpop.f32.mrf.mxu0
        %v2366 = vadd.f32 %v2277, %v2365
        %2367 = vmatmul.bf16.gmra.mxu0 %v1762
        %v2368 = vpop.f32.mrf.mxu0
        %v2369 = vadd.f32 %v2280, %v2368
        %v2370 = vpop.f32.mrf.mxu0
        %v2371 = vadd.f32 %v2282, %v2370
        %2372 = vmatmul.bf16.gmra.mxu0 %v1766
        %v2373 = vpop.f32.mrf.mxu0
        %v2374 = vadd.f32 %v2285, %v2373
        %v2375 = vpop.f32.mrf.mxu0
        %v2376 = vadd.f32 %v2287, %v2375
        %2377 = vmatmul.bf16.gmra.mxu0 %v1770
        %v2378 = vpop.f32.mrf.mxu0
        %v2379 = vadd.f32 %v2290, %v2378
        %v2380 = vpop.f32.mrf.mxu0
        %v2381 = vadd.f32 %v2292, %v2380
        %2382 = vdwg.mxu0
        %v2383 = vadd.f32 %v487, %v2304
        %v2384 = vadd.f32 %v488, %v2306
        %v2385 = vadd.f32 %v489, %v2309
        %v2386 = vadd.f32 %v490, %v2311
        %v2387 = vadd.f32 %v491, %v2314
        %v2388 = vadd.f32 %v492, %v2316
        %v2389 = vadd.f32 %v493, %v2319
        %v2390 = vadd.f32 %v494, %v2321
        %v2391 = vadd.f32 %v495, %v2324
        %v2392 = vadd.f32 %v496, %v2326
        %v2393 = vadd.f32 %v497, %v2329
        %v2394 = vadd.f32 %v498, %v2331
        %v2395 = vadd.f32 %v499, %v2334
        %v2396 = vadd.f32 %v500, %v2336
        %v2397 = vadd.f32 %v501, %v2339
        %v2398 = vadd.f32 %v502, %v2341
        %v2399 = vadd.f32 %v503, %v2344
        %v2400 = vadd.f32 %v504, %v2346
        %v2401 = vadd.f32 %v505, %v2349
        %v2402 = vadd.f32 %v506, %v2351
        %v2403 = vadd.f32 %v507, %v2354
        %v2404 = vadd.f32 %v508, %v2356
        %v2405 = vadd.f32 %v509, %v2359
        %v2406 = vadd.f32 %v510, %v2361
        %v2407 = vadd.f32 %v511, %v2364
        %v2408 = vadd.f32 %v512, %v2366
        %v2409 = vadd.f32 %v513, %v2369
        %v2410 = vadd.f32 %v514, %v2371
        %v2411 = vadd.f32 %v515, %v2374
        %v2412 = vadd.f32 %v516, %v2376
        %v2413 = vadd.f32 %v517, %v2379
        %v2414 = vadd.f32 %v518, %v2381
        %2415 = vst [vmem:[#allocation2] sm:$0xff] %v2383
        %2416 = vst [vmem:[#allocation2 + $0x8] sm:$0xff] %v2384
        %2417 = vst [vmem:[#allocation2 + $0x10] sm:$0xff] %v2385
        %2418 = vst [vmem:[#allocation2 + $0x18] sm:$0xff] %v2386
        %2419 = vst [vmem:[#allocation2 + $0x20] sm:$0xff] %v2387
        %2420 = vst [vmem:[#allocation2 + $0x28] sm:$0xff] %v2388
        %2421 = vst [vmem:[#allocation2 + $0x30] sm:$0xff] %v2389
        %2422 = vst [vmem:[#allocation2 + $0x38] sm:$0xff] %v2390
        %2423 = vst [vmem:[#allocation2 + $0x40] sm:$0xff] %v2391
        %2424 = vst [vmem:[#allocation2 + $0x48] sm:$0xff] %v2392
        %2425 = vst [vmem:[#allocation2 + $0x50] sm:$0xff] %v2393
        %2426 = vst [vmem:[#allocation2 + $0x58] sm:$0xff] %v2394
        %2427 = vst [vmem:[#allocation2 + $0x60] sm:$0xff] %v2395
        %2428 = vst [vmem:[#allocation2 + $0x68] sm:$0xff] %v2396
        %2429 = vst [vmem:[#allocation2 + $0x70] sm:$0xff] %v2397
        %2430 = vst [vmem:[#allocation2 + $0x78] sm:$0xff] %v2398
        %2431 = vst [vmem:[#allocation2 + $0x80] sm:$0xff] %v2399
        %2432 = vst [vmem:[#allocation2 + $0x88] sm:$0xff] %v2400
        %2433 = vst [vmem:[#allocation2 + $0x90] sm:$0xff] %v2401
        %2434 = vst [vmem:[#allocation2 + $0x98] sm:$0xff] %v2402
        %2435 = vst [vmem:[#allocation2 + $0xa0] sm:$0xff] %v2403
        %2436 = vst [vmem:[#allocation2 + $0xa8] sm:$0xff] %v2404
        %2437 = vst [vmem:[#allocation2 + $0xb0] sm:$0xff] %v2405
        %2438 = vst [vmem:[#allocation2 + $0xb8] sm:$0xff] %v2406
        %2439 = vst [vmem:[#allocation2 + $0xc0] sm:$0xff] %v2407
        %2440 = vst [vmem:[#allocation2 + $0xc8] sm:$0xff] %v2408
        %2441 = vst [vmem:[#allocation2 + $0xd0] sm:$0xff] %v2409
        %2442 = vst [vmem:[#allocation2 + $0xd8] sm:$0xff] %v2410
        %2443 = vst [vmem:[#allocation2 + $0xe0] sm:$0xff] %v2411
        %2444 = vst [vmem:[#allocation2 + $0xe8] sm:$0xff] %v2412
        %2445 = vst [vmem:[#allocation2 + $0xf0] sm:$0xff] %v2413
        %2446 = vst [vmem:[#allocation2 + $0xf8] sm:$0xff] %v2414
        // Predicated region
        $region53: #{forward.5} parent=39 // pred_check
          %p2447 = pneg %p316
        $region54: #{forward.5} parent=39 // pred_check_branch
          %2449 = sbr.rel (%p2447) target = $region56
        $region55: #{forward.5} parent=39 // pred_region
          %v2450 = vld [vmem:[#allocation2] sm:$0xff]
          %v2451 = vld [vmem:[#allocation2 + $0x8] sm:$0xff]
          %v2452 = vld [vmem:[#allocation2 + $0x10] sm:$0xff]
          %v2453 = vld [vmem:[#allocation2 + $0x18] sm:$0xff]
          %v2454 = vld [vmem:[#allocation2 + $0x20] sm:$0xff]
          %v2455 = vld [vmem:[#allocation2 + $0x28] sm:$0xff]
          %v2456 = vld [vmem:[#allocation2 + $0x30] sm:$0xff]
          %v2457 = vld [vmem:[#allocation2 + $0x38] sm:$0xff]
          %v2458 = vld [vmem:[#allocation2 + $0x40] sm:$0xff]
          %v2459 = vld [vmem:[#allocation2 + $0x48] sm:$0xff]
          %v2460 = vld [vmem:[#allocation2 + $0x50] sm:$0xff]
          %v2461 = vld [vmem:[#allocation2 + $0x58] sm:$0xff]
          %v2462 = vld [vmem:[#allocation2 + $0x60] sm:$0xff]
          %v2463 = vld [vmem:[#allocation2 + $0x68] sm:$0xff]
          %v2464 = vld [vmem:[#allocation2 + $0x70] sm:$0xff]
          %v2465 = vld [vmem:[#allocation2 + $0x78] sm:$0xff]
          %v2466 = vld [vmem:[#allocation2 + $0x80] sm:$0xff]
          %v2467 = vld [vmem:[#allocation2 + $0x88] sm:$0xff]
          %v2468 = vld [vmem:[#allocation2 + $0x90] sm:$0xff]
          %v2469 = vld [vmem:[#allocation2 + $0x98] sm:$0xff]
          %v2470 = vld [vmem:[#allocation2 + $0xa0] sm:$0xff]
          %v2471 = vld [vmem:[#allocation2 + $0xa8] sm:$0xff]
          %v2472 = vld [vmem:[#allocation2 + $0xb0] sm:$0xff]
          %v2473 = vld [vmem:[#allocation2 + $0xb8] sm:$0xff]
          %v2474 = vld [vmem:[#allocation2 + $0xc0] sm:$0xff]
          %v2475 = vld [vmem:[#allocation2 + $0xc8] sm:$0xff]
          %v2476 = vld [vmem:[#allocation2 + $0xd0] sm:$0xff]
          %v2477 = vld [vmem:[#allocation2 + $0xd8] sm:$0xff]
          %v2478 = vld [vmem:[#allocation2 + $0xe0] sm:$0xff]
          %v2479 = vld [vmem:[#allocation2 + $0xe8] sm:$0xff]
          %v2480 = vld [vmem:[#allocation2 + $0xf0] sm:$0xff]
          %v2481 = vld [vmem:[#allocation2 + $0xf8] sm:$0xff]
          %v2482 = vld [vmem:[%s4] sm:$0x1]
          %v2484 = vperm.slane %v2482, 0
          %v2486 = vadd.f32 %v2450, %v2484
          %v2487 = vadd.f32 %v2451, %v2484
          %v2488 = vadd.f32 %v2452, %v2484
          %v2489 = vadd.f32 %v2453, %v2484
          %v2490 = vadd.f32 %v2454, %v2484
          %v2491 = vadd.f32 %v2455, %v2484
          %v2492 = vadd.f32 %v2456, %v2484
          %v2493 = vadd.f32 %v2457, %v2484
          %v2494 = vadd.f32 %v2458, %v2484
          %v2495 = vadd.f32 %v2459, %v2484
          %v2496 = vadd.f32 %v2460, %v2484
          %v2497 = vadd.f32 %v2461, %v2484
          %v2498 = vadd.f32 %v2462, %v2484
          %v2499 = vadd.f32 %v2463, %v2484
          %v2500 = vadd.f32 %v2464, %v2484
          %v2501 = vadd.f32 %v2465, %v2484
          %v2502 = vadd.f32 %v2466, %v2484
          %v2503 = vadd.f32 %v2467, %v2484
          %v2504 = vadd.f32 %v2468, %v2484
          %v2505 = vadd.f32 %v2469, %v2484
          %v2506 = vadd.f32 %v2470, %v2484
          %v2507 = vadd.f32 %v2471, %v2484
          %v2508 = vadd.f32 %v2472, %v2484
          %v2509 = vadd.f32 %v2473, %v2484
          %v2510 = vadd.f32 %v2474, %v2484
          %v2511 = vadd.f32 %v2475, %v2484
          %v2512 = vadd.f32 %v2476, %v2484
          %v2513 = vadd.f32 %v2477, %v2484
          %v2514 = vadd.f32 %v2478, %v2484
          %v2515 = vadd.f32 %v2479, %v2484
          %v2516 = vadd.f32 %v2480, %v2484
          %v2517 = vadd.f32 %v2481, %v2484
          %v2518 = vxor.u32 %v2486, 2147483648
          %v2519 = vxor.u32 %v2487, 2147483648
          %v2520 = vxor.u32 %v2488, 2147483648
          %v2521 = vxor.u32 %v2489, 2147483648
          %v2522 = vxor.u32 %v2490, 2147483648
          %v2523 = vxor.u32 %v2491, 2147483648
          %v2524 = vxor.u32 %v2492, 2147483648
          %v2525 = vxor.u32 %v2493, 2147483648
          %v2526 = vxor.u32 %v2494, 2147483648
          %v2527 = vxor.u32 %v2495, 2147483648
          %v2528 = vxor.u32 %v2496, 2147483648
          %v2529 = vxor.u32 %v2497, 2147483648
          %v2530 = vxor.u32 %v2498, 2147483648
          %v2531 = vxor.u32 %v2499, 2147483648
          %v2532 = vxor.u32 %v2500, 2147483648
          %v2533 = vxor.u32 %v2501, 2147483648
          %v2534 = vxor.u32 %v2502, 2147483648
          %v2535 = vxor.u32 %v2503, 2147483648
          %v2536 = vxor.u32 %v2504, 2147483648
          %v2537 = vxor.u32 %v2505, 2147483648
          %v2538 = vxor.u32 %v2506, 2147483648
          %v2539 = vxor.u32 %v2507, 2147483648
          %v2540 = vxor.u32 %v2508, 2147483648
          %v2541 = vxor.u32 %v2509, 2147483648
          %v2542 = vxor.u32 %v2510, 2147483648
          %v2543 = vxor.u32 %v2511, 2147483648
          %v2544 = vxor.u32 %v2512, 2147483648
          %v2545 = vxor.u32 %v2513, 2147483648
          %v2546 = vxor.u32 %v2514, 2147483648
          %v2547 = vxor.u32 %v2515, 2147483648
          %v2548 = vxor.u32 %v2516, 2147483648
          %v2549 = vxor.u32 %v2517, 2147483648
          %v2550 = vmul.f32 %v2518, 1.442695
          %v2551 = vpow.pop %v2550
          %v2552 = vmul.f32 %v2519, 1.442695
          %v2553 = vpow.pop %v2552
          %v2554 = vmul.f32 %v2520, 1.442695
          %v2555 = vpow.pop %v2554
          %v2556 = vmul.f32 %v2521, 1.442695
          %v2557 = vpow.pop %v2556
          %v2558 = vmul.f32 %v2522, 1.442695
          %v2559 = vpow.pop %v2558
          %v2560 = vmul.f32 %v2523, 1.442695
          %v2561 = vpow.pop %v2560
          %v2562 = vmul.f32 %v2524, 1.442695
          %v2563 = vpow.pop %v2562
          %v2564 = vmul.f32 %v2525, 1.442695
          %v2565 = vpow.pop %v2564
          %v2566 = vmul.f32 %v2526, 1.442695
          %v2567 = vpow.pop %v2566
          %v2568 = vmul.f32 %v2527, 1.442695
          %v2569 = vpow.pop %v2568
          %v2570 = vmul.f32 %v2528, 1.442695
          %v2571 = vpow.pop %v2570
          %v2572 = vmul.f32 %v2529, 1.442695
          %v2573 = vpow.pop %v2572
          %v2574 = vmul.f32 %v2530, 1.442695
          %v2575 = vpow.pop %v2574
          %v2576 = vmul.f32 %v2531, 1.442695
          %v2577 = vpow.pop %v2576
          %v2578 = vmul.f32 %v2532, 1.442695
          %v2579 = vpow.pop %v2578
          %v2580 = vmul.f32 %v2533, 1.442695
          %v2581 = vpow.pop %v2580
          %v2582 = vmul.f32 %v2534, 1.442695
          %v2583 = vpow.pop %v2582
          %v2584 = vmul.f32 %v2535, 1.442695
          %v2585 = vpow.pop %v2584
          %v2586 = vmul.f32 %v2536, 1.442695
          %v2587 = vpow.pop %v2586
          %v2588 = vmul.f32 %v2537, 1.442695
          %v2589 = vpow.pop %v2588
          %v2590 = vmul.f32 %v2538, 1.442695
          %v2591 = vpow.pop %v2590
          %v2592 = vmul.f32 %v2539, 1.442695
          %v2593 = vpow.pop %v2592
          %v2594 = vmul.f32 %v2540, 1.442695
          %v2595 = vpow.pop %v2594
          %v2596 = vmul.f32 %v2541, 1.442695
          %v2597 = vpow.pop %v2596
          %v2598 = vmul.f32 %v2542, 1.442695
          %v2599 = vpow.pop %v2598
          %v2600 = vmul.f32 %v2543, 1.442695
          %v2601 = vpow.pop %v2600
          %v2602 = vmul.f32 %v2544, 1.442695
          %v2603 = vpow.pop %v2602
          %v2604 = vmul.f32 %v2545, 1.442695
          %v2605 = vpow.pop %v2604
          %v2606 = vmul.f32 %v2546, 1.442695
          %v2607 = vpow.pop %v2606
          %v2608 = vmul.f32 %v2547, 1.442695
          %v2609 = vpow.pop %v2608
          %v2610 = vmul.f32 %v2548, 1.442695
          %v2611 = vpow.pop %v2610
          %v2612 = vmul.f32 %v2549, 1.442695
          %v2613 = vpow.pop %v2612
          %v2614 = vadd.f32 %v2551, 1.0
          %v2615 = vadd.f32 %v2553, 1.0
          %v2616 = vadd.f32 %v2555, 1.0
          %v2617 = vadd.f32 %v2557, 1.0
          %v2618 = vadd.f32 %v2559, 1.0
          %v2619 = vadd.f32 %v2561, 1.0
          %v2620 = vadd.f32 %v2563, 1.0
          %v2621 = vadd.f32 %v2565, 1.0
          %v2622 = vadd.f32 %v2567, 1.0
          %v2623 = vadd.f32 %v2569, 1.0
          %v2624 = vadd.f32 %v2571, 1.0
          %v2625 = vadd.f32 %v2573, 1.0
          %v2626 = vadd.f32 %v2575, 1.0
          %v2627 = vadd.f32 %v2577, 1.0
          %v2628 = vadd.f32 %v2579, 1.0
          %v2629 = vadd.f32 %v2581, 1.0
          %v2630 = vadd.f32 %v2583, 1.0
          %v2631 = vadd.f32 %v2585, 1.0
          %v2632 = vadd.f32 %v2587, 1.0
          %v2633 = vadd.f32 %v2589, 1.0
          %v2634 = vadd.f32 %v2591, 1.0
          %v2635 = vadd.f32 %v2593, 1.0
          %v2636 = vadd.f32 %v2595, 1.0
          %v2637 = vadd.f32 %v2597, 1.0
          %v2638 = vadd.f32 %v2599, 1.0
          %v2639 = vadd.f32 %v2601, 1.0
          %v2640 = vadd.f32 %v2603, 1.0
          %v2641 = vadd.f32 %v2605, 1.0
          %v2642 = vadd.f32 %v2607, 1.0
          %v2643 = vadd.f32 %v2609, 1.0
          %v2644 = vadd.f32 %v2611, 1.0
          %v2645 = vadd.f32 %v2613, 1.0
          %v2646 = vrcp.pop %v2614
          %v2647 = vmul.f32 %v2614, %v2646
          %v2648 = vsub.f32 1.0, %v2647
          %v2649 = vmul.f32 %v2646, %v2648
          %v2650 = vadd.f32 %v2646, %v2649
          %vm2651 = vweird.f32 %v2614
          %vm2652 = vweird.f32 %v2646
          %vm2653 = vmor %vm2651, %vm2652
          %v2654 = vsel %vm2653, %v2646, %v2650
          %v2655 = vand.u32 2147483647, %v2614
          %vm2656 = vcmp.eq.f32.partialorder %v2655, 8.507059e+37
          %v2657 = vand.u32 %v2614, 2147483648
          %v2658 = vor.u32 1.1754944e-38, %v2657
          %v2659 = vsel %vm2656, %v2658, %v2654
          %v2660 = vmul.f32 1.0, %v2659
          %v2661 = vrcp.pop %v2615
          %v2662 = vmul.f32 %v2615, %v2661
          %v2663 = vsub.f32 1.0, %v2662
          %v2664 = vmul.f32 %v2661, %v2663
          %v2665 = vadd.f32 %v2661, %v2664
          %vm2666 = vweird.f32 %v2615
          %vm2667 = vweird.f32 %v2661
          %vm2668 = vmor %vm2666, %vm2667
          %v2669 = vsel %vm2668, %v2661, %v2665
          %v2670 = vand.u32 2147483647, %v2615
          %vm2671 = vcmp.eq.f32.partialorder %v2670, 8.507059e+37
          %v2672 = vand.u32 %v2615, 2147483648
          %v2673 = vor.u32 1.1754944e-38, %v2672
          %v2674 = vsel %vm2671, %v2673, %v2669
          %v2675 = vmul.f32 1.0, %v2674
          %v2676 = vrcp.pop %v2616
          %v2677 = vmul.f32 %v2616, %v2676
          %v2678 = vsub.f32 1.0, %v2677
          %v2679 = vmul.f32 %v2676, %v2678
          %v2680 = vadd.f32 %v2676, %v2679
          %vm2681 = vweird.f32 %v2616
          %vm2682 = vweird.f32 %v2676
          %vm2683 = vmor %vm2681, %vm2682
          %v2684 = vsel %vm2683, %v2676, %v2680
          %v2685 = vand.u32 2147483647, %v2616
          %vm2686 = vcmp.eq.f32.partialorder %v2685, 8.507059e+37
          %v2687 = vand.u32 %v2616, 2147483648
          %v2688 = vor.u32 1.1754944e-38, %v2687
          %v2689 = vsel %vm2686, %v2688, %v2684
          %v2690 = vmul.f32 1.0, %v2689
          %v2691 = vrcp.pop %v2617
          %v2692 = vmul.f32 %v2617, %v2691
          %v2693 = vsub.f32 1.0, %v2692
          %v2694 = vmul.f32 %v2691, %v2693
          %v2695 = vadd.f32 %v2691, %v2694
          %vm2696 = vweird.f32 %v2617
          %vm2697 = vweird.f32 %v2691
          %vm2698 = vmor %vm2696, %vm2697
          %v2699 = vsel %vm2698, %v2691, %v2695
          %v2700 = vand.u32 2147483647, %v2617
          %vm2701 = vcmp.eq.f32.partialorder %v2700, 8.507059e+37
          %v2702 = vand.u32 %v2617, 2147483648
          %v2703 = vor.u32 1.1754944e-38, %v2702
          %v2704 = vsel %vm2701, %v2703, %v2699
          %v2705 = vmul.f32 1.0, %v2704
          %v2706 = vrcp.pop %v2618
          %v2707 = vmul.f32 %v2618, %v2706
          %v2708 = vsub.f32 1.0, %v2707
          %v2709 = vmul.f32 %v2706, %v2708
          %v2710 = vadd.f32 %v2706, %v2709
          %vm2711 = vweird.f32 %v2618
          %vm2712 = vweird.f32 %v2706
          %vm2713 = vmor %vm2711, %vm2712
          %v2714 = vsel %vm2713, %v2706, %v2710
          %v2715 = vand.u32 2147483647, %v2618
          %vm2716 = vcmp.eq.f32.partialorder %v2715, 8.507059e+37
          %v2717 = vand.u32 %v2618, 2147483648
          %v2718 = vor.u32 1.1754944e-38, %v2717
          %v2719 = vsel %vm2716, %v2718, %v2714
          %v2720 = vmul.f32 1.0, %v2719
          %v2721 = vrcp.pop %v2619
          %v2722 = vmul.f32 %v2619, %v2721
          %v2723 = vsub.f32 1.0, %v2722
          %v2724 = vmul.f32 %v2721, %v2723
          %v2725 = vadd.f32 %v2721, %v2724
          %vm2726 = vweird.f32 %v2619
          %vm2727 = vweird.f32 %v2721
          %vm2728 = vmor %vm2726, %vm2727
          %v2729 = vsel %vm2728, %v2721, %v2725
          %v2730 = vand.u32 2147483647, %v2619
          %vm2731 = vcmp.eq.f32.partialorder %v2730, 8.507059e+37
          %v2732 = vand.u32 %v2619, 2147483648
          %v2733 = vor.u32 1.1754944e-38, %v2732
          %v2734 = vsel %vm2731, %v2733, %v2729
          %v2735 = vmul.f32 1.0, %v2734
          %v2736 = vrcp.pop %v2620
          %v2737 = vmul.f32 %v2620, %v2736
          %v2738 = vsub.f32 1.0, %v2737
          %v2739 = vmul.f32 %v2736, %v2738
          %v2740 = vadd.f32 %v2736, %v2739
          %vm2741 = vweird.f32 %v2620
          %vm2742 = vweird.f32 %v2736
          %vm2743 = vmor %vm2741, %vm2742
          %v2744 = vsel %vm2743, %v2736, %v2740
          %v2745 = vand.u32 2147483647, %v2620
          %vm2746 = vcmp.eq.f32.partialorder %v2745, 8.507059e+37
          %v2747 = vand.u32 %v2620, 2147483648
          %v2748 = vor.u32 1.1754944e-38, %v2747
          %v2749 = vsel %vm2746, %v2748, %v2744
          %v2750 = vmul.f32 1.0, %v2749
          %v2751 = vrcp.pop %v2621
          %v2752 = vmul.f32 %v2621, %v2751
          %v2753 = vsub.f32 1.0, %v2752
          %v2754 = vmul.f32 %v2751, %v2753
          %v2755 = vadd.f32 %v2751, %v2754
          %vm2756 = vweird.f32 %v2621
          %vm2757 = vweird.f32 %v2751
          %vm2758 = vmor %vm2756, %vm2757
          %v2759 = vsel %vm2758, %v2751, %v2755
          %v2760 = vand.u32 2147483647, %v2621
          %vm2761 = vcmp.eq.f32.partialorder %v2760, 8.507059e+37
          %v2762 = vand.u32 %v2621, 2147483648
          %v2763 = vor.u32 1.1754944e-38, %v2762
          %v2764 = vsel %vm2761, %v2763, %v2759
          %v2765 = vmul.f32 1.0, %v2764
          %v2766 = vrcp.pop %v2622
          %v2767 = vmul.f32 %v2622, %v2766
          %v2768 = vsub.f32 1.0, %v2767
          %v2769 = vmul.f32 %v2766, %v2768
          %v2770 = vadd.f32 %v2766, %v2769
          %vm2771 = vweird.f32 %v2622
          %vm2772 = vweird.f32 %v2766
          %vm2773 = vmor %vm2771, %vm2772
          %v2774 = vsel %vm2773, %v2766, %v2770
          %v2775 = vand.u32 2147483647, %v2622
          %vm2776 = vcmp.eq.f32.partialorder %v2775, 8.507059e+37
          %v2777 = vand.u32 %v2622, 2147483648
          %v2778 = vor.u32 1.1754944e-38, %v2777
          %v2779 = vsel %vm2776, %v2778, %v2774
          %v2780 = vmul.f32 1.0, %v2779
          %v2781 = vrcp.pop %v2623
          %v2782 = vmul.f32 %v2623, %v2781
          %v2783 = vsub.f32 1.0, %v2782
          %v2784 = vmul.f32 %v2781, %v2783
          %v2785 = vadd.f32 %v2781, %v2784
          %vm2786 = vweird.f32 %v2623
          %vm2787 = vweird.f32 %v2781
          %vm2788 = vmor %vm2786, %vm2787
          %v2789 = vsel %vm2788, %v2781, %v2785
          %v2790 = vand.u32 2147483647, %v2623
          %vm2791 = vcmp.eq.f32.partialorder %v2790, 8.507059e+37
          %v2792 = vand.u32 %v2623, 2147483648
          %v2793 = vor.u32 1.1754944e-38, %v2792
          %v2794 = vsel %vm2791, %v2793, %v2789
          %v2795 = vmul.f32 1.0, %v2794
          %v2796 = vrcp.pop %v2624
          %v2797 = vmul.f32 %v2624, %v2796
          %v2798 = vsub.f32 1.0, %v2797
          %v2799 = vmul.f32 %v2796, %v2798
          %v2800 = vadd.f32 %v2796, %v2799
          %vm2801 = vweird.f32 %v2624
          %vm2802 = vweird.f32 %v2796
          %vm2803 = vmor %vm2801, %vm2802
          %v2804 = vsel %vm2803, %v2796, %v2800
          %v2805 = vand.u32 2147483647, %v2624
          %vm2806 = vcmp.eq.f32.partialorder %v2805, 8.507059e+37
          %v2807 = vand.u32 %v2624, 2147483648
          %v2808 = vor.u32 1.1754944e-38, %v2807
          %v2809 = vsel %vm2806, %v2808, %v2804
          %v2810 = vmul.f32 1.0, %v2809
          %v2811 = vrcp.pop %v2625
          %v2812 = vmul.f32 %v2625, %v2811
          %v2813 = vsub.f32 1.0, %v2812
          %v2814 = vmul.f32 %v2811, %v2813
          %v2815 = vadd.f32 %v2811, %v2814
          %vm2816 = vweird.f32 %v2625
          %vm2817 = vweird.f32 %v2811
          %vm2818 = vmor %vm2816, %vm2817
          %v2819 = vsel %vm2818, %v2811, %v2815
          %v2820 = vand.u32 2147483647, %v2625
          %vm2821 = vcmp.eq.f32.partialorder %v2820, 8.507059e+37
          %v2822 = vand.u32 %v2625, 2147483648
          %v2823 = vor.u32 1.1754944e-38, %v2822
          %v2824 = vsel %vm2821, %v2823, %v2819
          %v2825 = vmul.f32 1.0, %v2824
          %v2826 = vrcp.pop %v2626
          %v2827 = vmul.f32 %v2626, %v2826
          %v2828 = vsub.f32 1.0, %v2827
          %v2829 = vmul.f32 %v2826, %v2828
          %v2830 = vadd.f32 %v2826, %v2829
          %vm2831 = vweird.f32 %v2626
          %vm2832 = vweird.f32 %v2826
          %vm2833 = vmor %vm2831, %vm2832
          %v2834 = vsel %vm2833, %v2826, %v2830
          %v2835 = vand.u32 2147483647, %v2626
          %vm2836 = vcmp.eq.f32.partialorder %v2835, 8.507059e+37
          %v2837 = vand.u32 %v2626, 2147483648
          %v2838 = vor.u32 1.1754944e-38, %v2837
          %v2839 = vsel %vm2836, %v2838, %v2834
          %v2840 = vmul.f32 1.0, %v2839
          %v2841 = vrcp.pop %v2627
          %v2842 = vmul.f32 %v2627, %v2841
          %v2843 = vsub.f32 1.0, %v2842
          %v2844 = vmul.f32 %v2841, %v2843
          %v2845 = vadd.f32 %v2841, %v2844
          %vm2846 = vweird.f32 %v2627
          %vm2847 = vweird.f32 %v2841
          %vm2848 = vmor %vm2846, %vm2847
          %v2849 = vsel %vm2848, %v2841, %v2845
          %v2850 = vand.u32 2147483647, %v2627
          %vm2851 = vcmp.eq.f32.partialorder %v2850, 8.507059e+37
          %v2852 = vand.u32 %v2627, 2147483648
          %v2853 = vor.u32 1.1754944e-38, %v2852
          %v2854 = vsel %vm2851, %v2853, %v2849
          %v2855 = vmul.f32 1.0, %v2854
          %v2856 = vrcp.pop %v2628
          %v2857 = vmul.f32 %v2628, %v2856
          %v2858 = vsub.f32 1.0, %v2857
          %v2859 = vmul.f32 %v2856, %v2858
          %v2860 = vadd.f32 %v2856, %v2859
          %vm2861 = vweird.f32 %v2628
          %vm2862 = vweird.f32 %v2856
          %vm2863 = vmor %vm2861, %vm2862
          %v2864 = vsel %vm2863, %v2856, %v2860
          %v2865 = vand.u32 2147483647, %v2628
          %vm2866 = vcmp.eq.f32.partialorder %v2865, 8.507059e+37
          %v2867 = vand.u32 %v2628, 2147483648
          %v2868 = vor.u32 1.1754944e-38, %v2867
          %v2869 = vsel %vm2866, %v2868, %v2864
          %v2870 = vmul.f32 1.0, %v2869
          %v2871 = vrcp.pop %v2629
          %v2872 = vmul.f32 %v2629, %v2871
          %v2873 = vsub.f32 1.0, %v2872
          %v2874 = vmul.f32 %v2871, %v2873
          %v2875 = vadd.f32 %v2871, %v2874
          %vm2876 = vweird.f32 %v2629
          %vm2877 = vweird.f32 %v2871
          %vm2878 = vmor %vm2876, %vm2877
          %v2879 = vsel %vm2878, %v2871, %v2875
          %v2880 = vand.u32 2147483647, %v2629
          %vm2881 = vcmp.eq.f32.partialorder %v2880, 8.507059e+37
          %v2882 = vand.u32 %v2629, 2147483648
          %v2883 = vor.u32 1.1754944e-38, %v2882
          %v2884 = vsel %vm2881, %v2883, %v2879
          %v2885 = vmul.f32 1.0, %v2884
          %v2886 = vrcp.pop %v2630
          %v2887 = vmul.f32 %v2630, %v2886
          %v2888 = vsub.f32 1.0, %v2887
          %v2889 = vmul.f32 %v2886, %v2888
          %v2890 = vadd.f32 %v2886, %v2889
          %vm2891 = vweird.f32 %v2630
          %vm2892 = vweird.f32 %v2886
          %vm2893 = vmor %vm2891, %vm2892
          %v2894 = vsel %vm2893, %v2886, %v2890
          %v2895 = vand.u32 2147483647, %v2630
          %vm2896 = vcmp.eq.f32.partialorder %v2895, 8.507059e+37
          %v2897 = vand.u32 %v2630, 2147483648
          %v2898 = vor.u32 1.1754944e-38, %v2897
          %v2899 = vsel %vm2896, %v2898, %v2894
          %v2900 = vmul.f32 1.0, %v2899
          %v2901 = vrcp.pop %v2631
          %v2902 = vmul.f32 %v2631, %v2901
          %v2903 = vsub.f32 1.0, %v2902
          %v2904 = vmul.f32 %v2901, %v2903
          %v2905 = vadd.f32 %v2901, %v2904
          %vm2906 = vweird.f32 %v2631
          %vm2907 = vweird.f32 %v2901
          %vm2908 = vmor %vm2906, %vm2907
          %v2909 = vsel %vm2908, %v2901, %v2905
          %v2910 = vand.u32 2147483647, %v2631
          %vm2911 = vcmp.eq.f32.partialorder %v2910, 8.507059e+37
          %v2912 = vand.u32 %v2631, 2147483648
          %v2913 = vor.u32 1.1754944e-38, %v2912
          %v2914 = vsel %vm2911, %v2913, %v2909
          %v2915 = vmul.f32 1.0, %v2914
          %v2916 = vrcp.pop %v2632
          %v2917 = vmul.f32 %v2632, %v2916
          %v2918 = vsub.f32 1.0, %v2917
          %v2919 = vmul.f32 %v2916, %v2918
          %v2920 = vadd.f32 %v2916, %v2919
          %vm2921 = vweird.f32 %v2632
          %vm2922 = vweird.f32 %v2916
          %vm2923 = vmor %vm2921, %vm2922
          %v2924 = vsel %vm2923, %v2916, %v2920
          %v2925 = vand.u32 2147483647, %v2632
          %vm2926 = vcmp.eq.f32.partialorder %v2925, 8.507059e+37
          %v2927 = vand.u32 %v2632, 2147483648
          %v2928 = vor.u32 1.1754944e-38, %v2927
          %v2929 = vsel %vm2926, %v2928, %v2924
          %v2930 = vmul.f32 1.0, %v2929
          %v2931 = vrcp.pop %v2633
          %v2932 = vmul.f32 %v2633, %v2931
          %v2933 = vsub.f32 1.0, %v2932
          %v2934 = vmul.f32 %v2931, %v2933
          %v2935 = vadd.f32 %v2931, %v2934
          %vm2936 = vweird.f32 %v2633
          %vm2937 = vweird.f32 %v2931
          %vm2938 = vmor %vm2936, %vm2937
          %v2939 = vsel %vm2938, %v2931, %v2935
          %v2940 = vand.u32 2147483647, %v2633
          %vm2941 = vcmp.eq.f32.partialorder %v2940, 8.507059e+37
          %v2942 = vand.u32 %v2633, 2147483648
          %v2943 = vor.u32 1.1754944e-38, %v2942
          %v2944 = vsel %vm2941, %v2943, %v2939
          %v2945 = vmul.f32 1.0, %v2944
          %v2946 = vrcp.pop %v2634
          %v2947 = vmul.f32 %v2634, %v2946
          %v2948 = vsub.f32 1.0, %v2947
          %v2949 = vmul.f32 %v2946, %v2948
          %v2950 = vadd.f32 %v2946, %v2949
          %vm2951 = vweird.f32 %v2634
          %vm2952 = vweird.f32 %v2946
          %vm2953 = vmor %vm2951, %vm2952
          %v2954 = vsel %vm2953, %v2946, %v2950
          %v2955 = vand.u32 2147483647, %v2634
          %vm2956 = vcmp.eq.f32.partialorder %v2955, 8.507059e+37
          %v2957 = vand.u32 %v2634, 2147483648
          %v2958 = vor.u32 1.1754944e-38, %v2957
          %v2959 = vsel %vm2956, %v2958, %v2954
          %v2960 = vmul.f32 1.0, %v2959
          %v2961 = vrcp.pop %v2635
          %v2962 = vmul.f32 %v2635, %v2961
          %v2963 = vsub.f32 1.0, %v2962
          %v2964 = vmul.f32 %v2961, %v2963
          %v2965 = vadd.f32 %v2961, %v2964
          %vm2966 = vweird.f32 %v2635
          %vm2967 = vweird.f32 %v2961
          %vm2968 = vmor %vm2966, %vm2967
          %v2969 = vsel %vm2968, %v2961, %v2965
          %v2970 = vand.u32 2147483647, %v2635
          %vm2971 = vcmp.eq.f32.partialorder %v2970, 8.507059e+37
          %v2972 = vand.u32 %v2635, 2147483648
          %v2973 = vor.u32 1.1754944e-38, %v2972
          %v2974 = vsel %vm2971, %v2973, %v2969
          %v2975 = vmul.f32 1.0, %v2974
          %v2976 = vrcp.pop %v2636
          %v2977 = vmul.f32 %v2636, %v2976
          %v2978 = vsub.f32 1.0, %v2977
          %v2979 = vmul.f32 %v2976, %v2978
          %v2980 = vadd.f32 %v2976, %v2979
          %vm2981 = vweird.f32 %v2636
          %vm2982 = vweird.f32 %v2976
          %vm2983 = vmor %vm2981, %vm2982
          %v2984 = vsel %vm2983, %v2976, %v2980
          %v2985 = vand.u32 2147483647, %v2636
          %vm2986 = vcmp.eq.f32.partialorder %v2985, 8.507059e+37
          %v2987 = vand.u32 %v2636, 2147483648
          %v2988 = vor.u32 1.1754944e-38, %v2987
          %v2989 = vsel %vm2986, %v2988, %v2984
          %v2990 = vmul.f32 1.0, %v2989
          %v2991 = vrcp.pop %v2637
          %v2992 = vmul.f32 %v2637, %v2991
          %v2993 = vsub.f32 1.0, %v2992
          %v2994 = vmul.f32 %v2991, %v2993
          %v2995 = vadd.f32 %v2991, %v2994
          %vm2996 = vweird.f32 %v2637
          %vm2997 = vweird.f32 %v2991
          %vm2998 = vmor %vm2996, %vm2997
          %v2999 = vsel %vm2998, %v2991, %v2995
          %v3000 = vand.u32 2147483647, %v2637
          %vm3001 = vcmp.eq.f32.partialorder %v3000, 8.507059e+37
          %v3002 = vand.u32 %v2637, 2147483648
          %v3003 = vor.u32 1.1754944e-38, %v3002
          %v3004 = vsel %vm3001, %v3003, %v2999
          %v3005 = vmul.f32 1.0, %v3004
          %v3006 = vrcp.pop %v2638
          %v3007 = vmul.f32 %v2638, %v3006
          %v3008 = vsub.f32 1.0, %v3007
          %v3009 = vmul.f32 %v3006, %v3008
          %v3010 = vadd.f32 %v3006, %v3009
          %vm3011 = vweird.f32 %v2638
          %vm3012 = vweird.f32 %v3006
          %vm3013 = vmor %vm3011, %vm3012
          %v3014 = vsel %vm3013, %v3006, %v3010
          %v3015 = vand.u32 2147483647, %v2638
          %vm3016 = vcmp.eq.f32.partialorder %v3015, 8.507059e+37
          %v3017 = vand.u32 %v2638, 2147483648
          %v3018 = vor.u32 1.1754944e-38, %v3017
          %v3019 = vsel %vm3016, %v3018, %v3014
          %v3020 = vmul.f32 1.0, %v3019
          %v3021 = vrcp.pop %v2639
          %v3022 = vmul.f32 %v2639, %v3021
          %v3023 = vsub.f32 1.0, %v3022
          %v3024 = vmul.f32 %v3021, %v3023
          %v3025 = vadd.f32 %v3021, %v3024
          %vm3026 = vweird.f32 %v2639
          %vm3027 = vweird.f32 %v3021
          %vm3028 = vmor %vm3026, %vm3027
          %v3029 = vsel %vm3028, %v3021, %v3025
          %v3030 = vand.u32 2147483647, %v2639
          %vm3031 = vcmp.eq.f32.partialorder %v3030, 8.507059e+37
          %v3032 = vand.u32 %v2639, 2147483648
          %v3033 = vor.u32 1.1754944e-38, %v3032
          %v3034 = vsel %vm3031, %v3033, %v3029
          %v3035 = vmul.f32 1.0, %v3034
          %v3036 = vrcp.pop %v2640
          %v3037 = vmul.f32 %v2640, %v3036
          %v3038 = vsub.f32 1.0, %v3037
          %v3039 = vmul.f32 %v3036, %v3038
          %v3040 = vadd.f32 %v3036, %v3039
          %vm3041 = vweird.f32 %v2640
          %vm3042 = vweird.f32 %v3036
          %vm3043 = vmor %vm3041, %vm3042
          %v3044 = vsel %vm3043, %v3036, %v3040
          %v3045 = vand.u32 2147483647, %v2640
          %vm3046 = vcmp.eq.f32.partialorder %v3045, 8.507059e+37
          %v3047 = vand.u32 %v2640, 2147483648
          %v3048 = vor.u32 1.1754944e-38, %v3047
          %v3049 = vsel %vm3046, %v3048, %v3044
          %v3050 = vmul.f32 1.0, %v3049
          %v3051 = vrcp.pop %v2641
          %v3052 = vmul.f32 %v2641, %v3051
          %v3053 = vsub.f32 1.0, %v3052
          %v3054 = vmul.f32 %v3051, %v3053
          %v3055 = vadd.f32 %v3051, %v3054
          %vm3056 = vweird.f32 %v2641
          %vm3057 = vweird.f32 %v3051
          %vm3058 = vmor %vm3056, %vm3057
          %v3059 = vsel %vm3058, %v3051, %v3055
          %v3060 = vand.u32 2147483647, %v2641
          %vm3061 = vcmp.eq.f32.partialorder %v3060, 8.507059e+37
          %v3062 = vand.u32 %v2641, 2147483648
          %v3063 = vor.u32 1.1754944e-38, %v3062
          %v3064 = vsel %vm3061, %v3063, %v3059
          %v3065 = vmul.f32 1.0, %v3064
          %v3066 = vrcp.pop %v2642
          %v3067 = vmul.f32 %v2642, %v3066
          %v3068 = vsub.f32 1.0, %v3067
          %v3069 = vmul.f32 %v3066, %v3068
          %v3070 = vadd.f32 %v3066, %v3069
          %vm3071 = vweird.f32 %v2642
          %vm3072 = vweird.f32 %v3066
          %vm3073 = vmor %vm3071, %vm3072
          %v3074 = vsel %vm3073, %v3066, %v3070
          %v3075 = vand.u32 2147483647, %v2642
          %vm3076 = vcmp.eq.f32.partialorder %v3075, 8.507059e+37
          %v3077 = vand.u32 %v2642, 2147483648
          %v3078 = vor.u32 1.1754944e-38, %v3077
          %v3079 = vsel %vm3076, %v3078, %v3074
          %v3080 = vmul.f32 1.0, %v3079
          %v3081 = vrcp.pop %v2643
          %v3082 = vmul.f32 %v2643, %v3081
          %v3083 = vsub.f32 1.0, %v3082
          %v3084 = vmul.f32 %v3081, %v3083
          %v3085 = vadd.f32 %v3081, %v3084
          %vm3086 = vweird.f32 %v2643
          %vm3087 = vweird.f32 %v3081
          %vm3088 = vmor %vm3086, %vm3087
          %v3089 = vsel %vm3088, %v3081, %v3085
          %v3090 = vand.u32 2147483647, %v2643
          %vm3091 = vcmp.eq.f32.partialorder %v3090, 8.507059e+37
          %v3092 = vand.u32 %v2643, 2147483648
          %v3093 = vor.u32 1.1754944e-38, %v3092
          %v3094 = vsel %vm3091, %v3093, %v3089
          %v3095 = vmul.f32 1.0, %v3094
          %v3096 = vrcp.pop %v2644
          %v3097 = vmul.f32 %v2644, %v3096
          %v3098 = vsub.f32 1.0, %v3097
          %v3099 = vmul.f32 %v3096, %v3098
          %v3100 = vadd.f32 %v3096, %v3099
          %vm3101 = vweird.f32 %v2644
          %vm3102 = vweird.f32 %v3096
          %vm3103 = vmor %vm3101, %vm3102
          %v3104 = vsel %vm3103, %v3096, %v3100
          %v3105 = vand.u32 2147483647, %v2644
          %vm3106 = vcmp.eq.f32.partialorder %v3105, 8.507059e+37
          %v3107 = vand.u32 %v2644, 2147483648
          %v3108 = vor.u32 1.1754944e-38, %v3107
          %v3109 = vsel %vm3106, %v3108, %v3104
          %v3110 = vmul.f32 1.0, %v3109
          %v3111 = vrcp.pop %v2645
          %v3112 = vmul.f32 %v2645, %v3111
          %v3113 = vsub.f32 1.0, %v3112
          %v3114 = vmul.f32 %v3111, %v3113
          %v3115 = vadd.f32 %v3111, %v3114
          %vm3116 = vweird.f32 %v2645
          %vm3117 = vweird.f32 %v3111
          %vm3118 = vmor %vm3116, %vm3117
          %v3119 = vsel %vm3118, %v3111, %v3115
          %v3120 = vand.u32 2147483647, %v2645
          %vm3121 = vcmp.eq.f32.partialorder %v3120, 8.507059e+37
          %v3122 = vand.u32 %v2645, 2147483648
          %v3123 = vor.u32 1.1754944e-38, %v3122
          %v3124 = vsel %vm3121, %v3123, %v3119
          %v3125 = vmul.f32 1.0, %v3124
          %3126 = vst [vmem:[%s314] sm:$0xff] %v2660
          %3127 = vst [vmem:[%s314 + $0x8] sm:$0xff] %v2675
          %3128 = vst [vmem:[%s314 + $0x10] sm:$0xff] %v2690
          %3129 = vst [vmem:[%s314 + $0x18] sm:$0xff] %v2705
          %3130 = vst [vmem:[%s314 + $0x20] sm:$0xff] %v2720
          %3131 = vst [vmem:[%s314 + $0x28] sm:$0xff] %v2735
          %3132 = vst [vmem:[%s314 + $0x30] sm:$0xff] %v2750
          %3133 = vst [vmem:[%s314 + $0x38] sm:$0xff] %v2765
          %3134 = vst [vmem:[%s314 + $0x40] sm:$0xff] %v2780
          %3135 = vst [vmem:[%s314 + $0x48] sm:$0xff] %v2795
          %3136 = vst [vmem:[%s314 + $0x50] sm:$0xff] %v2810
          %3137 = vst [vmem:[%s314 + $0x58] sm:$0xff] %v2825
          %3138 = vst [vmem:[%s314 + $0x60] sm:$0xff] %v2840
          %3139 = vst [vmem:[%s314 + $0x68] sm:$0xff] %v2855
          %3140 = vst [vmem:[%s314 + $0x70] sm:$0xff] %v2870
          %3141 = vst [vmem:[%s314 + $0x78] sm:$0xff] %v2885
          %3142 = vst [vmem:[%s314 + $0x80] sm:$0xff] %v2900
          %3143 = vst [vmem:[%s314 + $0x88] sm:$0xff] %v2915
          %3144 = vst [vmem:[%s314 + $0x90] sm:$0xff] %v2930
          %3145 = vst [vmem:[%s314 + $0x98] sm:$0xff] %v2945
          %3146 = vst [vmem:[%s314 + $0xa0] sm:$0xff] %v2960
          %3147 = vst [vmem:[%s314 + $0xa8] sm:$0xff] %v2975
          %3148 = vst [vmem:[%s314 + $0xb0] sm:$0xff] %v2990
          %3149 = vst [vmem:[%s314 + $0xb8] sm:$0xff] %v3005
          %3150 = vst [vmem:[%s314 + $0xc0] sm:$0xff] %v3020
          %3151 = vst [vmem:[%s314 + $0xc8] sm:$0xff] %v3035
          %3152 = vst [vmem:[%s314 + $0xd0] sm:$0xff] %v3050
          %3153 = vst [vmem:[%s314 + $0xd8] sm:$0xff] %v3065
          %3154 = vst [vmem:[%s314 + $0xe0] sm:$0xff] %v3080
          %3155 = vst [vmem:[%s314 + $0xe8] sm:$0xff] %v3095
          %3156 = vst [vmem:[%s314 + $0xf0] sm:$0xff] %v3110
          %3157 = vst [vmem:[%s314 + $0xf8] sm:$0xff] %v3125
        $region56: #{forward.5} parent=39 // pred_fallthru
          _
        %s3158 = smul.u32 32, %s26
        %p3159 = scmp.lt.s32.totalorder %s3158, 63
        %s3160 = scalar_select %p3159, %s3158, 63
        %s3161 = smul.addr %s3160, 8
        %s3162 = scalar_lea.vmem %s5, %s3161
        // Predicated region
        $region57: #{forward.5} parent=39 // pred_check
          %p3163 = pneg %p171
        $region58: #{forward.5} parent=39 // pred_check_branch
          %3165 = sbr.rel (%p3163) target = $region60
        $region59: #{forward.5} parent=39 // pred_region
          %s3166 = smul.u32 32, %s26
        $region60: #{forward.5} parent=39 // pred_fallthru
          _
      $region40: #{forward.5} parent=5 // pred_fallthru
        _
      %p3167 = scmp.le.s32.totalorder 2, %s17
      // Predicated region
      $region61: #{forward.5} parent=5 // pred_check
        %p3168 = pneg %p3167
      $region62: #{forward.5} parent=5 // pred_check_branch
        %3170 = sbr.rel (%p3168) target = $region64
      $region63: #{forward.5} parent=5 // pred_region
        %s3171 = ssub.s32 %s17, 2
        // Predicated region
        $region65: #{forward.5} parent=63 // pred_check
          %p3172 = pneg %p177
        $region66: #{forward.5} parent=63 // pred_check_branch
          %3174 = sbr.rel (%p3172) target = $region68
        $region67: #{forward.5} parent=63 // pred_region
          %s3175 = smul.u32 32, %s28
          %p3176 = scmp.lt.s32.totalorder %s3175, 63
          %s3177 = scalar_select %p3176, %s3175, 63
          %s3178 = smul.addr %s3177, 8
          %s3179 = scalar_lea.vmem %s5, %s3178
        $region68: #{forward.5} parent=63 // pred_fallthru
          _
      $region64: #{forward.5} parent=5 // pred_fallthru
        _
    $region6: #{forward.5} parent=1 // loop_footer
      %s21 = sadd.s32 1, %s17
    $region7: #{forward.5} parent=1 // loop_footer_branch
      %16 = sbr.rel target = $region3
    $region8: #{forward.5} parent=1 // loop_exit
      _
    %3180 = vsyncpa [#allocation4], 1
    %s3181 = scalar_lea.sflag [#allocation4], 1
    %3182 = vsyncpa %s3181, 1
    %3183 = vsyncpa [#allocation6], 1
    %s3184 = scalar_lea.sflag [#allocation6], 1
    %3185 = vsyncpa %s3184, 1

</llo_original>
